<compile_context>
chip_gen: v5e
topology: v5e:2x2
jax: 0.10.0
libtpu: 0.0.40
codegen_flags: <defaults>
</compile_context>

<pallas_src>
import functools

import jax
import jax.numpy as jnp
import numpy as np
from jax import lax
from jax.experimental import pallas as pl
from jax.experimental.pallas import tpu as pltpu


_VMEM = pl.BlockSpec(memory_space=pltpu.MemorySpace.VMEM)
_SMEM = pl.BlockSpec(memory_space=pltpu.MemorySpace.SMEM)


# ---------------------------------------------------------------------------
# Fused Pallas kernel
# ---------------------------------------------------------------------------

def _discriminator_kernel(*refs, n_layers, T, B, H, unroll, mm_dtype):
    """refs = [x, x_rev, (W1, W2, bih, bhh, whh) * L, wout_row, w2(SMEM), beff(SMEM),
               out, gi_scratch, (act_scratch, act_rev_scratch if L > 1)]"""
    P = 2 * H                # fused per-gate pitch: [fwd H | bwd H]
    G = 3 * P                # fused gate width:     [ r | z | n ]
    n_in = 2 + 5 * n_layers + 3

    x_ref, xrev_ref = refs[0], refs[1]
    wout_ref, w2_ref, beff_ref = refs[2 + 5 * n_layers:n_in]
    out_ref = refs[n_in]
    gi_ref = refs[n_in + 1]
    act_ref = refs[n_in + 2] if n_layers > 1 else None
    actr_ref = refs[n_in + 3] if n_layers > 1 else None

    # Hoisted once (JAX does not CSE broadcast_in_dim -> never broadcast in the loop).
    wout_b = jnp.broadcast_to(wout_ref[...], (B, H))

    cur, cur_rev = x_ref, xrev_ref
    for l in range(n_layers):
        w1_ref, w2m_ref, bih_ref, bhh_ref, whh_ref = refs[2 + 5 * l:2 + 5 * (l + 1)]
        is_last = l == n_layers - 1

        # (1) Hoisted, direction-pre-selected input projection (step-order rows):
        #     gi[i*B:(i+1)*B, fwd lanes] <- input(time i)      @ Wih_fwd
        #     gi[i*B:(i+1)*B, bwd lanes] <- input(time T-1-i)  @ Wih_bwd
        gi_ref[...] = (
            jnp.dot(cur[...].astype(mm_dtype), w1_ref[...],
                    preferred_element_type=jnp.float32)
            + jnp.dot(cur_rev[...].astype(mm_dtype), w2m_ref[...],
                      preferred_element_type=jnp.float32)
            + bih_ref[...])

        bhh_b = jnp.broadcast_to(bhh_ref[...], (B, G))
        whh = whh_ref[...]

        def gru_step(i, h, *, whh=whh, bhh_b=bhh_b):
            gi = gi_ref[pl.ds(i * B, B), :]                       # one contiguous load
            gh = jnp.dot(h.astype(mm_dtype), whh,
                         preferred_element_type=jnp.float32) + bhh_b
            r = jax.nn.sigmoid(gi[:, :P] + gh[:, :P])
            z = jax.nn.sigmoid(gi[:, P:2 * P] + gh[:, P:2 * P])
            n = jnp.tanh(gi[:, 2 * P:] + r * gh[:, 2 * P:])
            return n + z * (h - n)            # == (1-z)*n + z*h, one fewer VPU mul

        h0 = jnp.zeros((B, P), jnp.float32)

        if is_last:
            # Head (sum of directions -> Linear(H,1) -> Linear(T,1)) is accumulated
            # inside the recurrence: fwd hidden at step i is timestep i, bwd hidden
            # is timestep T-1-i.  No activation stores for the last layer.
            def step(i, carry, *, gru_step=gru_step):
                h, acc = carry
                h_new = gru_step(i, h)
                sf = jnp.sum(h_new[:, :H] * wout_b, axis=1, keepdims=True)   # (B, 1)
                sb = jnp.sum(h_new[:, H:] * wout_b, axis=1, keepdims=True)
                acc = acc + w2_ref[0, i] * sf + w2_ref[0, T - 1 - i] * sb
                return h_new, acc

            _, head = lax.fori_loop(0, T, step,
                                    (h0, jnp.zeros((B, 1), jnp.float32)),
                                    unroll=unroll)
            out_ref[...] = jax.nn.sigmoid(head + beff_ref[0, 0])
        else:
            # Activations stored full-width (no lane-offset masked stores):
            #   act[i]       = [h_fwd(i)      | h_bwd(T-1-i)]   (step order)
            #   act_rev[i]   = [h_fwd(T-1-i)  | h_bwd(i)]       (reversed step order)
            def step(i, h, *, gru_step=gru_step):
                h_new = gru_step(i, h)
                act_ref[pl.ds(i * B, B), :] = h_new
                actr_ref[pl.ds((T - 1 - i) * B, B), :] = h_new
                return h_new

            lax.fori_loop(0, T, step, h0, unroll=unroll)
            cur, cur_rev = act_ref, actr_ref


# ---------------------------------------------------------------------------
# Parameter packing
# ---------------------------------------------------------------------------

def _scatter_gate_cols(mat, H, P, off):
    """Place each gate's H-wide column block of `mat` (rows, 3H) at lane offset `off`
    inside the corresponding P(=2H)-wide fused gate block of a (rows, 3P) matrix."""
    rows = mat.shape[0]
    out = jnp.zeros((rows, 3 * P), jnp.float32)
    for g in range(3):
        out = out.at[:, g * P + off:g * P + off + H].set(mat[:, g * H:(g + 1) * H])
    return out


def _fuse_layer_params(layer, H, first_layer, mm_dtype):
    """Pack one bidirectional GRU layer for the fused kernel.

    Returns (W1, W2, bih, bhh, whh) such that (with cur rows in step order and
    cur_rev the time-reversed rows):
        gi_sel = cur @ W1 + cur_rev @ W2 + bih     (fwd lanes: time i, bwd: time T-1-i)
        gh     = [h_fwd | h_bwd] @ whh + bhh       (block structure keeps dirs apart)
    Fused lane layout: [ r_f r_b | z_f z_b | n_f n_b ].
    """
    P = 2 * H
    wih_f, whh_f, b_f = layer['fwd']        # (D_in, 3H), (H, 3H), (2, 3H)
    wih_b, whh_b, b_b = layer['bwd']
    if first_layer:
        w1 = _scatter_gate_cols(wih_f, H, P, 0)
        w2 = _scatter_gate_cols(wih_b, H, P, H)
    else:
        # Input of layer l>0 is [h_fwd | h_bwd]; cur rows are [hf(i) | hb(T-1-i)]
        # and cur_rev rows are [hf(T-1-i) | hb(i)] -> block-pick accordingly.
        w1 = jnp.concatenate([_scatter_gate_cols(wih_f[:H], H, P, 0),
                              _scatter_gate_cols(wih_b[H:], H, P, H)], axis=0)
        w2 = jnp.concatenate([_scatter_gate_cols(wih_b[:H], H, P, H),
                              _scatter_gate_cols(wih_f[H:], H, P, 0)], axis=0)
    whh = jnp.concatenate([_scatter_gate_cols(whh_f, H, P, 0),
                           _scatter_gate_cols(whh_b, H, P, H)], axis=0)      # (2H, 6H)
    bih = _scatter_gate_cols(b_f[0:1], H, P, 0) + _scatter_gate_cols(b_b[0:1], H, P, H)
    bhh = _scatter_gate_cols(b_f[1:2], H, P, 0) + _scatter_gate_cols(b_b[1:2], H, P, H)
    return (w1.astype(mm_dtype), w2.astype(mm_dtype), bih, bhh, whh.astype(mm_dtype))


# ---------------------------------------------------------------------------
# Wrapper (single pallas_call)
# ---------------------------------------------------------------------------

def discriminator_forward(poses, params, *, matmul_dtype=jnp.float32):
    """poses: (B, T, input_size) float32 -> (B, 1) sigmoid scores (one Pallas call)."""
    B, T, D = poses.shape
    H = params['w_out'].shape[0]
    L = len(params['gru'])
    P, G = 2 * H, 6 * H

    # Time-major rows (row = t*B + b) plus a time-reversed copy for the bwd direction,
    # so the in-kernel projection comes out already direction-selected.
    x_tm = jnp.transpose(poses, (1, 0, 2)).astype(jnp.float32)           # (T, B, D)
    x = x_tm.reshape(T * B, D)
    x_rev = x_tm[::-1].reshape(T * B, D)

    inputs = [x, x_rev]
    in_specs = [_VMEM, _VMEM]
    for l, layer in enumerate(params['gru']):
        inputs.extend(_fuse_layer_params(layer, H, l == 0, matmul_dtype))
        in_specs.extend([_VMEM] * 5)

    # Head parameters: Linear(H,1) as a (1,H) VMEM row; Linear(T,1) weights and the
    # folded bias as SMEM scalars.  (The old (T*B, B) selection matrix is gone — the
    # time/batch contraction is accumulated inside the last layer's recurrence.)
    wout_row = jnp.transpose(params['w_out']).astype(jnp.float32)        # (1, H)
    w2_row = jnp.transpose(params['w_out2']).astype(jnp.float32)         # (1, T)
    b_eff = jnp.reshape(params['b_out2'][0, 0]
                        + params['b_out'][0, 0] * jnp.sum(w2_row), (1, 1))
    inputs.extend([wout_row, w2_row, b_eff])
    in_specs.extend([_VMEM, _SMEM, _SMEM])

    # Shared scratch: one gi buffer (identical shape for every layer) and one
    # act / act_rev pair (fully consumed into gi before being overwritten).
    scratch = [pltpu.VMEM((T * B, G), jnp.float32)]
    if L > 1:
        scratch += [pltpu.VMEM((T * B, P), jnp.float32),
                    pltpu.VMEM((T * B, P), jnp.float32)]

    # VMEM budget sized from the actual footprint (raised above the 16/32 MiB scoped
    # default when shapes grow; kept under v7x's 64 MiB physical VMEM).
    footprint = sum(int(np.prod(a.shape)) * a.dtype.itemsize for a in inputs)
    footprint += 4 * (T * B * G + (2 * T * B * P if L > 1 else 0) + B)
    vmem_limit = int(min(64 << 20, max(32 << 20, 2 * footprint)))

    # Full unroll only while live state comfortably fits the 64 vregs.
    unroll = T if (T <= 16 and H <= 64) else min(T, 4)

    kern = functools.partial(_discriminator_kernel, n_layers=L, T=T, B=B, H=H,
                             unroll=unroll, mm_dtype=matmul_dtype)
    return pl.pallas_call(
        kern,
        out_shape=jax.ShapeDtypeStruct((B, 1), jnp.float32),
        in_specs=in_specs,
        out_specs=_VMEM,
        scratch_shapes=scratch,
        compiler_params=pltpu.CompilerParams(vmem_limit_bytes=vmem_limit),
    )(*inputs)


# ---------------------------------------------------------------------------
# Pure-JAX reference (correctness check)
# ---------------------------------------------------------------------------

def _ref_gru_dir(x_tbd, wih_t, whh_t, b, reverse):
    T, B, _ = x_tbd.shape
    H = whh_t.shape[0]
    h = jnp.zeros((B, H), jnp.float32)
    out = [None] * T
    order = range(T - 1, -1, -1) if reverse else range(T)
    for t in order:
        gi = x_tbd[t] @ wih_t + b[0]
        gh = h @ whh_t + b[1]
        r = jax.nn.sigmoid(gi[:, :H] + gh[:, :H])
        z = jax.nn.sigmoid(gi[:, H:2 * H] + gh[:, H:2 * H])
        n = jnp.tanh(gi[:, 2 * H:] + r * gh[:, 2 * H:])
        h = (1.0 - z) * n + z * h
        out[t] = h
    return jnp.stack(out, axis=0)


def reference_forward(poses, params):
    x = jnp.transpose(poses, (1, 0, 2)).astype(jnp.float32)
    fwd = bwd = None
    for layer in params['gru']:
        fwd = _ref_gru_dir(x, *layer['fwd'], reverse=False)
        bwd = _ref_gru_dir(x, *layer['bwd'], reverse=True)
        x = jnp.concatenate([fwd, bwd], axis=-1)
    y = fwd + bwd                                                   # (T, B, H)
    s = jnp.einsum('tbh,ho->tbo', y, params['w_out'])[:, :, 0] + params['b_out'][0, 0]
    o = jnp.einsum('tb,to->bo', s, params['w_out2']) + params['b_out2'][0, 0]
    return jax.nn.sigmoid(o)


# ---------------------------------------------------------------------------
# Deterministic parameter init (shapes follow nn.GRU / nn.Linear in the module)
# ---------------------------------------------------------------------------

def init_params(key, input_size, hidden, n_layers, n_poses):
    params = {'gru': []}
    d_in = input_size
    for _ in range(n_layers):
        layer = {}
        for dname in ('fwd', 'bwd'):
            key, k1, k2, k3, k4 = jax.random.split(key, 5)
            wih = jax.random.normal(k1, (3 * hidden, d_in), jnp.float32) * 0.1
            whh = jax.random.normal(k2, (3 * hidden, hidden), jnp.float32) * 0.1
            bih = jax.random.normal(k3, (3 * hidden,), jnp.float32) * 0.1
            bhh = jax.random.normal(k4, (3 * hidden,), jnp.float32) * 0.1
            layer[dname] = (wih.T, whh.T, jnp.stack([bih, bhh], axis=0))
        params['gru'].append(layer)
        d_in = 2 * hidden
    key, k1, k2, k3, k4 = jax.random.split(key, 5)
    params['w_out'] = jax.random.normal(k1, (hidden, 1), jnp.float32) * 0.1
    params['b_out'] = jax.random.normal(k2, (1, 1), jnp.float32) * 0.1
    params['w_out2'] = jax.random.normal(k3, (n_poses, 1), jnp.float32) * 0.1
    params['b_out2'] = jax.random.normal(k4, (1, 1), jnp.float32) * 0.1
    return params


# ---------------------------------------------------------------------------

if __name__ == "__main__":
    B, T, D, H, L = 2, 8, 16, 32, 2   # batch, n_poses, pose dim, hidden_size, n_layers
    key = jax.random.PRNGKey(0)
    kp, kx = jax.random.split(key)
    params = init_params(kp, D, H, L, T)
    poses = jax.random.normal(kx, (B, T, D), jnp.float32)

    ref = reference_forward(poses, params)

    # f32 matmul path: tight numerical check.
    fwd32 = jax.jit(functools.partial(discriminator_forward, matmul_dtype=jnp.float32))
    out32 = jax.block_until_ready(fwd32(poses, params))
    assert out32.shape == (B, 1)
    np.testing.assert_allclose(np.asarray(out32), np.asarray(ref), rtol=1e-4, atol=1e-5)

    # bf16 matmul path (v6e/v7x MXU, f32 accumulation): loose check.
    fwd16 = jax.jit(functools.partial(discriminator_forward, matmul_dtype=jnp.bfloat16))
    out16 = jax.block_until_ready(fwd16(poses, params))
    assert out16.shape == (B, 1)
    np.testing.assert_allclose(np.asarray(out16), np.asarray(ref), rtol=5e-2, atol=3e-2)

    print("KERNEL_OK")
</pallas_src>

<mosaic_0001>
module attributes {stable_mosaic.version = 11 : i64} {
  func.func @_discriminator_kernel(%arg0: memref<16x16xf32, #tpu.memory_space<vmem>>, %arg1: memref<16x16xf32, #tpu.memory_space<vmem>>, %arg2: memref<16x192xf32, #tpu.memory_space<vmem>>, %arg3: memref<16x192xf32, #tpu.memory_space<vmem>>, %arg4: memref<1x192xf32, #tpu.memory_space<vmem>>, %arg5: memref<1x192xf32, #tpu.memory_space<vmem>>, %arg6: memref<64x192xf32, #tpu.memory_space<vmem>>, %arg7: memref<64x192xf32, #tpu.memory_space<vmem>>, %arg8: memref<64x192xf32, #tpu.memory_space<vmem>>, %arg9: memref<1x192xf32, #tpu.memory_space<vmem>>, %arg10: memref<1x192xf32, #tpu.memory_space<vmem>>, %arg11: memref<64x192xf32, #tpu.memory_space<vmem>>, %arg12: memref<1x32xf32, #tpu.memory_space<vmem>>, %arg13: memref<1x8xf32, #tpu.memory_space<smem>>, %arg14: memref<1x1xf32, #tpu.memory_space<smem>>, %arg15: memref<2x1xf32, #tpu.memory_space<vmem>>, %arg16: memref<16x192xf32, #tpu.memory_space<vmem>>, %arg17: memref<16x64xf32, #tpu.memory_space<vmem>>, %arg18: memref<16x64xf32, #tpu.memory_space<vmem>>) attributes {dimension_semantics = [], scalar_prefetch = 0 : i64, scratch_operands = 3 : i64, tpu.core_type = #tpu.core_type<tc>} {
    %c0 = arith.constant 0 : index
    %c0_0 = arith.constant 0 : index
    %0 = vector.load %arg12[%c0, %c0_0] : memref<1x32xf32, #tpu.memory_space<vmem>>, vector<1x32xf32>
    %1 = vector.shape_cast %0 : vector<1x32xf32> to vector<1x32xf32>
    %2 = vector.broadcast %1 : vector<1x32xf32> to vector<2x32xf32>
    %c0_1 = arith.constant 0 : index
    %c0_2 = arith.constant 0 : index
    %3 = vector.load %arg0[%c0_1, %c0_2] : memref<16x16xf32, #tpu.memory_space<vmem>>, vector<16x16xf32>
    %c0_3 = arith.constant 0 : index
    %c0_4 = arith.constant 0 : index
    %4 = vector.load %arg2[%c0_3, %c0_4] : memref<16x192xf32, #tpu.memory_space<vmem>>, vector<16x192xf32>
    %cst = arith.constant dense<0.000000e+00> : vector<16x192xf32>
    %5 = tpu.matmul %3, %4, %cst {dimension_numbers = #tpu.dot_dimension_numbers<[1], [0], [0], [1], [0, 0, 1, 1], [], []>} : vector<16x16xf32>, vector<16x192xf32>, vector<16x192xf32> -> vector<16x192xf32>
    %c0_5 = arith.constant 0 : index
    %c0_6 = arith.constant 0 : index
    %6 = vector.load %arg1[%c0_5, %c0_6] : memref<16x16xf32, #tpu.memory_space<vmem>>, vector<16x16xf32>
    %c0_7 = arith.constant 0 : index
    %c0_8 = arith.constant 0 : index
    %7 = vector.load %arg3[%c0_7, %c0_8] : memref<16x192xf32, #tpu.memory_space<vmem>>, vector<16x192xf32>
    %cst_9 = arith.constant dense<0.000000e+00> : vector<16x192xf32>
    %8 = tpu.matmul %6, %7, %cst_9 {dimension_numbers = #tpu.dot_dimension_numbers<[1], [0], [0], [1], [0, 0, 1, 1], [], []>} : vector<16x16xf32>, vector<16x192xf32>, vector<16x192xf32> -> vector<16x192xf32>
    %9 = arith.addf %5, %8 : vector<16x192xf32>
    %c0_10 = arith.constant 0 : index
    %c0_11 = arith.constant 0 : index
    %10 = vector.load %arg4[%c0_10, %c0_11] : memref<1x192xf32, #tpu.memory_space<vmem>>, vector<1x192xf32>
    %11 = vector.broadcast %10 : vector<1x192xf32> to vector<16x192xf32>
    %12 = arith.addf %9, %11 : vector<16x192xf32>
    %c0_12 = arith.constant 0 : index
    %c0_13 = arith.constant 0 : index
    %13 = vector.load %arg16[%c0_12, %c0_13] : memref<16x192xf32, #tpu.memory_space<vmem>>, vector<16x192xf32>
    tpu.vector_store %arg16[%c0_12, %c0_13], %12 {strides = array<i32>} : memref<16x192xf32, #tpu.memory_space<vmem>>, vector<16x192xf32>,
    %c0_14 = arith.constant 0 : index
    %c0_15 = arith.constant 0 : index
    %14 = vector.load %arg5[%c0_14, %c0_15] : memref<1x192xf32, #tpu.memory_space<vmem>>, vector<1x192xf32>
    %15 = vector.shape_cast %14 : vector<1x192xf32> to vector<1x192xf32>
    %16 = vector.broadcast %15 : vector<1x192xf32> to vector<2x192xf32>
    %c0_16 = arith.constant 0 : index
    %c0_17 = arith.constant 0 : index
    %17 = vector.load %arg6[%c0_16, %c0_17] : memref<64x192xf32, #tpu.memory_space<vmem>>, vector<64x192xf32>
    %cst_18 = arith.constant 0.000000e+00 : f32
    %18 = vector.broadcast %cst_18 : f32 to vector<2x64xf32>
    %c0_i32 = arith.constant 0 : i32
    %c2_i32 = arith.constant 2 : i32
    %19 = arith.muli %c0_i32, %c2_i32 : i32
    %20 = arith.index_cast %19 : i32 to index
    %c0_19 = arith.constant 0 : index
    %21 = vector.load %arg16[%20, %c0_19] : memref<16x192xf32, #tpu.memory_space<vmem>>, vector<2x192xf32>
    %cst_20 = arith.constant dense<0.000000e+00> : vector<2x192xf32>
    %22 = tpu.matmul %18, %17, %cst_20 {dimension_numbers = #tpu.dot_dimension_numbers<[1], [0], [0], [1], [0, 0, 1, 1], [], []>} : vector<2x64xf32>, vector<64x192xf32>, vector<2x192xf32> -> vector<2x192xf32>
    %23 = arith.addf %22, %16 : vector<2x192xf32>
    %24 = vector.extract_strided_slice %21 {offsets = [0, 0], sizes = [2, 64], strides = [1, 1]} : vector<2x192xf32> to vector<2x64xf32>
    %25 = vector.extract_strided_slice %23 {offsets = [0, 0], sizes = [2, 64], strides = [1, 1]} : vector<2x192xf32> to vector<2x64xf32>
    %26 = arith.addf %24, %25 : vector<2x64xf32>
    %27 = arith.negf %26 : vector<2x64xf32>
    %28 = math.exp %27 : vector<2x64xf32>
    %cst_21 = arith.constant 1.000000e+00 : f32
    %29 = vector.broadcast %cst_21 : f32 to vector<2x64xf32>
    %30 = arith.addf %29, %28 : vector<2x64xf32>
    %31 = arith.divf %29, %30 : vector<2x64xf32>
    %32 = vector.extract_strided_slice %21 {offsets = [0, 64], sizes = [2, 64], strides = [1, 1]} : vector<2x192xf32> to vector<2x64xf32>
    %33 = vector.extract_strided_slice %23 {offsets = [0, 64], sizes = [2, 64], strides = [1, 1]} : vector<2x192xf32> to vector<2x64xf32>
    %34 = arith.addf %32, %33 : vector<2x64xf32>
    %35 = arith.negf %34 : vector<2x64xf32>
    %36 = math.exp %35 : vector<2x64xf32>
    %cst_22 = arith.constant 1.000000e+00 : f32
    %37 = vector.broadcast %cst_22 : f32 to vector<2x64xf32>
    %38 = arith.addf %37, %36 : vector<2x64xf32>
    %39 = arith.divf %37, %38 : vector<2x64xf32>
    %40 = vector.extract_strided_slice %21 {offsets = [0, 128], sizes = [2, 64], strides = [1, 1]} : vector<2x192xf32> to vector<2x64xf32>
    %41 = vector.extract_strided_slice %23 {offsets = [0, 128], sizes = [2, 64], strides = [1, 1]} : vector<2x192xf32> to vector<2x64xf32>
    %42 = arith.mulf %31, %41 : vector<2x64xf32>
    %43 = arith.addf %40, %42 : vector<2x64xf32>
    %44 = math.tanh %43 : vector<2x64xf32>
    %45 = arith.subf %18, %44 : vector<2x64xf32>
    %46 = arith.mulf %39, %45 : vector<2x64xf32>
    %47 = arith.addf %44, %46 : vector<2x64xf32>
    %c2_i32_23 = arith.constant 2 : i32
    %48 = arith.muli %c0_i32, %c2_i32_23 : i32
    %49 = arith.index_cast %48 : i32 to index
    %c0_24 = arith.constant 0 : index
    %50 = vector.load %arg17[%49, %c0_24] : memref<16x64xf32, #tpu.memory_space<vmem>>, vector<2x64xf32>
    tpu.vector_store %arg17[%49, %c0_24], %47 {strides = array<i32>} : memref<16x64xf32, #tpu.memory_space<vmem>>, vector<2x64xf32>,
    %c7_i32 = arith.constant 7 : i32
    %51 = arith.subi %c7_i32, %c0_i32 : i32
    %c2_i32_25 = arith.constant 2 : i32
    %52 = arith.muli %51, %c2_i32_25 : i32
    %53 = arith.index_cast %52 : i32 to index
    %c0_26 = arith.constant 0 : index
    %54 = vector.load %arg18[%53, %c0_26] : memref<16x64xf32, #tpu.memory_space<vmem>>, vector<2x64xf32>
    tpu.vector_store %arg18[%53, %c0_26], %47 {strides = array<i32>} : memref<16x64xf32, #tpu.memory_space<vmem>>, vector<2x64xf32>,
    %c1_i32 = arith.constant 1 : i32
    %c2_i32_27 = arith.constant 2 : i32
    %55 = arith.muli %c1_i32, %c2_i32_27 : i32
    %56 = arith.index_cast %55 : i32 to index
    %c0_28 = arith.constant 0 : index
    %57 = vector.load %arg16[%56, %c0_28] : memref<16x192xf32, #tpu.memory_space<vmem>>, vector<2x192xf32>
    %cst_29 = arith.constant dense<0.000000e+00> : vector<2x192xf32>
    %58 = tpu.matmul %47, %17, %cst_29 {dimension_numbers = #tpu.dot_dimension_numbers<[1], [0], [0], [1], [0, 0, 1, 1], [], []>} : vector<2x64xf32>, vector<64x192xf32>, vector<2x192xf32> -> vector<2x192xf32>
    %59 = arith.addf %58, %16 : vector<2x192xf32>
    %60 = vector.extract_strided_slice %57 {offsets = [0, 0], sizes = [2, 64], strides = [1, 1]} : vector<2x192xf32> to vector<2x64xf32>
    %61 = vector.extract_strided_slice %59 {offsets = [0, 0], sizes = [2, 64], strides = [1, 1]} : vector<2x192xf32> to vector<2x64xf32>
    %62 = arith.addf %60, %61 : vector<2x64xf32>
    %63 = arith.negf %62 : vector<2x64xf32>
    %64 = math.exp %63 : vector<2x64xf32>
    %cst_30 = arith.constant 1.000000e+00 : f32
    %65 = vector.broadcast %cst_30 : f32 to vector<2x64xf32>
    %66 = arith.addf %65, %64 : vector<2x64xf32>
    %67 = arith.divf %65, %66 : vector<2x64xf32>
    %68 = vector.extract_strided_slice %57 {offsets = [0, 64], sizes = [2, 64], strides = [1, 1]} : vector<2x192xf32> to vector<2x64xf32>
    %69 = vector.extract_strided_slice %59 {offsets = [0, 64], sizes = [2, 64], strides = [1, 1]} : vector<2x192xf32> to vector<2x64xf32>
    %70 = arith.addf %68, %69 : vector<2x64xf32>
    %71 = arith.negf %70 : vector<2x64xf32>
    %72 = math.exp %71 : vector<2x64xf32>
    %cst_31 = arith.constant 1.000000e+00 : f32
    %73 = vector.broadcast %cst_31 : f32 to vector<2x64xf32>
    %74 = arith.addf %73, %72 : vector<2x64xf32>
    %75 = arith.divf %73, %74 : vector<2x64xf32>
    %76 = vector.extract_strided_slice %57 {offsets = [0, 128], sizes = [2, 64], strides = [1, 1]} : vector<2x192xf32> to vector<2x64xf32>
    %77 = vector.extract_strided_slice %59 {offsets = [0, 128], sizes = [2, 64], strides = [1, 1]} : vector<2x192xf32> to vector<2x64xf32>
    %78 = arith.mulf %67, %77 : vector<2x64xf32>
    %79 = arith.addf %76, %78 : vector<2x64xf32>
    %80 = math.tanh %79 : vector<2x64xf32>
    %81 = arith.subf %47, %80 : vector<2x64xf32>
    %82 = arith.mulf %75, %81 : vector<2x64xf32>
    %83 = arith.addf %80, %82 : vector<2x64xf32>
    %c2_i32_32 = arith.constant 2 : i32
    %84 = arith.muli %c1_i32, %c2_i32_32 : i32
    %85 = arith.index_cast %84 : i32 to index
    %c0_33 = arith.constant 0 : index
    %86 = vector.load %arg17[%85, %c0_33] : memref<16x64xf32, #tpu.memory_space<vmem>>, vector<2x64xf32>
    tpu.vector_store %arg17[%85, %c0_33], %83 {strides = array<i32>} : memref<16x64xf32, #tpu.memory_space<vmem>>, vector<2x64xf32>,
    %c7_i32_34 = arith.constant 7 : i32
    %87 = arith.subi %c7_i32_34, %c1_i32 : i32
    %c2_i32_35 = arith.constant 2 : i32
    %88 = arith.muli %87, %c2_i32_35 : i32
    %89 = arith.index_cast %88 : i32 to index
    %c0_36 = arith.constant 0 : index
    %90 = vector.load %arg18[%89, %c0_36] : memref<16x64xf32, #tpu.memory_space<vmem>>, vector<2x64xf32>
    tpu.vector_store %arg18[%89, %c0_36], %83 {strides = array<i32>} : memref<16x64xf32, #tpu.memory_space<vmem>>, vector<2x64xf32>,
    %c2_i32_37 = arith.constant 2 : i32
    %c2_i32_38 = arith.constant 2 : i32
    %91 = arith.muli %c2_i32_37, %c2_i32_38 : i32
    %92 = arith.index_cast %91 : i32 to index
    %c0_39 = arith.constant 0 : index
    %93 = vector.load %arg16[%92, %c0_39] : memref<16x192xf32, #tpu.memory_space<vmem>>, vector<2x192xf32>
    %cst_40 = arith.constant dense<0.000000e+00> : vector<2x192xf32>
    %94 = tpu.matmul %83, %17, %cst_40 {dimension_numbers = #tpu.dot_dimension_numbers<[1], [0], [0], [1], [0, 0, 1, 1], [], []>} : vector<2x64xf32>, vector<64x192xf32>, vector<2x192xf32> -> vector<2x192xf32>
    %95 = arith.addf %94, %16 : vector<2x192xf32>
    %96 = vector.extract_strided_slice %93 {offsets = [0, 0], sizes = [2, 64], strides = [1, 1]} : vector<2x192xf32> to vector<2x64xf32>
    %97 = vector.extract_strided_slice %95 {offsets = [0, 0], sizes = [2, 64], strides = [1, 1]} : vector<2x192xf32> to vector<2x64xf32>
    %98 = arith.addf %96, %97 : vector<2x64xf32>
    %99 = arith.negf %98 : vector<2x64xf32>
    %100 = math.exp %99 : vector<2x64xf32>
    %cst_41 = arith.constant 1.000000e+00 : f32
    %101 = vector.broadcast %cst_41 : f32 to vector<2x64xf32>
    %102 = arith.addf %101, %100 : vector<2x64xf32>
    %103 = arith.divf %101, %102 : vector<2x64xf32>
    %104 = vector.extract_strided_slice %93 {offsets = [0, 64], sizes = [2, 64], strides = [1, 1]} : vector<2x192xf32> to vector<2x64xf32>
    %105 = vector.extract_strided_slice %95 {offsets = [0, 64], sizes = [2, 64], strides = [1, 1]} : vector<2x192xf32> to vector<2x64xf32>
    %106 = arith.addf %104, %105 : vector<2x64xf32>
    %107 = arith.negf %106 : vector<2x64xf32>
    %108 = math.exp %107 : vector<2x64xf32>
    %cst_42 = arith.constant 1.000000e+00 : f32
    %109 = vector.broadcast %cst_42 : f32 to vector<2x64xf32>
    %110 = arith.addf %109, %108 : vector<2x64xf32>
    %111 = arith.divf %109, %110 : vector<2x64xf32>
    %112 = vector.extract_strided_slice %93 {offsets = [0, 128], sizes = [2, 64], strides = [1, 1]} : vector<2x192xf32> to vector<2x64xf32>
    %113 = vector.extract_strided_slice %95 {offsets = [0, 128], sizes = [2, 64], strides = [1, 1]} : vector<2x192xf32> to vector<2x64xf32>
    %114 = arith.mulf %103, %113 : vector<2x64xf32>
    %115 = arith.addf %112, %114 : vector<2x64xf32>
    %116 = math.tanh %115 : vector<2x64xf32>
    %117 = arith.subf %83, %116 : vector<2x64xf32>
    %118 = arith.mulf %111, %117 : vector<2x64xf32>
    %119 = arith.addf %116, %118 : vector<2x64xf32>
    %c2_i32_43 = arith.constant 2 : i32
    %120 = arith.muli %c2_i32_37, %c2_i32_43 : i32
    %121 = arith.index_cast %120 : i32 to index
    %c0_44 = arith.constant 0 : index
    %122 = vector.load %arg17[%121, %c0_44] : memref<16x64xf32, #tpu.memory_space<vmem>>, vector<2x64xf32>
    tpu.vector_store %arg17[%121, %c0_44], %119 {strides = array<i32>} : memref<16x64xf32, #tpu.memory_space<vmem>>, vector<2x64xf32>,
    %c7_i32_45 = arith.constant 7 : i32
    %123 = arith.subi %c7_i32_45, %c2_i32_37 : i32
    %c2_i32_46 = arith.constant 2 : i32
    %124 = arith.muli %123, %c2_i32_46 : i32
    %125 = arith.index_cast %124 : i32 to index
    %c0_47 = arith.constant 0 : index
    %126 = vector.load %arg18[%125, %c0_47] : memref<16x64xf32, #tpu.memory_space<vmem>>, vector<2x64xf32>
    tpu.vector_store %arg18[%125, %c0_47], %119 {strides = array<i32>} : memref<16x64xf32, #tpu.memory_space<vmem>>, vector<2x64xf32>,
    %c3_i32 = arith.constant 3 : i32
    %c2_i32_48 = arith.constant 2 : i32
    %127 = arith.muli %c3_i32, %c2_i32_48 : i32
    %128 = arith.index_cast %127 : i32 to index
    %c0_49 = arith.constant 0 : index
    %129 = vector.load %arg16[%128, %c0_49] : memref<16x192xf32, #tpu.memory_space<vmem>>, vector<2x192xf32>
    %cst_50 = arith.constant dense<0.000000e+00> : vector<2x192xf32>
    %130 = tpu.matmul %119, %17, %cst_50 {dimension_numbers = #tpu.dot_dimension_numbers<[1], [0], [0], [1], [0, 0, 1, 1], [], []>} : vector<2x64xf32>, vector<64x192xf32>, vector<2x192xf32> -> vector<2x192xf32>
    %131 = arith.addf %130, %16 : vector<2x192xf32>
    %132 = vector.extract_strided_slice %129 {offsets = [0, 0], sizes = [2, 64], strides = [1, 1]} : vector<2x192xf32> to vector<2x64xf32>
    %133 = vector.extract_strided_slice %131 {offsets = [0, 0], sizes = [2, 64], strides = [1, 1]} : vector<2x192xf32> to vector<2x64xf32>
    %134 = arith.addf %132, %133 : vector<2x64xf32>
    %135 = arith.negf %134 : vector<2x64xf32>
    %136 = math.exp %135 : vector<2x64xf32>
    %cst_51 = arith.constant 1.000000e+00 : f32
    %137 = vector.broadcast %cst_51 : f32 to vector<2x64xf32>
    %138 = arith.addf %137, %136 : vector<2x64xf32>
    %139 = arith.divf %137, %138 : vector<2x64xf32>
    %140 = vector.extract_strided_slice %129 {offsets = [0, 64], sizes = [2, 64], strides = [1, 1]} : vector<2x192xf32> to vector<2x64xf32>
    %141 = vector.extract_strided_slice %131 {offsets = [0, 64], sizes = [2, 64], strides = [1, 1]} : vector<2x192xf32> to vector<2x64xf32>
    %142 = arith.addf %140, %141 : vector<2x64xf32>
    %143 = arith.negf %142 : vector<2x64xf32>
    %144 = math.exp %143 : vector<2x64xf32>
    %cst_52 = arith.constant 1.000000e+00 : f32
    %145 = vector.broadcast %cst_52 : f32 to vector<2x64xf32>
    %146 = arith.addf %145, %144 : vector<2x64xf32>
    %147 = arith.divf %145, %146 : vector<2x64xf32>
    %148 = vector.extract_strided_slice %129 {offsets = [0, 128], sizes = [2, 64], strides = [1, 1]} : vector<2x192xf32> to vector<2x64xf32>
    %149 = vector.extract_strided_slice %131 {offsets = [0, 128], sizes = [2, 64], strides = [1, 1]} : vector<2x192xf32> to vector<2x64xf32>
    %150 = arith.mulf %139, %149 : vector<2x64xf32>
    %151 = arith.addf %148, %150 : vector<2x64xf32>
    %152 = math.tanh %151 : vector<2x64xf32>
    %153 = arith.subf %119, %152 : vector<2x64xf32>
    %154 = arith.mulf %147, %153 : vector<2x64xf32>
    %155 = arith.addf %152, %154 : vector<2x64xf32>
    %c2_i32_53 = arith.constant 2 : i32
    %156 = arith.muli %c3_i32, %c2_i32_53 : i32
    %157 = arith.index_cast %156 : i32 to index
    %c0_54 = arith.constant 0 : index
    %158 = vector.load %arg17[%157, %c0_54] : memref<16x64xf32, #tpu.memory_space<vmem>>, vector<2x64xf32>
    tpu.vector_store %arg17[%157, %c0_54], %155 {strides = array<i32>} : memref<16x64xf32, #tpu.memory_space<vmem>>, vector<2x64xf32>,
    %c7_i32_55 = arith.constant 7 : i32
    %159 = arith.subi %c7_i32_55, %c3_i32 : i32
    %c2_i32_56 = arith.constant 2 : i32
    %160 = arith.muli %159, %c2_i32_56 : i32
    %161 = arith.index_cast %160 : i32 to index
    %c0_57 = arith.constant 0 : index
    %162 = vector.load %arg18[%161, %c0_57] : memref<16x64xf32, #tpu.memory_space<vmem>>, vector<2x64xf32>
    tpu.vector_store %arg18[%161, %c0_57], %155 {strides = array<i32>} : memref<16x64xf32, #tpu.memory_space<vmem>>, vector<2x64xf32>,
    %c4_i32 = arith.constant 4 : i32
    %c2_i32_58 = arith.constant 2 : i32
    %163 = arith.muli %c4_i32, %c2_i32_58 : i32
    %164 = arith.index_cast %163 : i32 to index
    %c0_59 = arith.constant 0 : index
    %165 = vector.load %arg16[%164, %c0_59] : memref<16x192xf32, #tpu.memory_space<vmem>>, vector<2x192xf32>
    %cst_60 = arith.constant dense<0.000000e+00> : vector<2x192xf32>
    %166 = tpu.matmul %155, %17, %cst_60 {dimension_numbers = #tpu.dot_dimension_numbers<[1], [0], [0], [1], [0, 0, 1, 1], [], []>} : vector<2x64xf32>, vector<64x192xf32>, vector<2x192xf32> -> vector<2x192xf32>
    %167 = arith.addf %166, %16 : vector<2x192xf32>
    %168 = vector.extract_strided_slice %165 {offsets = [0, 0], sizes = [2, 64], strides = [1, 1]} : vector<2x192xf32> to vector<2x64xf32>
    %169 = vector.extract_strided_slice %167 {offsets = [0, 0], sizes = [2, 64], strides = [1, 1]} : vector<2x192xf32> to vector<2x64xf32>
    %170 = arith.addf %168, %169 : vector<2x64xf32>
    %171 = arith.negf %170 : vector<2x64xf32>
    %172 = math.exp %171 : vector<2x64xf32>
    %cst_61 = arith.constant 1.000000e+00 : f32
    %173 = vector.broadcast %cst_61 : f32 to vector<2x64xf32>
    %174 = arith.addf %173, %172 : vector<2x64xf32>
    %175 = arith.divf %173, %174 : vector<2x64xf32>
    %176 = vector.extract_strided_slice %165 {offsets = [0, 64], sizes = [2, 64], strides = [1, 1]} : vector<2x192xf32> to vector<2x64xf32>
    %177 = vector.extract_strided_slice %167 {offsets = [0, 64], sizes = [2, 64], strides = [1, 1]} : vector<2x192xf32> to vector<2x64xf32>
    %178 = arith.addf %176, %177 : vector<2x64xf32>
    %179 = arith.negf %178 : vector<2x64xf32>
    %180 = math.exp %179 : vector<2x64xf32>
    %cst_62 = arith.constant 1.000000e+00 : f32
    %181 = vector.broadcast %cst_62 : f32 to vector<2x64xf32>
    %182 = arith.addf %181, %180 : vector<2x64xf32>
    %183 = arith.divf %181, %182 : vector<2x64xf32>
    %184 = vector.extract_strided_slice %165 {offsets = [0, 128], sizes = [2, 64], strides = [1, 1]} : vector<2x192xf32> to vector<2x64xf32>
    %185 = vector.extract_strided_slice %167 {offsets = [0, 128], sizes = [2, 64], strides = [1, 1]} : vector<2x192xf32> to vector<2x64xf32>
    %186 = arith.mulf %175, %185 : vector<2x64xf32>
    %187 = arith.addf %184, %186 : vector<2x64xf32>
    %188 = math.tanh %187 : vector<2x64xf32>
    %189 = arith.subf %155, %188 : vector<2x64xf32>
    %190 = arith.mulf %183, %189 : vector<2x64xf32>
    %191 = arith.addf %188, %190 : vector<2x64xf32>
    %c2_i32_63 = arith.constant 2 : i32
    %192 = arith.muli %c4_i32, %c2_i32_63 : i32
    %193 = arith.index_cast %192 : i32 to index
    %c0_64 = arith.constant 0 : index
    %194 = vector.load %arg17[%193, %c0_64] : memref<16x64xf32, #tpu.memory_space<vmem>>, vector<2x64xf32>
    tpu.vector_store %arg17[%193, %c0_64], %191 {strides = array<i32>} : memref<16x64xf32, #tpu.memory_space<vmem>>, vector<2x64xf32>,
    %c7_i32_65 = arith.constant 7 : i32
    %195 = arith.subi %c7_i32_65, %c4_i32 : i32
    %c2_i32_66 = arith.constant 2 : i32
    %196 = arith.muli %195, %c2_i32_66 : i32
    %197 = arith.index_cast %196 : i32 to index
    %c0_67 = arith.constant 0 : index
    %198 = vector.load %arg18[%197, %c0_67] : memref<16x64xf32, #tpu.memory_space<vmem>>, vector<2x64xf32>
    tpu.vector_store %arg18[%197, %c0_67], %191 {strides = array<i32>} : memref<16x64xf32, #tpu.memory_space<vmem>>, vector<2x64xf32>,
    %c5_i32 = arith.constant 5 : i32
    %c2_i32_68 = arith.constant 2 : i32
    %199 = arith.muli %c5_i32, %c2_i32_68 : i32
    %200 = arith.index_cast %199 : i32 to index
    %c0_69 = arith.constant 0 : index
    %201 = vector.load %arg16[%200, %c0_69] : memref<16x192xf32, #tpu.memory_space<vmem>>, vector<2x192xf32>
    %cst_70 = arith.constant dense<0.000000e+00> : vector<2x192xf32>
    %202 = tpu.matmul %191, %17, %cst_70 {dimension_numbers = #tpu.dot_dimension_numbers<[1], [0], [0], [1], [0, 0, 1, 1], [], []>} : vector<2x64xf32>, vector<64x192xf32>, vector<2x192xf32> -> vector<2x192xf32>
    %203 = arith.addf %202, %16 : vector<2x192xf32>
    %204 = vector.extract_strided_slice %201 {offsets = [0, 0], sizes = [2, 64], strides = [1, 1]} : vector<2x192xf32> to vector<2x64xf32>
    %205 = vector.extract_strided_slice %203 {offsets = [0, 0], sizes = [2, 64], strides = [1, 1]} : vector<2x192xf32> to vector<2x64xf32>
    %206 = arith.addf %204, %205 : vector<2x64xf32>
    %207 = arith.negf %206 : vector<2x64xf32>
    %208 = math.exp %207 : vector<2x64xf32>
    %cst_71 = arith.constant 1.000000e+00 : f32
    %209 = vector.broadcast %cst_71 : f32 to vector<2x64xf32>
    %210 = arith.addf %209, %208 : vector<2x64xf32>
    %211 = arith.divf %209, %210 : vector<2x64xf32>
    %212 = vector.extract_strided_slice %201 {offsets = [0, 64], sizes = [2, 64], strides = [1, 1]} : vector<2x192xf32> to vector<2x64xf32>
    %213 = vector.extract_strided_slice %203 {offsets = [0, 64], sizes = [2, 64], strides = [1, 1]} : vector<2x192xf32> to vector<2x64xf32>
    %214 = arith.addf %212, %213 : vector<2x64xf32>
    %215 = arith.negf %214 : vector<2x64xf32>
    %216 = math.exp %215 : vector<2x64xf32>
    %cst_72 = arith.constant 1.000000e+00 : f32
    %217 = vector.broadcast %cst_72 : f32 to vector<2x64xf32>
    %218 = arith.addf %217, %216 : vector<2x64xf32>
    %219 = arith.divf %217, %218 : vector<2x64xf32>
    %220 = vector.extract_strided_slice %201 {offsets = [0, 128], sizes = [2, 64], strides = [1, 1]} : vector<2x192xf32> to vector<2x64xf32>
    %221 = vector.extract_strided_slice %203 {offsets = [0, 128], sizes = [2, 64], strides = [1, 1]} : vector<2x192xf32> to vector<2x64xf32>
    %222 = arith.mulf %211, %221 : vector<2x64xf32>
    %223 = arith.addf %220, %222 : vector<2x64xf32>
    %224 = math.tanh %223 : vector<2x64xf32>
    %225 = arith.subf %191, %224 : vector<2x64xf32>
    %226 = arith.mulf %219, %225 : vector<2x64xf32>
    %227 = arith.addf %224, %226 : vector<2x64xf32>
    %c2_i32_73 = arith.constant 2 : i32
    %228 = arith.muli %c5_i32, %c2_i32_73 : i32
    %229 = arith.index_cast %228 : i32 to index
    %c0_74 = arith.constant 0 : index
    %230 = vector.load %arg17[%229, %c0_74] : memref<16x64xf32, #tpu.memory_space<vmem>>, vector<2x64xf32>
    tpu.vector_store %arg17[%229, %c0_74], %227 {strides = array<i32>} : memref<16x64xf32, #tpu.memory_space<vmem>>, vector<2x64xf32>,
    %c7_i32_75 = arith.constant 7 : i32
    %231 = arith.subi %c7_i32_75, %c5_i32 : i32
    %c2_i32_76 = arith.constant 2 : i32
    %232 = arith.muli %231, %c2_i32_76 : i32
    %233 = arith.index_cast %232 : i32 to index
    %c0_77 = arith.constant 0 : index
    %234 = vector.load %arg18[%233, %c0_77] : memref<16x64xf32, #tpu.memory_space<vmem>>, vector<2x64xf32>
    tpu.vector_store %arg18[%233, %c0_77], %227 {strides = array<i32>} : memref<16x64xf32, #tpu.memory_space<vmem>>, vector<2x64xf32>,
    %c6_i32 = arith.constant 6 : i32
    %c2_i32_78 = arith.constant 2 : i32
    %235 = arith.muli %c6_i32, %c2_i32_78 : i32
    %236 = arith.index_cast %235 : i32 to index
    %c0_79 = arith.constant 0 : index
    %237 = vector.load %arg16[%236, %c0_79] : memref<16x192xf32, #tpu.memory_space<vmem>>, vector<2x192xf32>
    %cst_80 = arith.constant dense<0.000000e+00> : vector<2x192xf32>
    %238 = tpu.matmul %227, %17, %cst_80 {dimension_numbers = #tpu.dot_dimension_numbers<[1], [0], [0], [1], [0, 0, 1, 1], [], []>} : vector<2x64xf32>, vector<64x192xf32>, vector<2x192xf32> -> vector<2x192xf32>
    %239 = arith.addf %238, %16 : vector<2x192xf32>
    %240 = vector.extract_strided_slice %237 {offsets = [0, 0], sizes = [2, 64], strides = [1, 1]} : vector<2x192xf32> to vector<2x64xf32>
    %241 = vector.extract_strided_slice %239 {offsets = [0, 0], sizes = [2, 64], strides = [1, 1]} : vector<2x192xf32> to vector<2x64xf32>
    %242 = arith.addf %240, %241 : vector<2x64xf32>
    %243 = arith.negf %242 : vector<2x64xf32>
    %244 = math.exp %243 : vector<2x64xf32>
    %cst_81 = arith.constant 1.000000e+00 : f32
    %245 = vector.broadcast %cst_81 : f32 to vector<2x64xf32>
    %246 = arith.addf %245, %244 : vector<2x64xf32>
    %247 = arith.divf %245, %246 : vector<2x64xf32>
    %248 = vector.extract_strided_slice %237 {offsets = [0, 64], sizes = [2, 64], strides = [1, 1]} : vector<2x192xf32> to vector<2x64xf32>
    %249 = vector.extract_strided_slice %239 {offsets = [0, 64], sizes = [2, 64], strides = [1, 1]} : vector<2x192xf32> to vector<2x64xf32>
    %250 = arith.addf %248, %249 : vector<2x64xf32>
    %251 = arith.negf %250 : vector<2x64xf32>
    %252 = math.exp %251 : vector<2x64xf32>
    %cst_82 = arith.constant 1.000000e+00 : f32
    %253 = vector.broadcast %cst_82 : f32 to vector<2x64xf32>
    %254 = arith.addf %253, %252 : vector<2x64xf32>
    %255 = arith.divf %253, %254 : vector<2x64xf32>
    %256 = vector.extract_strided_slice %237 {offsets = [0, 128], sizes = [2, 64], strides = [1, 1]} : vector<2x192xf32> to vector<2x64xf32>
    %257 = vector.extract_strided_slice %239 {offsets = [0, 128], sizes = [2, 64], strides = [1, 1]} : vector<2x192xf32> to vector<2x64xf32>
    %258 = arith.mulf %247, %257 : vector<2x64xf32>
    %259 = arith.addf %256, %258 : vector<2x64xf32>
    %260 = math.tanh %259 : vector<2x64xf32>
    %261 = arith.subf %227, %260 : vector<2x64xf32>
    %262 = arith.mulf %255, %261 : vector<2x64xf32>
    %263 = arith.addf %260, %262 : vector<2x64xf32>
    %c2_i32_83 = arith.constant 2 : i32
    %264 = arith.muli %c6_i32, %c2_i32_83 : i32
    %265 = arith.index_cast %264 : i32 to index
    %c0_84 = arith.constant 0 : index
    %266 = vector.load %arg17[%265, %c0_84] : memref<16x64xf32, #tpu.memory_space<vmem>>, vector<2x64xf32>
    tpu.vector_store %arg17[%265, %c0_84], %263 {strides = array<i32>} : memref<16x64xf32, #tpu.memory_space<vmem>>, vector<2x64xf32>,
    %c7_i32_85 = arith.constant 7 : i32
    %267 = arith.subi %c7_i32_85, %c6_i32 : i32
    %c2_i32_86 = arith.constant 2 : i32
    %268 = arith.muli %267, %c2_i32_86 : i32
    %269 = arith.index_cast %268 : i32 to index
    %c0_87 = arith.constant 0 : index
    %270 = vector.load %arg18[%269, %c0_87] : memref<16x64xf32, #tpu.memory_space<vmem>>, vector<2x64xf32>
    tpu.vector_store %arg18[%269, %c0_87], %263 {strides = array<i32>} : memref<16x64xf32, #tpu.memory_space<vmem>>, vector<2x64xf32>,
    %c7_i32_88 = arith.constant 7 : i32
    %c2_i32_89 = arith.constant 2 : i32
    %271 = arith.muli %c7_i32_88, %c2_i32_89 : i32
    %272 = arith.index_cast %271 : i32 to index
    %c0_90 = arith.constant 0 : index
    %273 = vector.load %arg16[%272, %c0_90] : memref<16x192xf32, #tpu.memory_space<vmem>>, vector<2x192xf32>
    %cst_91 = arith.constant dense<0.000000e+00> : vector<2x192xf32>
    %274 = tpu.matmul %263, %17, %cst_91 {dimension_numbers = #tpu.dot_dimension_numbers<[1], [0], [0], [1], [0, 0, 1, 1], [], []>} : vector<2x64xf32>, vector<64x192xf32>, vector<2x192xf32> -> vector<2x192xf32>
    %275 = arith.addf %274, %16 : vector<2x192xf32>
    %276 = vector.extract_strided_slice %273 {offsets = [0, 0], sizes = [2, 64], strides = [1, 1]} : vector<2x192xf32> to vector<2x64xf32>
    %277 = vector.extract_strided_slice %275 {offsets = [0, 0], sizes = [2, 64], strides = [1, 1]} : vector<2x192xf32> to vector<2x64xf32>
    %278 = arith.addf %276, %277 : vector<2x64xf32>
    %279 = arith.negf %278 : vector<2x64xf32>
    %280 = math.exp %279 : vector<2x64xf32>
    %cst_92 = arith.constant 1.000000e+00 : f32
    %281 = vector.broadcast %cst_92 : f32 to vector<2x64xf32>
    %282 = arith.addf %281, %280 : vector<2x64xf32>
    %283 = arith.divf %281, %282 : vector<2x64xf32>
    %284 = vector.extract_strided_slice %273 {offsets = [0, 64], sizes = [2, 64], strides = [1, 1]} : vector<2x192xf32> to vector<2x64xf32>
    %285 = vector.extract_strided_slice %275 {offsets = [0, 64], sizes = [2, 64], strides = [1, 1]} : vector<2x192xf32> to vector<2x64xf32>
    %286 = arith.addf %284, %285 : vector<2x64xf32>
    %287 = arith.negf %286 : vector<2x64xf32>
    %288 = math.exp %287 : vector<2x64xf32>
    %cst_93 = arith.constant 1.000000e+00 : f32
    %289 = vector.broadcast %cst_93 : f32 to vector<2x64xf32>
    %290 = arith.addf %289, %288 : vector<2x64xf32>
    %291 = arith.divf %289, %290 : vector<2x64xf32>
    %292 = vector.extract_strided_slice %273 {offsets = [0, 128], sizes = [2, 64], strides = [1, 1]} : vector<2x192xf32> to vector<2x64xf32>
    %293 = vector.extract_strided_slice %275 {offsets = [0, 128], sizes = [2, 64], strides = [1, 1]} : vector<2x192xf32> to vector<2x64xf32>
    %294 = arith.mulf %283, %293 : vector<2x64xf32>
    %295 = arith.addf %292, %294 : vector<2x64xf32>
    %296 = math.tanh %295 : vector<2x64xf32>
    %297 = arith.subf %263, %296 : vector<2x64xf32>
    %298 = arith.mulf %291, %297 : vector<2x64xf32>
    %299 = arith.addf %296, %298 : vector<2x64xf32>
    %c2_i32_94 = arith.constant 2 : i32
    %300 = arith.muli %c7_i32_88, %c2_i32_94 : i32
    %301 = arith.index_cast %300 : i32 to index
    %c0_95 = arith.constant 0 : index
    %302 = vector.load %arg17[%301, %c0_95] : memref<16x64xf32, #tpu.memory_space<vmem>>, vector<2x64xf32>
    tpu.vector_store %arg17[%301, %c0_95], %299 {strides = array<i32>} : memref<16x64xf32, #tpu.memory_space<vmem>>, vector<2x64xf32>,
    %c7_i32_96 = arith.constant 7 : i32
    %303 = arith.subi %c7_i32_96, %c7_i32_88 : i32
    %c2_i32_97 = arith.constant 2 : i32
    %304 = arith.muli %303, %c2_i32_97 : i32
    %305 = arith.index_cast %304 : i32 to index
    %c0_98 = arith.constant 0 : index
    %306 = vector.load %arg18[%305, %c0_98] : memref<16x64xf32, #tpu.memory_space<vmem>>, vector<2x64xf32>
    tpu.vector_store %arg18[%305, %c0_98], %299 {strides = array<i32>} : memref<16x64xf32, #tpu.memory_space<vmem>>, vector<2x64xf32>,
    %c8_i32 = arith.constant 8 : i32
    %c0_99 = arith.constant 0 : index
    %c0_100 = arith.constant 0 : index
    %307 = vector.load %arg17[%c0_99, %c0_100] : memref<16x64xf32, #tpu.memory_space<vmem>>, vector<16x64xf32>
    %c0_101 = arith.constant 0 : index
    %c0_102 = arith.constant 0 : index
    %308 = vector.load %arg7[%c0_101, %c0_102] : memref<64x192xf32, #tpu.memory_space<vmem>>, vector<64x192xf32>
    %cst_103 = arith.constant dense<0.000000e+00> : vector<16x192xf32>
    %309 = tpu.matmul %307, %308, %cst_103 {dimension_numbers = #tpu.dot_dimension_numbers<[1], [0], [0], [1], [0, 0, 1, 1], [], []>} : vector<16x64xf32>, vector<64x192xf32>, vector<16x192xf32> -> vector<16x192xf32>
    %c0_104 = arith.constant 0 : index
    %c0_105 = arith.constant 0 : index
    %310 = vector.load %arg18[%c0_104, %c0_105] : memref<16x64xf32, #tpu.memory_space<vmem>>, vector<16x64xf32>
    %c0_106 = arith.constant 0 : index
    %c0_107 = arith.constant 0 : index
    %311 = vector.load %arg8[%c0_106, %c0_107] : memref<64x192xf32, #tpu.memory_space<vmem>>, vector<64x192xf32>
    %cst_108 = arith.constant dense<0.000000e+00> : vector<16x192xf32>
    %312 = tpu.matmul %310, %311, %cst_108 {dimension_numbers = #tpu.dot_dimension_numbers<[1], [0], [0], [1], [0, 0, 1, 1], [], []>} : vector<16x64xf32>, vector<64x192xf32>, vector<16x192xf32> -> vector<16x192xf32>
    %313 = arith.addf %309, %312 : vector<16x192xf32>
    %c0_109 = arith.constant 0 : index
    %c0_110 = arith.constant 0 : index
    %314 = vector.load %arg9[%c0_109, %c0_110] : memref<1x192xf32, #tpu.memory_space<vmem>>, vector<1x192xf32>
    %315 = vector.broadcast %314 : vector<1x192xf32> to vector<16x192xf32>
    %316 = arith.addf %313, %315 : vector<16x192xf32>
    %c0_111 = arith.constant 0 : index
    %c0_112 = arith.constant 0 : index
    %317 = vector.load %arg16[%c0_111, %c0_112] : memref<16x192xf32, #tpu.memory_space<vmem>>, vector<16x192xf32>
    tpu.vector_store %arg16[%c0_111, %c0_112], %316 {strides = array<i32>} : memref<16x192xf32, #tpu.memory_space<vmem>>, vector<16x192xf32>,
    %c0_113 = arith.constant 0 : index
    %c0_114 = arith.constant 0 : index
    %318 = vector.load %arg10[%c0_113, %c0_114] : memref<1x192xf32, #tpu.memory_space<vmem>>, vector<1x192xf32>
    %319 = vector.shape_cast %318 : vector<1x192xf32> to vector<1x192xf32>
    %320 = vector.broadcast %319 : vector<1x192xf32> to vector<2x192xf32>
    %c0_115 = arith.constant 0 : index
    %c0_116 = arith.constant 0 : index
    %321 = vector.load %arg11[%c0_115, %c0_116] : memref<64x192xf32, #tpu.memory_space<vmem>>, vector<64x192xf32>
    %cst_117 = arith.constant 0.000000e+00 : f32
    %322 = vector.broadcast %cst_117 : f32 to vector<2x64xf32>
    %cst_118 = arith.constant 0.000000e+00 : f32
    %323 = vector.broadcast %cst_118 : f32 to vector<2x1xf32>
    %c0_i32_119 = arith.constant 0 : i32
    %c2_i32_120 = arith.constant 2 : i32
    %324 = arith.muli %c0_i32_119, %c2_i32_120 : i32
    %325 = arith.index_cast %324 : i32 to index
    %c0_121 = arith.constant 0 : index
    %326 = vector.load %arg16[%325, %c0_121] : memref<16x192xf32, #tpu.memory_space<vmem>>, vector<2x192xf32>
    %cst_122 = arith.constant dense<0.000000e+00> : vector<2x192xf32>
    %327 = tpu.matmul %322, %321, %cst_122 {dimension_numbers = #tpu.dot_dimension_numbers<[1], [0], [0], [1], [0, 0, 1, 1], [], []>} : vector<2x64xf32>, vector<64x192xf32>, vector<2x192xf32> -> vector<2x192xf32>
    %328 = arith.addf %327, %320 : vector<2x192xf32>
    %329 = vector.extract_strided_slice %326 {offsets = [0, 0], sizes = [2, 64], strides = [1, 1]} : vector<2x192xf32> to vector<2x64xf32>
    %330 = vector.extract_strided_slice %328 {offsets = [0, 0], sizes = [2, 64], strides = [1, 1]} : vector<2x192xf32> to vector<2x64xf32>
    %331 = arith.addf %329, %330 : vector<2x64xf32>
    %332 = arith.negf %331 : vector<2x64xf32>
    %333 = math.exp %332 : vector<2x64xf32>
    %cst_123 = arith.constant 1.000000e+00 : f32
    %334 = vector.broadcast %cst_123 : f32 to vector<2x64xf32>
    %335 = arith.addf %334, %333 : vector<2x64xf32>
    %336 = arith.divf %334, %335 : vector<2x64xf32>
    %337 = vector.extract_strided_slice %326 {offsets = [0, 64], sizes = [2, 64], strides = [1, 1]} : vector<2x192xf32> to vector<2x64xf32>
    %338 = vector.extract_strided_slice %328 {offsets = [0, 64], sizes = [2, 64], strides = [1, 1]} : vector<2x192xf32> to vector<2x64xf32>
    %339 = arith.addf %337, %338 : vector<2x64xf32>
    %340 = arith.negf %339 : vector<2x64xf32>
    %341 = math.exp %340 : vector<2x64xf32>
    %cst_124 = arith.constant 1.000000e+00 : f32
    %342 = vector.broadcast %cst_124 : f32 to vector<2x64xf32>
    %343 = arith.addf %342, %341 : vector<2x64xf32>
    %344 = arith.divf %342, %343 : vector<2x64xf32>
    %345 = vector.extract_strided_slice %326 {offsets = [0, 128], sizes = [2, 64], strides = [1, 1]} : vector<2x192xf32> to vector<2x64xf32>
    %346 = vector.extract_strided_slice %328 {offsets = [0, 128], sizes = [2, 64], strides = [1, 1]} : vector<2x192xf32> to vector<2x64xf32>
    %347 = arith.mulf %336, %346 : vector<2x64xf32>
    %348 = arith.addf %345, %347 : vector<2x64xf32>
    %349 = math.tanh %348 : vector<2x64xf32>
    %350 = arith.subf %322, %349 : vector<2x64xf32>
    %351 = arith.mulf %344, %350 : vector<2x64xf32>
    %352 = arith.addf %349, %351 : vector<2x64xf32>
    %353 = vector.extract_strided_slice %352 {offsets = [0, 0], sizes = [2, 32], strides = [1, 1]} : vector<2x64xf32> to vector<2x32xf32>
    %354 = arith.mulf %353, %2 : vector<2x32xf32>
    %cst_125 = arith.constant dense<0.000000e+00> : vector<2xf32>
    %355 = vector.multi_reduction <add>, %354, %cst_125 [1] : vector<2x32xf32> to vector<2xf32>
    %356 = vector.shape_cast %355 : vector<2xf32> to vector<2x1xf32>
    %357 = vector.extract_strided_slice %352 {offsets = [0, 32], sizes = [2, 32], strides = [1, 1]} : vector<2x64xf32> to vector<2x32xf32>
    %358 = arith.mulf %357, %2 : vector<2x32xf32>
    %cst_126 = arith.constant dense<0.000000e+00> : vector<2xf32>
    %359 = vector.multi_reduction <add>, %358, %cst_126 [1] : vector<2x32xf32> to vector<2xf32>
    %360 = vector.shape_cast %359 : vector<2xf32> to vector<2x1xf32>
    %c0_127 = arith.constant 0 : index
    %361 = arith.index_cast %c0_i32_119 : i32 to index
    %362 = memref.load %arg13[%c0_127, %361] : memref<1x8xf32, #tpu.memory_space<smem>>
    %363 = vector.broadcast %362 : f32 to vector<2x1xf32>
    %364 = arith.mulf %363, %356 : vector<2x1xf32>
    %365 = arith.addf %323, %364 : vector<2x1xf32>
    %c7_i32_128 = arith.constant 7 : i32
    %366 = arith.subi %c7_i32_128, %c0_i32_119 : i32
    %c0_129 = arith.constant 0 : index
    %367 = arith.index_cast %366 : i32 to index
    %368 = memref.load %arg13[%c0_129, %367] : memref<1x8xf32, #tpu.memory_space<smem>>
    %369 = vector.broadcast %368 : f32 to vector<2x1xf32>
    %370 = arith.mulf %369, %360 : vector<2x1xf32>
    %371 = arith.addf %365, %370 : vector<2x1xf32>
    %c1_i32_130 = arith.constant 1 : i32
    %c2_i32_131 = arith.constant 2 : i32
    %372 = arith.muli %c1_i32_130, %c2_i32_131 : i32
    %373 = arith.index_cast %372 : i32 to index
    %c0_132 = arith.constant 0 : index
    %374 = vector.load %arg16[%373, %c0_132] : memref<16x192xf32, #tpu.memory_space<vmem>>, vector<2x192xf32>
    %cst_133 = arith.constant dense<0.000000e+00> : vector<2x192xf32>
    %375 = tpu.matmul %352, %321, %cst_133 {dimension_numbers = #tpu.dot_dimension_numbers<[1], [0], [0], [1], [0, 0, 1, 1], [], []>} : vector<2x64xf32>, vector<64x192xf32>, vector<2x192xf32> -> vector<2x192xf32>
    %376 = arith.addf %375, %320 : vector<2x192xf32>
    %377 = vector.extract_strided_slice %374 {offsets = [0, 0], sizes = [2, 64], strides = [1, 1]} : vector<2x192xf32> to vector<2x64xf32>
    %378 = vector.extract_strided_slice %376 {offsets = [0, 0], sizes = [2, 64], strides = [1, 1]} : vector<2x192xf32> to vector<2x64xf32>
    %379 = arith.addf %377, %378 : vector<2x64xf32>
    %380 = arith.negf %379 : vector<2x64xf32>
    %381 = math.exp %380 : vector<2x64xf32>
    %cst_134 = arith.constant 1.000000e+00 : f32
    %382 = vector.broadcast %cst_134 : f32 to vector<2x64xf32>
    %383 = arith.addf %382, %381 : vector<2x64xf32>
    %384 = arith.divf %382, %383 : vector<2x64xf32>
    %385 = vector.extract_strided_slice %374 {offsets = [0, 64], sizes = [2, 64], strides = [1, 1]} : vector<2x192xf32> to vector<2x64xf32>
    %386 = vector.extract_strided_slice %376 {offsets = [0, 64], sizes = [2, 64], strides = [1, 1]} : vector<2x192xf32> to vector<2x64xf32>
    %387 = arith.addf %385, %386 : vector<2x64xf32>
    %388 = arith.negf %387 : vector<2x64xf32>
    %389 = math.exp %388 : vector<2x64xf32>
    %cst_135 = arith.constant 1.000000e+00 : f32
    %390 = vector.broadcast %cst_135 : f32 to vector<2x64xf32>
    %391 = arith.addf %390, %389 : vector<2x64xf32>
    %392 = arith.divf %390, %391 : vector<2x64xf32>
    %393 = vector.extract_strided_slice %374 {offsets = [0, 128], sizes = [2, 64], strides = [1, 1]} : vector<2x192xf32> to vector<2x64xf32>
    %394 = vector.extract_strided_slice %376 {offsets = [0, 128], sizes = [2, 64], strides = [1, 1]} : vector<2x192xf32> to vector<2x64xf32>
    %395 = arith.mulf %384, %394 : vector<2x64xf32>
    %396 = arith.addf %393, %395 : vector<2x64xf32>
    %397 = math.tanh %396 : vector<2x64xf32>
    %398 = arith.subf %352, %397 : vector<2x64xf32>
    %399 = arith.mulf %392, %398 : vector<2x64xf32>
    %400 = arith.addf %397, %399 : vector<2x64xf32>
    %401 = vector.extract_strided_slice %400 {offsets = [0, 0], sizes = [2, 32], strides = [1, 1]} : vector<2x64xf32> to vector<2x32xf32>
    %402 = arith.mulf %401, %2 : vector<2x32xf32>
    %cst_136 = arith.constant dense<0.000000e+00> : vector<2xf32>
    %403 = vector.multi_reduction <add>, %402, %cst_136 [1] : vector<2x32xf32> to vector<2xf32>
    %404 = vector.shape_cast %403 : vector<2xf32> to vector<2x1xf32>
    %405 = vector.extract_strided_slice %400 {offsets = [0, 32], sizes = [2, 32], strides = [1, 1]} : vector<2x64xf32> to vector<2x32xf32>
    %406 = arith.mulf %405, %2 : vector<2x32xf32>
    %cst_137 = arith.constant dense<0.000000e+00> : vector<2xf32>
    %407 = vector.multi_reduction <add>, %406, %cst_137 [1] : vector<2x32xf32> to vector<2xf32>
    %408 = vector.shape_cast %407 : vector<2xf32> to vector<2x1xf32>
    %c0_138 = arith.constant 0 : index
    %409 = arith.index_cast %c1_i32_130 : i32 to index
    %410 = memref.load %arg13[%c0_138, %409] : memref<1x8xf32, #tpu.memory_space<smem>>
    %411 = vector.broadcast %410 : f32 to vector<2x1xf32>
    %412 = arith.mulf %411, %404 : vector<2x1xf32>
    %413 = arith.addf %371, %412 : vector<2x1xf32>
    %c7_i32_139 = arith.constant 7 : i32
    %414 = arith.subi %c7_i32_139, %c1_i32_130 : i32
    %c0_140 = arith.constant 0 : index
    %415 = arith.index_cast %414 : i32 to index
    %416 = memref.load %arg13[%c0_140, %415] : memref<1x8xf32, #tpu.memory_space<smem>>
    %417 = vector.broadcast %416 : f32 to vector<2x1xf32>
    %418 = arith.mulf %417, %408 : vector<2x1xf32>
    %419 = arith.addf %413, %418 : vector<2x1xf32>
    %c2_i32_141 = arith.constant 2 : i32
    %c2_i32_142 = arith.constant 2 : i32
    %420 = arith.muli %c2_i32_141, %c2_i32_142 : i32
    %421 = arith.index_cast %420 : i32 to index
    %c0_143 = arith.constant 0 : index
    %422 = vector.load %arg16[%421, %c0_143] : memref<16x192xf32, #tpu.memory_space<vmem>>, vector<2x192xf32>
    %cst_144 = arith.constant dense<0.000000e+00> : vector<2x192xf32>
    %423 = tpu.matmul %400, %321, %cst_144 {dimension_numbers = #tpu.dot_dimension_numbers<[1], [0], [0], [1], [0, 0, 1, 1], [], []>} : vector<2x64xf32>, vector<64x192xf32>, vector<2x192xf32> -> vector<2x192xf32>
    %424 = arith.addf %423, %320 : vector<2x192xf32>
    %425 = vector.extract_strided_slice %422 {offsets = [0, 0], sizes = [2, 64], strides = [1, 1]} : vector<2x192xf32> to vector<2x64xf32>
    %426 = vector.extract_strided_slice %424 {offsets = [0, 0], sizes = [2, 64], strides = [1, 1]} : vector<2x192xf32> to vector<2x64xf32>
    %427 = arith.addf %425, %426 : vector<2x64xf32>
    %428 = arith.negf %427 : vector<2x64xf32>
    %429 = math.exp %428 : vector<2x64xf32>
    %cst_145 = arith.constant 1.000000e+00 : f32
    %430 = vector.broadcast %cst_145 : f32 to vector<2x64xf32>
    %431 = arith.addf %430, %429 : vector<2x64xf32>
    %432 = arith.divf %430, %431 : vector<2x64xf32>
    %433 = vector.extract_strided_slice %422 {offsets = [0, 64], sizes = [2, 64], strides = [1, 1]} : vector<2x192xf32> to vector<2x64xf32>
    %434 = vector.extract_strided_slice %424 {offsets = [0, 64], sizes = [2, 64], strides = [1, 1]} : vector<2x192xf32> to vector<2x64xf32>
    %435 = arith.addf %433, %434 : vector<2x64xf32>
    %436 = arith.negf %435 : vector<2x64xf32>
    %437 = math.exp %436 : vector<2x64xf32>
    %cst_146 = arith.constant 1.000000e+00 : f32
    %438 = vector.broadcast %cst_146 : f32 to vector<2x64xf32>
    %439 = arith.addf %438, %437 : vector<2x64xf32>
    %440 = arith.divf %438, %439 : vector<2x64xf32>
    %441 = vector.extract_strided_slice %422 {offsets = [0, 128], sizes = [2, 64], strides = [1, 1]} : vector<2x192xf32> to vector<2x64xf32>
    %442 = vector.extract_strided_slice %424 {offsets = [0, 128], sizes = [2, 64], strides = [1, 1]} : vector<2x192xf32> to vector<2x64xf32>
    %443 = arith.mulf %432, %442 : vector<2x64xf32>
    %444 = arith.addf %441, %443 : vector<2x64xf32>
    %445 = math.tanh %444 : vector<2x64xf32>
    %446 = arith.subf %400, %445 : vector<2x64xf32>
    %447 = arith.mulf %440, %446 : vector<2x64xf32>
    %448 = arith.addf %445, %447 : vector<2x64xf32>
    %449 = vector.extract_strided_slice %448 {offsets = [0, 0], sizes = [2, 32], strides = [1, 1]} : vector<2x64xf32> to vector<2x32xf32>
    %450 = arith.mulf %449, %2 : vector<2x32xf32>
    %cst_147 = arith.constant dense<0.000000e+00> : vector<2xf32>
    %451 = vector.multi_reduction <add>, %450, %cst_147 [1] : vector<2x32xf32> to vector<2xf32>
    %452 = vector.shape_cast %451 : vector<2xf32> to vector<2x1xf32>
    %453 = vector.extract_strided_slice %448 {offsets = [0, 32], sizes = [2, 32], strides = [1, 1]} : vector<2x64xf32> to vector<2x32xf32>
    %454 = arith.mulf %453, %2 : vector<2x32xf32>
    %cst_148 = arith.constant dense<0.000000e+00> : vector<2xf32>
    %455 = vector.multi_reduction <add>, %454, %cst_148 [1] : vector<2x32xf32> to vector<2xf32>
    %456 = vector.shape_cast %455 : vector<2xf32> to vector<2x1xf32>
    %c0_149 = arith.constant 0 : index
    %457 = arith.index_cast %c2_i32_141 : i32 to index
    %458 = memref.load %arg13[%c0_149, %457] : memref<1x8xf32, #tpu.memory_space<smem>>
    %459 = vector.broadcast %458 : f32 to vector<2x1xf32>
    %460 = arith.mulf %459, %452 : vector<2x1xf32>
    %461 = arith.addf %419, %460 : vector<2x1xf32>
    %c7_i32_150 = arith.constant 7 : i32
    %462 = arith.subi %c7_i32_150, %c2_i32_141 : i32
    %c0_151 = arith.constant 0 : index
    %463 = arith.index_cast %462 : i32 to index
    %464 = memref.load %arg13[%c0_151, %463] : memref<1x8xf32, #tpu.memory_space<smem>>
    %465 = vector.broadcast %464 : f32 to vector<2x1xf32>
    %466 = arith.mulf %465, %456 : vector<2x1xf32>
    %467 = arith.addf %461, %466 : vector<2x1xf32>
    %c3_i32_152 = arith.constant 3 : i32
    %c2_i32_153 = arith.constant 2 : i32
    %468 = arith.muli %c3_i32_152, %c2_i32_153 : i32
    %469 = arith.index_cast %468 : i32 to index
    %c0_154 = arith.constant 0 : index
    %470 = vector.load %arg16[%469, %c0_154] : memref<16x192xf32, #tpu.memory_space<vmem>>, vector<2x192xf32>
    %cst_155 = arith.constant dense<0.000000e+00> : vector<2x192xf32>
    %471 = tpu.matmul %448, %321, %cst_155 {dimension_numbers = #tpu.dot_dimension_numbers<[1], [0], [0], [1], [0, 0, 1, 1], [], []>} : vector<2x64xf32>, vector<64x192xf32>, vector<2x192xf32> -> vector<2x192xf32>
    %472 = arith.addf %471, %320 : vector<2x192xf32>
    %473 = vector.extract_strided_slice %470 {offsets = [0, 0], sizes = [2, 64], strides = [1, 1]} : vector<2x192xf32> to vector<2x64xf32>
    %474 = vector.extract_strided_slice %472 {offsets = [0, 0], sizes = [2, 64], strides = [1, 1]} : vector<2x192xf32> to vector<2x64xf32>
    %475 = arith.addf %473, %474 : vector<2x64xf32>
    %476 = arith.negf %475 : vector<2x64xf32>
    %477 = math.exp %476 : vector<2x64xf32>
    %cst_156 = arith.constant 1.000000e+00 : f32
    %478 = vector.broadcast %cst_156 : f32 to vector<2x64xf32>
    %479 = arith.addf %478, %477 : vector<2x64xf32>
    %480 = arith.divf %478, %479 : vector<2x64xf32>
    %481 = vector.extract_strided_slice %470 {offsets = [0, 64], sizes = [2, 64], strides = [1, 1]} : vector<2x192xf32> to vector<2x64xf32>
    %482 = vector.extract_strided_slice %472 {offsets = [0, 64], sizes = [2, 64], strides = [1, 1]} : vector<2x192xf32> to vector<2x64xf32>
    %483 = arith.addf %481, %482 : vector<2x64xf32>
    %484 = arith.negf %483 : vector<2x64xf32>
    %485 = math.exp %484 : vector<2x64xf32>
    %cst_157 = arith.constant 1.000000e+00 : f32
    %486 = vector.broadcast %cst_157 : f32 to vector<2x64xf32>
    %487 = arith.addf %486, %485 : vector<2x64xf32>
    %488 = arith.divf %486, %487 : vector<2x64xf32>
    %489 = vector.extract_strided_slice %470 {offsets = [0, 128], sizes = [2, 64], strides = [1, 1]} : vector<2x192xf32> to vector<2x64xf32>
    %490 = vector.extract_strided_slice %472 {offsets = [0, 128], sizes = [2, 64], strides = [1, 1]} : vector<2x192xf32> to vector<2x64xf32>
    %491 = arith.mulf %480, %490 : vector<2x64xf32>
    %492 = arith.addf %489, %491 : vector<2x64xf32>
    %493 = math.tanh %492 : vector<2x64xf32>
    %494 = arith.subf %448, %493 : vector<2x64xf32>
    %495 = arith.mulf %488, %494 : vector<2x64xf32>
    %496 = arith.addf %493, %495 : vector<2x64xf32>
    %497 = vector.extract_strided_slice %496 {offsets = [0, 0], sizes = [2, 32], strides = [1, 1]} : vector<2x64xf32> to vector<2x32xf32>
    %498 = arith.mulf %497, %2 : vector<2x32xf32>
    %cst_158 = arith.constant dense<0.000000e+00> : vector<2xf32>
    %499 = vector.multi_reduction <add>, %498, %cst_158 [1] : vector<2x32xf32> to vector<2xf32>
    %500 = vector.shape_cast %499 : vector<2xf32> to vector<2x1xf32>
    %501 = vector.extract_strided_slice %496 {offsets = [0, 32], sizes = [2, 32], strides = [1, 1]} : vector<2x64xf32> to vector<2x32xf32>
    %502 = arith.mulf %501, %2 : vector<2x32xf32>
    %cst_159 = arith.constant dense<0.000000e+00> : vector<2xf32>
    %503 = vector.multi_reduction <add>, %502, %cst_159 [1] : vector<2x32xf32> to vector<2xf32>
    %504 = vector.shape_cast %503 : vector<2xf32> to vector<2x1xf32>
    %c0_160 = arith.constant 0 : index
    %505 = arith.index_cast %c3_i32_152 : i32 to index
    %506 = memref.load %arg13[%c0_160, %505] : memref<1x8xf32, #tpu.memory_space<smem>>
    %507 = vector.broadcast %506 : f32 to vector<2x1xf32>
    %508 = arith.mulf %507, %500 : vector<2x1xf32>
    %509 = arith.addf %467, %508 : vector<2x1xf32>
    %c7_i32_161 = arith.constant 7 : i32
    %510 = arith.subi %c7_i32_161, %c3_i32_152 : i32
    %c0_162 = arith.constant 0 : index
    %511 = arith.index_cast %510 : i32 to index
    %512 = memref.load %arg13[%c0_162, %511] : memref<1x8xf32, #tpu.memory_space<smem>>
    %513 = vector.broadcast %512 : f32 to vector<2x1xf32>
    %514 = arith.mulf %513, %504 : vector<2x1xf32>
    %515 = arith.addf %509, %514 : vector<2x1xf32>
    %c4_i32_163 = arith.constant 4 : i32
    %c2_i32_164 = arith.constant 2 : i32
    %516 = arith.muli %c4_i32_163, %c2_i32_164 : i32
    %517 = arith.index_cast %516 : i32 to index
    %c0_165 = arith.constant 0 : index
    %518 = vector.load %arg16[%517, %c0_165] : memref<16x192xf32, #tpu.memory_space<vmem>>, vector<2x192xf32>
    %cst_166 = arith.constant dense<0.000000e+00> : vector<2x192xf32>
    %519 = tpu.matmul %496, %321, %cst_166 {dimension_numbers = #tpu.dot_dimension_numbers<[1], [0], [0], [1], [0, 0, 1, 1], [], []>} : vector<2x64xf32>, vector<64x192xf32>, vector<2x192xf32> -> vector<2x192xf32>
    %520 = arith.addf %519, %320 : vector<2x192xf32>
    %521 = vector.extract_strided_slice %518 {offsets = [0, 0], sizes = [2, 64], strides = [1, 1]} : vector<2x192xf32> to vector<2x64xf32>
    %522 = vector.extract_strided_slice %520 {offsets = [0, 0], sizes = [2, 64], strides = [1, 1]} : vector<2x192xf32> to vector<2x64xf32>
    %523 = arith.addf %521, %522 : vector<2x64xf32>
    %524 = arith.negf %523 : vector<2x64xf32>
    %525 = math.exp %524 : vector<2x64xf32>
    %cst_167 = arith.constant 1.000000e+00 : f32
    %526 = vector.broadcast %cst_167 : f32 to vector<2x64xf32>
    %527 = arith.addf %526, %525 : vector<2x64xf32>
    %528 = arith.divf %526, %527 : vector<2x64xf32>
    %529 = vector.extract_strided_slice %518 {offsets = [0, 64], sizes = [2, 64], strides = [1, 1]} : vector<2x192xf32> to vector<2x64xf32>
    %530 = vector.extract_strided_slice %520 {offsets = [0, 64], sizes = [2, 64], strides = [1, 1]} : vector<2x192xf32> to vector<2x64xf32>
    %531 = arith.addf %529, %530 : vector<2x64xf32>
    %532 = arith.negf %531 : vector<2x64xf32>
    %533 = math.exp %532 : vector<2x64xf32>
    %cst_168 = arith.constant 1.000000e+00 : f32
    %534 = vector.broadcast %cst_168 : f32 to vector<2x64xf32>
    %535 = arith.addf %534, %533 : vector<2x64xf32>
    %536 = arith.divf %534, %535 : vector<2x64xf32>
    %537 = vector.extract_strided_slice %518 {offsets = [0, 128], sizes = [2, 64], strides = [1, 1]} : vector<2x192xf32> to vector<2x64xf32>
    %538 = vector.extract_strided_slice %520 {offsets = [0, 128], sizes = [2, 64], strides = [1, 1]} : vector<2x192xf32> to vector<2x64xf32>
    %539 = arith.mulf %528, %538 : vector<2x64xf32>
    %540 = arith.addf %537, %539 : vector<2x64xf32>
    %541 = math.tanh %540 : vector<2x64xf32>
    %542 = arith.subf %496, %541 : vector<2x64xf32>
    %543 = arith.mulf %536, %542 : vector<2x64xf32>
    %544 = arith.addf %541, %543 : vector<2x64xf32>
    %545 = vector.extract_strided_slice %544 {offsets = [0, 0], sizes = [2, 32], strides = [1, 1]} : vector<2x64xf32> to vector<2x32xf32>
    %546 = arith.mulf %545, %2 : vector<2x32xf32>
    %cst_169 = arith.constant dense<0.000000e+00> : vector<2xf32>
    %547 = vector.multi_reduction <add>, %546, %cst_169 [1] : vector<2x32xf32> to vector<2xf32>
    %548 = vector.shape_cast %547 : vector<2xf32> to vector<2x1xf32>
    %549 = vector.extract_strided_slice %544 {offsets = [0, 32], sizes = [2, 32], strides = [1, 1]} : vector<2x64xf32> to vector<2x32xf32>
    %550 = arith.mulf %549, %2 : vector<2x32xf32>
    %cst_170 = arith.constant dense<0.000000e+00> : vector<2xf32>
    %551 = vector.multi_reduction <add>, %550, %cst_170 [1] : vector<2x32xf32> to vector<2xf32>
    %552 = vector.shape_cast %551 : vector<2xf32> to vector<2x1xf32>
    %c0_171 = arith.constant 0 : index
    %553 = arith.index_cast %c4_i32_163 : i32 to index
    %554 = memref.load %arg13[%c0_171, %553] : memref<1x8xf32, #tpu.memory_space<smem>>
    %555 = vector.broadcast %554 : f32 to vector<2x1xf32>
    %556 = arith.mulf %555, %548 : vector<2x1xf32>
    %557 = arith.addf %515, %556 : vector<2x1xf32>
    %c7_i32_172 = arith.constant 7 : i32
    %558 = arith.subi %c7_i32_172, %c4_i32_163 : i32
    %c0_173 = arith.constant 0 : index
    %559 = arith.index_cast %558 : i32 to index
    %560 = memref.load %arg13[%c0_173, %559] : memref<1x8xf32, #tpu.memory_space<smem>>
    %561 = vector.broadcast %560 : f32 to vector<2x1xf32>
    %562 = arith.mulf %561, %552 : vector<2x1xf32>
    %563 = arith.addf %557, %562 : vector<2x1xf32>
    %c5_i32_174 = arith.constant 5 : i32
    %c2_i32_175 = arith.constant 2 : i32
    %564 = arith.muli %c5_i32_174, %c2_i32_175 : i32
    %565 = arith.index_cast %564 : i32 to index
    %c0_176 = arith.constant 0 : index
    %566 = vector.load %arg16[%565, %c0_176] : memref<16x192xf32, #tpu.memory_space<vmem>>, vector<2x192xf32>
    %cst_177 = arith.constant dense<0.000000e+00> : vector<2x192xf32>
    %567 = tpu.matmul %544, %321, %cst_177 {dimension_numbers = #tpu.dot_dimension_numbers<[1], [0], [0], [1], [0, 0, 1, 1], [], []>} : vector<2x64xf32>, vector<64x192xf32>, vector<2x192xf32> -> vector<2x192xf32>
    %568 = arith.addf %567, %320 : vector<2x192xf32>
    %569 = vector.extract_strided_slice %566 {offsets = [0, 0], sizes = [2, 64], strides = [1, 1]} : vector<2x192xf32> to vector<2x64xf32>
    %570 = vector.extract_strided_slice %568 {offsets = [0, 0], sizes = [2, 64], strides = [1, 1]} : vector<2x192xf32> to vector<2x64xf32>
    %571 = arith.addf %569, %570 : vector<2x64xf32>
    %572 = arith.negf %571 : vector<2x64xf32>
    %573 = math.exp %572 : vector<2x64xf32>
    %cst_178 = arith.constant 1.000000e+00 : f32
    %574 = vector.broadcast %cst_178 : f32 to vector<2x64xf32>
    %575 = arith.addf %574, %573 : vector<2x64xf32>
    %576 = arith.divf %574, %575 : vector<2x64xf32>
    %577 = vector.extract_strided_slice %566 {offsets = [0, 64], sizes = [2, 64], strides = [1, 1]} : vector<2x192xf32> to vector<2x64xf32>
    %578 = vector.extract_strided_slice %568 {offsets = [0, 64], sizes = [2, 64], strides = [1, 1]} : vector<2x192xf32> to vector<2x64xf32>
    %579 = arith.addf %577, %578 : vector<2x64xf32>
    %580 = arith.negf %579 : vector<2x64xf32>
    %581 = math.exp %580 : vector<2x64xf32>
    %cst_179 = arith.constant 1.000000e+00 : f32
    %582 = vector.broadcast %cst_179 : f32 to vector<2x64xf32>
    %583 = arith.addf %582, %581 : vector<2x64xf32>
    %584 = arith.divf %582, %583 : vector<2x64xf32>
    %585 = vector.extract_strided_slice %566 {offsets = [0, 128], sizes = [2, 64], strides = [1, 1]} : vector<2x192xf32> to vector<2x64xf32>
    %586 = vector.extract_strided_slice %568 {offsets = [0, 128], sizes = [2, 64], strides = [1, 1]} : vector<2x192xf32> to vector<2x64xf32>
    %587 = arith.mulf %576, %586 : vector<2x64xf32>
    %588 = arith.addf %585, %587 : vector<2x64xf32>
    %589 = math.tanh %588 : vector<2x64xf32>
    %590 = arith.subf %544, %589 : vector<2x64xf32>
    %591 = arith.mulf %584, %590 : vector<2x64xf32>
    %592 = arith.addf %589, %591 : vector<2x64xf32>
    %593 = vector.extract_strided_slice %592 {offsets = [0, 0], sizes = [2, 32], strides = [1, 1]} : vector<2x64xf32> to vector<2x32xf32>
    %594 = arith.mulf %593, %2 : vector<2x32xf32>
    %cst_180 = arith.constant dense<0.000000e+00> : vector<2xf32>
    %595 = vector.multi_reduction <add>, %594, %cst_180 [1] : vector<2x32xf32> to vector<2xf32>
    %596 = vector.shape_cast %595 : vector<2xf32> to vector<2x1xf32>
    %597 = vector.extract_strided_slice %592 {offsets = [0, 32], sizes = [2, 32], strides = [1, 1]} : vector<2x64xf32> to vector<2x32xf32>
    %598 = arith.mulf %597, %2 : vector<2x32xf32>
    %cst_181 = arith.constant dense<0.000000e+00> : vector<2xf32>
    %599 = vector.multi_reduction <add>, %598, %cst_181 [1] : vector<2x32xf32> to vector<2xf32>
    %600 = vector.shape_cast %599 : vector<2xf32> to vector<2x1xf32>
    %c0_182 = arith.constant 0 : index
    %601 = arith.index_cast %c5_i32_174 : i32 to index
    %602 = memref.load %arg13[%c0_182, %601] : memref<1x8xf32, #tpu.memory_space<smem>>
    %603 = vector.broadcast %602 : f32 to vector<2x1xf32>
    %604 = arith.mulf %603, %596 : vector<2x1xf32>
    %605 = arith.addf %563, %604 : vector<2x1xf32>
    %c7_i32_183 = arith.constant 7 : i32
    %606 = arith.subi %c7_i32_183, %c5_i32_174 : i32
    %c0_184 = arith.constant 0 : index
    %607 = arith.index_cast %606 : i32 to index
    %608 = memref.load %arg13[%c0_184, %607] : memref<1x8xf32, #tpu.memory_space<smem>>
    %609 = vector.broadcast %608 : f32 to vector<2x1xf32>
    %610 = arith.mulf %609, %600 : vector<2x1xf32>
    %611 = arith.addf %605, %610 : vector<2x1xf32>
    %c6_i32_185 = arith.constant 6 : i32
    %c2_i32_186 = arith.constant 2 : i32
    %612 = arith.muli %c6_i32_185, %c2_i32_186 : i32
    %613 = arith.index_cast %612 : i32 to index
    %c0_187 = arith.constant 0 : index
    %614 = vector.load %arg16[%613, %c0_187] : memref<16x192xf32, #tpu.memory_space<vmem>>, vector<2x192xf32>
    %cst_188 = arith.constant dense<0.000000e+00> : vector<2x192xf32>
    %615 = tpu.matmul %592, %321, %cst_188 {dimension_numbers = #tpu.dot_dimension_numbers<[1], [0], [0], [1], [0, 0, 1, 1], [], []>} : vector<2x64xf32>, vector<64x192xf32>, vector<2x192xf32> -> vector<2x192xf32>
    %616 = arith.addf %615, %320 : vector<2x192xf32>
    %617 = vector.extract_strided_slice %614 {offsets = [0, 0], sizes = [2, 64], strides = [1, 1]} : vector<2x192xf32> to vector<2x64xf32>
    %618 = vector.extract_strided_slice %616 {offsets = [0, 0], sizes = [2, 64], strides = [1, 1]} : vector<2x192xf32> to vector<2x64xf32>
    %619 = arith.addf %617, %618 : vector<2x64xf32>
    %620 = arith.negf %619 : vector<2x64xf32>
    %621 = math.exp %620 : vector<2x64xf32>
    %cst_189 = arith.constant 1.000000e+00 : f32
    %622 = vector.broadcast %cst_189 : f32 to vector<2x64xf32>
    %623 = arith.addf %622, %621 : vector<2x64xf32>
    %624 = arith.divf %622, %623 : vector<2x64xf32>
    %625 = vector.extract_strided_slice %614 {offsets = [0, 64], sizes = [2, 64], strides = [1, 1]} : vector<2x192xf32> to vector<2x64xf32>
    %626 = vector.extract_strided_slice %616 {offsets = [0, 64], sizes = [2, 64], strides = [1, 1]} : vector<2x192xf32> to vector<2x64xf32>
    %627 = arith.addf %625, %626 : vector<2x64xf32>
    %628 = arith.negf %627 : vector<2x64xf32>
    %629 = math.exp %628 : vector<2x64xf32>
    %cst_190 = arith.constant 1.000000e+00 : f32
    %630 = vector.broadcast %cst_190 : f32 to vector<2x64xf32>
    %631 = arith.addf %630, %629 : vector<2x64xf32>
    %632 = arith.divf %630, %631 : vector<2x64xf32>
    %633 = vector.extract_strided_slice %614 {offsets = [0, 128], sizes = [2, 64], strides = [1, 1]} : vector<2x192xf32> to vector<2x64xf32>
    %634 = vector.extract_strided_slice %616 {offsets = [0, 128], sizes = [2, 64], strides = [1, 1]} : vector<2x192xf32> to vector<2x64xf32>
    %635 = arith.mulf %624, %634 : vector<2x64xf32>
    %636 = arith.addf %633, %635 : vector<2x64xf32>
    %637 = math.tanh %636 : vector<2x64xf32>
    %638 = arith.subf %592, %637 : vector<2x64xf32>
    %639 = arith.mulf %632, %638 : vector<2x64xf32>
    %640 = arith.addf %637, %639 : vector<2x64xf32>
    %641 = vector.extract_strided_slice %640 {offsets = [0, 0], sizes = [2, 32], strides = [1, 1]} : vector<2x64xf32> to vector<2x32xf32>
    %642 = arith.mulf %641, %2 : vector<2x32xf32>
    %cst_191 = arith.constant dense<0.000000e+00> : vector<2xf32>
    %643 = vector.multi_reduction <add>, %642, %cst_191 [1] : vector<2x32xf32> to vector<2xf32>
    %644 = vector.shape_cast %643 : vector<2xf32> to vector<2x1xf32>
    %645 = vector.extract_strided_slice %640 {offsets = [0, 32], sizes = [2, 32], strides = [1, 1]} : vector<2x64xf32> to vector<2x32xf32>
    %646 = arith.mulf %645, %2 : vector<2x32xf32>
    %cst_192 = arith.constant dense<0.000000e+00> : vector<2xf32>
    %647 = vector.multi_reduction <add>, %646, %cst_192 [1] : vector<2x32xf32> to vector<2xf32>
    %648 = vector.shape_cast %647 : vector<2xf32> to vector<2x1xf32>
    %c0_193 = arith.constant 0 : index
    %649 = arith.index_cast %c6_i32_185 : i32 to index
    %650 = memref.load %arg13[%c0_193, %649] : memref<1x8xf32, #tpu.memory_space<smem>>
    %651 = vector.broadcast %650 : f32 to vector<2x1xf32>
    %652 = arith.mulf %651, %644 : vector<2x1xf32>
    %653 = arith.addf %611, %652 : vector<2x1xf32>
    %c7_i32_194 = arith.constant 7 : i32
    %654 = arith.subi %c7_i32_194, %c6_i32_185 : i32
    %c0_195 = arith.constant 0 : index
    %655 = arith.index_cast %654 : i32 to index
    %656 = memref.load %arg13[%c0_195, %655] : memref<1x8xf32, #tpu.memory_space<smem>>
    %657 = vector.broadcast %656 : f32 to vector<2x1xf32>
    %658 = arith.mulf %657, %648 : vector<2x1xf32>
    %659 = arith.addf %653, %658 : vector<2x1xf32>
    %c7_i32_196 = arith.constant 7 : i32
    %c2_i32_197 = arith.constant 2 : i32
    %660 = arith.muli %c7_i32_196, %c2_i32_197 : i32
    %661 = arith.index_cast %660 : i32 to index
    %c0_198 = arith.constant 0 : index
    %662 = vector.load %arg16[%661, %c0_198] : memref<16x192xf32, #tpu.memory_space<vmem>>, vector<2x192xf32>
    %cst_199 = arith.constant dense<0.000000e+00> : vector<2x192xf32>
    %663 = tpu.matmul %640, %321, %cst_199 {dimension_numbers = #tpu.dot_dimension_numbers<[1], [0], [0], [1], [0, 0, 1, 1], [], []>} : vector<2x64xf32>, vector<64x192xf32>, vector<2x192xf32> -> vector<2x192xf32>
    %664 = arith.addf %663, %320 : vector<2x192xf32>
    %665 = vector.extract_strided_slice %662 {offsets = [0, 0], sizes = [2, 64], strides = [1, 1]} : vector<2x192xf32> to vector<2x64xf32>
    %666 = vector.extract_strided_slice %664 {offsets = [0, 0], sizes = [2, 64], strides = [1, 1]} : vector<2x192xf32> to vector<2x64xf32>
    %667 = arith.addf %665, %666 : vector<2x64xf32>
    %668 = arith.negf %667 : vector<2x64xf32>
    %669 = math.exp %668 : vector<2x64xf32>
    %cst_200 = arith.constant 1.000000e+00 : f32
    %670 = vector.broadcast %cst_200 : f32 to vector<2x64xf32>
    %671 = arith.addf %670, %669 : vector<2x64xf32>
    %672 = arith.divf %670, %671 : vector<2x64xf32>
    %673 = vector.extract_strided_slice %662 {offsets = [0, 64], sizes = [2, 64], strides = [1, 1]} : vector<2x192xf32> to vector<2x64xf32>
    %674 = vector.extract_strided_slice %664 {offsets = [0, 64], sizes = [2, 64], strides = [1, 1]} : vector<2x192xf32> to vector<2x64xf32>
    %675 = arith.addf %673, %674 : vector<2x64xf32>
    %676 = arith.negf %675 : vector<2x64xf32>
    %677 = math.exp %676 : vector<2x64xf32>
    %cst_201 = arith.constant 1.000000e+00 : f32
    %678 = vector.broadcast %cst_201 : f32 to vector<2x64xf32>
    %679 = arith.addf %678, %677 : vector<2x64xf32>
    %680 = arith.divf %678, %679 : vector<2x64xf32>
    %681 = vector.extract_strided_slice %662 {offsets = [0, 128], sizes = [2, 64], strides = [1, 1]} : vector<2x192xf32> to vector<2x64xf32>
    %682 = vector.extract_strided_slice %664 {offsets = [0, 128], sizes = [2, 64], strides = [1, 1]} : vector<2x192xf32> to vector<2x64xf32>
    %683 = arith.mulf %672, %682 : vector<2x64xf32>
    %684 = arith.addf %681, %683 : vector<2x64xf32>
    %685 = math.tanh %684 : vector<2x64xf32>
    %686 = arith.subf %640, %685 : vector<2x64xf32>
    %687 = arith.mulf %680, %686 : vector<2x64xf32>
    %688 = arith.addf %685, %687 : vector<2x64xf32>
    %689 = vector.extract_strided_slice %688 {offsets = [0, 0], sizes = [2, 32], strides = [1, 1]} : vector<2x64xf32> to vector<2x32xf32>
    %690 = arith.mulf %689, %2 : vector<2x32xf32>
    %cst_202 = arith.constant dense<0.000000e+00> : vector<2xf32>
    %691 = vector.multi_reduction <add>, %690, %cst_202 [1] : vector<2x32xf32> to vector<2xf32>
    %692 = vector.shape_cast %691 : vector<2xf32> to vector<2x1xf32>
    %693 = vector.extract_strided_slice %688 {offsets = [0, 32], sizes = [2, 32], strides = [1, 1]} : vector<2x64xf32> to vector<2x32xf32>
    %694 = arith.mulf %693, %2 : vector<2x32xf32>
    %cst_203 = arith.constant dense<0.000000e+00> : vector<2xf32>
    %695 = vector.multi_reduction <add>, %694, %cst_203 [1] : vector<2x32xf32> to vector<2xf32>
    %696 = vector.shape_cast %695 : vector<2xf32> to vector<2x1xf32>
    %c0_204 = arith.constant 0 : index
    %697 = arith.index_cast %c7_i32_196 : i32 to index
    %698 = memref.load %arg13[%c0_204, %697] : memref<1x8xf32, #tpu.memory_space<smem>>
    %699 = vector.broadcast %698 : f32 to vector<2x1xf32>
    %700 = arith.mulf %699, %692 : vector<2x1xf32>
    %701 = arith.addf %659, %700 : vector<2x1xf32>
    %c7_i32_205 = arith.constant 7 : i32
    %702 = arith.subi %c7_i32_205, %c7_i32_196 : i32
    %c0_206 = arith.constant 0 : index
    %703 = arith.index_cast %702 : i32 to index
    %704 = memref.load %arg13[%c0_206, %703] : memref<1x8xf32, #tpu.memory_space<smem>>
    %705 = vector.broadcast %704 : f32 to vector<2x1xf32>
    %706 = arith.mulf %705, %696 : vector<2x1xf32>
    %707 = arith.addf %701, %706 : vector<2x1xf32>
    %c8_i32_207 = arith.constant 8 : i32
    %c0_208 = arith.constant 0 : index
    %c0_209 = arith.constant 0 : index
    %708 = memref.load %arg14[%c0_208, %c0_209] : memref<1x1xf32, #tpu.memory_space<smem>>
    %709 = vector.broadcast %708 : f32 to vector<2x1xf32>
    %710 = arith.addf %707, %709 : vector<2x1xf32>
    %711 = arith.negf %710 : vector<2x1xf32>
    %712 = math.exp %711 : vector<2x1xf32>
    %cst_210 = arith.constant 1.000000e+00 : f32
    %713 = vector.broadcast %cst_210 : f32 to vector<2x1xf32>
    %714 = arith.addf %713, %712 : vector<2x1xf32>
    %715 = arith.divf %713, %714 : vector<2x1xf32>
    %c0_211 = arith.constant 0 : index
    %c0_212 = arith.constant 0 : index
    %716 = vector.load %arg15[%c0_211, %c0_212] : memref<2x1xf32, #tpu.memory_space<vmem>>, vector<2x1xf32>
    tpu.vector_store %arg15[%c0_211, %c0_212], %715 {strides = array<i32>} : memref<2x1xf32, #tpu.memory_space<vmem>>, vector<2x1xf32>,
    return
  }
}

</mosaic_0001>

<llo_original>
// kernel: discriminator_forward.1
$region0: #{discriminator_forward.1}
  #allocation0 [shape = 'u32[]', space=smem, size = 0x4, offset = 0x4, fixed_abs, tag = 'smem constant byte address 0x4 - core index']
  #allocation1 [shape = 'u32[72,128]{1,0:T(1,128)}', space=vmem, size = 0x9000, scoped, tag = 'internal scratch']
  #allocation2 [shape = 'f32[16,192]{1,0:T(8,128)}', space=vmem, size = 0x4000, scoped, tag = 'scratch operand']
  #allocation3 [shape = 'f32[16,64]{1,0:T(8,128)}', space=vmem, size = 0x2000, scoped, tag = 'scratch operand']
  #allocation4 [shape = 'f32[16,64]{1,0:T(8,128)}', space=vmem, size = 0x2000, scoped, tag = 'scratch operand']
  #allocation5 [shape = 'f32[1,1]{1,0:T(1,128)S(6)}', space=smem, size = 0x200, scoped, tag = 'scoped memory for discriminator_forward.1']
  %s0 = inlined_call_operand.vmem [shape: f32[16,16], index: 0, kind: input, shape index: {}]
  %s1 = inlined_call_operand.vmem [shape: f32[16,16], index: 1, kind: input, shape index: {}]
  %s2 = inlined_call_operand.vmem [shape: f32[16,192], index: 2, kind: input, shape index: {}]
  %s3 = inlined_call_operand.vmem [shape: f32[16,192], index: 3, kind: input, shape index: {}]
  %s4 = inlined_call_operand.vmem [shape: f32[1,192], index: 4, kind: input, shape index: {}]
  %s5 = inlined_call_operand.vmem [shape: f32[1,192], index: 5, kind: input, shape index: {}]
  %s6 = inlined_call_operand.vmem [shape: f32[64,192], index: 6, kind: input, shape index: {}]
  %s7 = inlined_call_operand.vmem [shape: f32[64,192], index: 7, kind: input, shape index: {}]
  %s8 = inlined_call_operand.vmem [shape: f32[64,192], index: 8, kind: input, shape index: {}]
  %s9 = inlined_call_operand.vmem [shape: f32[1,192], index: 9, kind: input, shape index: {}]
  %s10 = inlined_call_operand.vmem [shape: f32[1,192], index: 10, kind: input, shape index: {}]
  %s11 = inlined_call_operand.vmem [shape: f32[64,192], index: 11, kind: input, shape index: {}]
  %s12 = inlined_call_operand.vmem [shape: f32[1,32], index: 12, kind: input, shape index: {}]
  %s13 = inlined_call_operand.vmem [shape: f32[1,8], index: 13, kind: input, shape index: {}]
  %s14 = inlined_call_operand.<no memory space> [shape: f32[1,1], index: 14, kind: input, shape index: {}]
  %s15 = inlined_call_operand.vmem [shape: f32[2,1], index: 15, kind: output, shape index: {}]
  %s16 = sld [smem:[#allocation0]]
  $region74: #{discriminator_forward.1} parent=0
    _
  %s18 = ssub.s32 1, %s16
  %s19 = scalar_select 0, %s18, %s16
  %20 = sst [smem:[#allocation5]] %s14
  $region1: #{discriminator_forward.1} parent=0
    #allocation6 [shape = 'u8[512]{0}', space=smem, size = 0x200, scoped, tag = 'input window, operand 13, single buffered']
    #allocation7 [shape = 's32[1]{0}', space=sflag, size = 0x4, scoped, tag = 'scoped memory for discriminator_forward.1']
    %21 = vsyncpa [#allocation7], 0
    // Predicated region
    $region2: #{discriminator_forward.1} parent=1 // pred_check
      _
    $region3: #{discriminator_forward.1} parent=1 // pred_check_branch
      %23 = sbr.rel (0) target = $region5
    $region4: #{discriminator_forward.1} parent=1 // pred_region
      _
    $region5: #{discriminator_forward.1} parent=1 // pred_fallthru
      _
    // Predicated region
    $region6: #{discriminator_forward.1} parent=1 // pred_check
      _
    $region7: #{discriminator_forward.1} parent=1 // pred_check_branch
      %25 = sbr.rel (0) target = $region9
    $region8: #{discriminator_forward.1} parent=1 // pred_region
      _
    $region9: #{discriminator_forward.1} parent=1 // pred_fallthru
      _
    // Predicated region
    $region10: #{discriminator_forward.1} parent=1 // pred_check
      _
    $region11: #{discriminator_forward.1} parent=1 // pred_check_branch
      %27 = sbr.rel (0) target = $region13
    $region12: #{discriminator_forward.1} parent=1 // pred_region
      _
    $region13: #{discriminator_forward.1} parent=1 // pred_fallthru
      _
    // Predicated region
    $region14: #{discriminator_forward.1} parent=1 // pred_check
      _
    $region15: #{discriminator_forward.1} parent=1 // pred_check_branch
      %29 = sbr.rel (0) target = $region17
    $region16: #{discriminator_forward.1} parent=1 // pred_region
      _
    $region17: #{discriminator_forward.1} parent=1 // pred_fallthru
      _
    // Predicated region
    $region18: #{discriminator_forward.1} parent=1 // pred_check
      _
    $region19: #{discriminator_forward.1} parent=1 // pred_check_branch
      %31 = sbr.rel (0) target = $region21
    $region20: #{discriminator_forward.1} parent=1 // pred_region
      _
    $region21: #{discriminator_forward.1} parent=1 // pred_fallthru
      _
    // Predicated region
    $region22: #{discriminator_forward.1} parent=1 // pred_check
      _
    $region23: #{discriminator_forward.1} parent=1 // pred_check_branch
      %33 = sbr.rel (0) target = $region25
    $region24: #{discriminator_forward.1} parent=1 // pred_region
      _
    $region25: #{discriminator_forward.1} parent=1 // pred_fallthru
      _
    // Predicated region
    $region26: #{discriminator_forward.1} parent=1 // pred_check
      _
    $region27: #{discriminator_forward.1} parent=1 // pred_check_branch
      %35 = sbr.rel (0) target = $region29
    $region28: #{discriminator_forward.1} parent=1 // pred_region
      _
    $region29: #{discriminator_forward.1} parent=1 // pred_fallthru
      _
    // Predicated region
    $region30: #{discriminator_forward.1} parent=1 // pred_check
      _
    $region31: #{discriminator_forward.1} parent=1 // pred_check_branch
      %37 = sbr.rel (0) target = $region33
    $region32: #{discriminator_forward.1} parent=1 // pred_region
      _
    $region33: #{discriminator_forward.1} parent=1 // pred_fallthru
      _
    // Predicated region
    $region34: #{discriminator_forward.1} parent=1 // pred_check
      _
    $region35: #{discriminator_forward.1} parent=1 // pred_check_branch
      %39 = sbr.rel (0) target = $region37
    $region36: #{discriminator_forward.1} parent=1 // pred_region
      _
    $region37: #{discriminator_forward.1} parent=1 // pred_fallthru
      _
    // Predicated region
    $region38: #{discriminator_forward.1} parent=1 // pred_check
      _
    $region39: #{discriminator_forward.1} parent=1 // pred_check_branch
      %41 = sbr.rel (0) target = $region41
    $region40: #{discriminator_forward.1} parent=1 // pred_region
      _
    $region41: #{discriminator_forward.1} parent=1 // pred_fallthru
      _
    // Predicated region
    $region42: #{discriminator_forward.1} parent=1 // pred_check
      _
    $region43: #{discriminator_forward.1} parent=1 // pred_check_branch
      %43 = sbr.rel (0) target = $region45
    $region44: #{discriminator_forward.1} parent=1 // pred_region
      _
    $region45: #{discriminator_forward.1} parent=1 // pred_fallthru
      _
    // Predicated region
    $region46: #{discriminator_forward.1} parent=1 // pred_check
      _
    $region47: #{discriminator_forward.1} parent=1 // pred_check_branch
      %45 = sbr.rel (0) target = $region49
    $region48: #{discriminator_forward.1} parent=1 // pred_region
      _
    $region49: #{discriminator_forward.1} parent=1 // pred_fallthru
      _
    // Predicated region
    $region50: #{discriminator_forward.1} parent=1 // pred_check
      _
    $region51: #{discriminator_forward.1} parent=1 // pred_check_branch
      %47 = sbr.rel (0) target = $region53
    $region52: #{discriminator_forward.1} parent=1 // pred_region
      _
    $region53: #{discriminator_forward.1} parent=1 // pred_fallthru
      _
    // Predicated region
    $region54: #{discriminator_forward.1} parent=1 // pred_check
      _
    $region55: #{discriminator_forward.1} parent=1 // pred_check_branch
      %49 = sbr.rel (0) target = $region57
    $region56: #{discriminator_forward.1} parent=1 // pred_region
      %51 = vsyncadd [#allocation7], 0
      %s53 = sshll.u32 %s13, 4
      %s54 = int_to_ptr.vmem [resolvable:$true] %s53
      %56 = dma.vmem_to_smem %s54, 16, [#allocation6], [#allocation7]
    $region57: #{discriminator_forward.1} parent=1 // pred_fallthru
      _
    // Predicated region
    $region58: #{discriminator_forward.1} parent=1 // pred_check
      _
    $region59: #{discriminator_forward.1} parent=1 // pred_check_branch
      %58 = sbr.rel (0) target = $region61
    $region60: #{discriminator_forward.1} parent=1 // pred_region
      _
    $region61: #{discriminator_forward.1} parent=1 // pred_fallthru
      _
    // Predicated region
    $region62: #{discriminator_forward.1} parent=1 // pred_check
      _
    $region63: #{discriminator_forward.1} parent=1 // pred_check_branch
      %60 = sbr.rel (0) target = $region65
    $region64: #{discriminator_forward.1} parent=1 // pred_region
      %62 = dma.done [#allocation7], 16
    $region65: #{discriminator_forward.1} parent=1 // pred_fallthru
      _
    %63 = sfence
    %v64 = vld [vmem:[%s12] sm:$0x1]
    %v66 = vperm.slane %v64, 0
    %v68 = vld [vmem:[%s0] sm:$0xff]
    %v69 = vld [vmem:[%s0 + $0x8] sm:$0xff]
    %v70 = vld [vmem:[%s2] sm:$0xff]
    %v71 = vld [vmem:[%s2 + $0x8] sm:$0xff]
    %v72 = vld [vmem:[%s2 + $0x10] sm:$0xff]
    %v73 = vld [vmem:[%s2 + $0x18] sm:$0xff]
    %v74 = vld [vmem:[%s1] sm:$0xff]
    %v75 = vld [vmem:[%s1 + $0x8] sm:$0xff]
    %v76 = vld [vmem:[%s3] sm:$0xff]
    %v77 = vld [vmem:[%s3 + $0x8] sm:$0xff]
    %v78 = vld [vmem:[%s3 + $0x10] sm:$0xff]
    %v79 = vld [vmem:[%s3 + $0x18] sm:$0xff]
    %vm80 = vcmask 130048
    %v82 = vsel %vm80, %v74, 0
    %v85 = vsel %vm80, %v75, 0
    %87 = vmatpush.msra.mxu0 0.0
    %88 = vmatpush.msra.mxu0 0.0
    %89 = vmatpush.msra.mxu0 0.0
    %90 = vmatpush.msra.mxu0 0.0
    %91 = vmatpush.msra.mxu0 0.0
    %92 = vmatpush.msra.mxu0 0.0
    %93 = vmatpush.msra.mxu0 0.0
    %94 = vmatpush.msra.mxu0 0.0
    %95 = vmatpush.msra.mxu0 0.0
    %96 = vmatpush.msra.mxu0 0.0
    %97 = vmatpush.msra.mxu0 0.0
    %98 = vmatpush.msra.mxu0 0.0
    %99 = vmatpush.msra.mxu0 0.0
    %100 = vmatpush.msra.mxu0 0.0
    %101 = vmatpush.msra.mxu0 %v78
    %102 = vmatpush.msra.mxu0 %v76
    %103 = vmatmul.f32.gmra.mxu0 %v82
    %v104 = vpop.f32.mrf.mxu0
    %v105 = vadd.f32 0.0, %v104
    %106 = vmatmul.f32.gmra.mxu0 %v85
    %v107 = vpop.f32.mrf.mxu0
    %v108 = vadd.f32 0.0, %v107
    %109 = vdwg.mxu0
    %110 = vmatpush.msra.mxu0 0.0
    %111 = vmatpush.msra.mxu0 0.0
    %112 = vmatpush.msra.mxu0 0.0
    %113 = vmatpush.msra.mxu0 0.0
    %114 = vmatpush.msra.mxu0 0.0
    %115 = vmatpush.msra.mxu0 0.0
    %116 = vmatpush.msra.mxu0 0.0
    %117 = vmatpush.msra.mxu0 0.0
    %118 = vmatpush.msra.mxu0 0.0
    %119 = vmatpush.msra.mxu0 0.0
    %120 = vmatpush.msra.mxu0 0.0
    %121 = vmatpush.msra.mxu0 0.0
    %122 = vmatpush.msra.mxu0 0.0
    %123 = vmatpush.msra.mxu0 0.0
    %124 = vmatpush.msra.mxu0 %v79
    %125 = vmatpush.msra.mxu0 %v77
    %126 = vmatmul.f32.gmra.mxu0 %v82
    %v127 = vpop.f32.mrf.mxu0
    %v128 = vadd.f32 0.0, %v127
    %129 = vmatmul.f32.gmra.mxu0 %v85
    %v130 = vpop.f32.mrf.mxu0
    %v131 = vadd.f32 0.0, %v130
    %132 = vdwg.mxu0
    %v134 = vsel %vm80, %v68, 0
    %v137 = vsel %vm80, %v69, 0
    %139 = vmatpush.msra.mxu0 0.0
    %140 = vmatpush.msra.mxu0 0.0
    %141 = vmatpush.msra.mxu0 0.0
    %142 = vmatpush.msra.mxu0 0.0
    %143 = vmatpush.msra.mxu0 0.0
    %144 = vmatpush.msra.mxu0 0.0
    %145 = vmatpush.msra.mxu0 0.0
    %146 = vmatpush.msra.mxu0 0.0
    %147 = vmatpush.msra.mxu0 0.0
    %148 = vmatpush.msra.mxu0 0.0
    %149 = vmatpush.msra.mxu0 0.0
    %150 = vmatpush.msra.mxu0 0.0
    %151 = vmatpush.msra.mxu0 0.0
    %152 = vmatpush.msra.mxu0 0.0
    %153 = vmatpush.msra.mxu0 %v72
    %154 = vmatpush.msra.mxu0 %v70
    %155 = vmatmul.f32.gmra.mxu0 %v134
    %v156 = vpop.f32.mrf.mxu0
    %v157 = vadd.f32 %v105, %v156
    %158 = vmatmul.f32.gmra.mxu0 %v137
    %v159 = vpop.f32.mrf.mxu0
    %v160 = vadd.f32 %v108, %v159
    %161 = vdwg.mxu0
    %162 = vmatpush.msra.mxu0 0.0
    %163 = vmatpush.msra.mxu0 0.0
    %164 = vmatpush.msra.mxu0 0.0
    %165 = vmatpush.msra.mxu0 0.0
    %166 = vmatpush.msra.mxu0 0.0
    %167 = vmatpush.msra.mxu0 0.0
    %168 = vmatpush.msra.mxu0 0.0
    %169 = vmatpush.msra.mxu0 0.0
    %170 = vmatpush.msra.mxu0 0.0
    %171 = vmatpush.msra.mxu0 0.0
    %172 = vmatpush.msra.mxu0 0.0
    %173 = vmatpush.msra.mxu0 0.0
    %174 = vmatpush.msra.mxu0 0.0
    %175 = vmatpush.msra.mxu0 0.0
    %176 = vmatpush.msra.mxu0 %v73
    %177 = vmatpush.msra.mxu0 %v71
    %178 = vmatmul.f32.gmra.mxu0 %v134
    %v179 = vpop.f32.mrf.mxu0
    %v180 = vadd.f32 %v128, %v179
    %181 = vmatmul.f32.gmra.mxu0 %v137
    %v182 = vpop.f32.mrf.mxu0
    %v183 = vadd.f32 %v131, %v182
    %184 = vdwg.mxu0
    %v185 = vld [vmem:[%s4] sm:$0x3]
    %v187 = vperm.slane %v185, 0
    %v188 = vperm.slane %v185, 1
    %v191 = vadd.f32 %v157, %v187
    %v192 = vadd.f32 %v180, %v188
    %v193 = vadd.f32 %v160, %v187
    %v194 = vadd.f32 %v183, %v188
    %195 = vst [vmem:[#allocation2] sm:$0xff] %v191
    %vm196 = vcmask 523264
    %197 = vst.msk [vmem:[#allocation2 + $0x8] sm:$0xff] %vm196, %v192
    %198 = vst [vmem:[#allocation2 + $0x10] sm:$0xff] %v193
    %199 = vst.msk [vmem:[#allocation2 + $0x18] sm:$0xff] %vm196, %v194
    %v200 = vld [vmem:[%s5] sm:$0x3]
    %v202 = vperm.slane %v200, 0
    %v203 = vperm.slane %v200, 1
    %v206 = vld [vmem:[%s6] sm:$0xff]
    %v207 = vld [vmem:[%s6 + $0x8] sm:$0xff]
    %v208 = vld [vmem:[%s6 + $0x10] sm:$0xff]
    %v209 = vld [vmem:[%s6 + $0x18] sm:$0xff]
    %v210 = vld [vmem:[%s6 + $0x20] sm:$0xff]
    %v211 = vld [vmem:[%s6 + $0x28] sm:$0xff]
    %v212 = vld [vmem:[%s6 + $0x30] sm:$0xff]
    %v213 = vld [vmem:[%s6 + $0x38] sm:$0xff]
    %v214 = vld [vmem:[%s6 + $0x40] sm:$0xff]
    %v215 = vld [vmem:[%s6 + $0x48] sm:$0xff]
    %v216 = vld [vmem:[%s6 + $0x50] sm:$0xff]
    %v217 = vld [vmem:[%s6 + $0x58] sm:$0xff]
    %v218 = vld [vmem:[%s6 + $0x60] sm:$0xff]
    %v219 = vld [vmem:[%s6 + $0x68] sm:$0xff]
    %v220 = vld [vmem:[%s6 + $0x70] sm:$0xff]
    %v221 = vld [vmem:[%s6 + $0x78] sm:$0xff]
    %v222 = vld [vmem:[#allocation2] sm:$0x3]
    %v223 = vld [vmem:[#allocation2 + $0x8] sm:$0x3]
    %v225 = vsel %vm196, 0.0, 0
    %227 = vmatpush.msra.mxu0 0.0
    %228 = vmatpush.msra.mxu0 0.0
    %229 = vmatpush.msra.mxu0 0.0
    %230 = vmatpush.msra.mxu0 0.0
    %231 = vmatpush.msra.mxu0 0.0
    %232 = vmatpush.msra.mxu0 0.0
    %233 = vmatpush.msra.mxu0 0.0
    %234 = vmatpush.msra.mxu0 0.0
    %235 = vmatpush.msra.mxu0 %v220
    %236 = vmatpush.msra.mxu0 %v218
    %237 = vmatpush.msra.mxu0 %v216
    %238 = vmatpush.msra.mxu0 %v214
    %239 = vmatpush.msra.mxu0 %v212
    %240 = vmatpush.msra.mxu0 %v210
    %241 = vmatpush.msra.mxu0 %v208
    %242 = vmatpush.msra.mxu0 %v206
    %243 = vmatmul.f32.gmra.mxu0 %v225
    %v244 = vpop.f32.mrf.mxu0
    %v245 = vadd.f32 %v202, %v244
    %246 = vdwg.mxu0
    %247 = vmatpush.msra.mxu0 0.0
    %248 = vmatpush.msra.mxu0 0.0
    %249 = vmatpush.msra.mxu0 0.0
    %250 = vmatpush.msra.mxu0 0.0
    %251 = vmatpush.msra.mxu0 0.0
    %252 = vmatpush.msra.mxu0 0.0
    %253 = vmatpush.msra.mxu0 0.0
    %254 = vmatpush.msra.mxu0 0.0
    %255 = vmatpush.msra.mxu0 %v221
    %256 = vmatpush.msra.mxu0 %v219
    %257 = vmatpush.msra.mxu0 %v217
    %258 = vmatpush.msra.mxu0 %v215
    %259 = vmatpush.msra.mxu0 %v213
    %260 = vmatpush.msra.mxu0 %v211
    %261 = vmatpush.msra.mxu0 %v209
    %262 = vmatpush.msra.mxu0 %v207
    %263 = vmatmul.f32.gmra.mxu0 %v225
    %v264 = vpop.f32.mrf.mxu0
    %v265 = vadd.f32 %v203, %v264
    %266 = vdwg.mxu0
    %v267 = vadd.f32 %v222, %v245
    %v268 = vxor.u32 %v267, 2147483648
    %v269 = vmul.f32 %v268, 1.442695
    %v270 = vpow.pop %v269
    %v271 = vadd.f32 %v270, 1.0
    %v272 = vrcp.pop %v271
    %v273 = vmul.f32 %v271, %v272
    %v274 = vsub.f32 1.0, %v273
    %v275 = vmul.f32 %v272, %v274
    %v276 = vadd.f32 %v272, %v275
    %vm277 = vweird.f32 %v271
    %vm278 = vweird.f32 %v272
    %vm279 = vmor %vm277, %vm278
    %v280 = vsel %vm279, %v272, %v276
    %v281 = vand.u32 2147483647, %v271
    %vm282 = vcmp.eq.f32.partialorder %v281, 8.507059e+37
    %v283 = vand.u32 %v271, 2147483648
    %v284 = vor.u32 1.1754944e-38, %v283
    %v285 = vsel %vm282, %v284, %v280
    %v286 = vmul.f32 1.0, %v285
    %v287 = vmul.f32 %v286, %v265
    %v288 = vadd.f32 %v223, %v287
    %v289 = vtanh.pop %v288
    %v290 = vsub.f32 0.0, %v289
    %292 = vrot.lane.b32.xlu0 %v290, 64
    %v293 = vpop.permute.xlu0 %292
    %v295 = vmul.f32 %v286, %v293
    %297 = vrot.lane.b32.xlu0 %v295, 64
    %v298 = vpop.permute.xlu0 %297
    %v300 = vadd.f32 %v289, %v298
    %vm301 = vcmask 517120
    %302 = vst.msk [vmem:[#allocation3] sm:$0x3] %vm301, %v300
    %303 = vst.msk [vmem:[#allocation4 + $0xe] sm:$0x3] %vm301, %v300
    %v304 = vld [vmem:[#allocation2] sm:$0xc]
    %v305 = vld [vmem:[#allocation2 + $0x8] sm:$0xc]
    %v307 = vsel %vm196, %v300, 0
    %309 = vmatpush.msra.mxu0 0.0
    %310 = vmatpush.msra.mxu0 0.0
    %311 = vmatpush.msra.mxu0 0.0
    %312 = vmatpush.msra.mxu0 0.0
    %313 = vmatpush.msra.mxu0 0.0
    %314 = vmatpush.msra.mxu0 0.0
    %315 = vmatpush.msra.mxu0 0.0
    %316 = vmatpush.msra.mxu0 0.0
    %317 = vmatpush.msra.mxu0 %v220
    %318 = vmatpush.msra.mxu0 %v218
    %319 = vmatpush.msra.mxu0 %v216
    %320 = vmatpush.msra.mxu0 %v214
    %321 = vmatpush.msra.mxu0 %v212
    %322 = vmatpush.msra.mxu0 %v210
    %323 = vmatpush.msra.mxu0 %v208
    %324 = vmatpush.msra.mxu0 %v206
    %325 = vmatmul.f32.gmra.mxu0 %v307
    %v326 = vpop.f32.mrf.mxu0
    %v327 = vadd.f32 %v202, %v326
    %328 = vdwg.mxu0
    %329 = vmatpush.msra.mxu0 0.0
    %330 = vmatpush.msra.mxu0 0.0
    %331 = vmatpush.msra.mxu0 0.0
    %332 = vmatpush.msra.mxu0 0.0
    %333 = vmatpush.msra.mxu0 0.0
    %334 = vmatpush.msra.mxu0 0.0
    %335 = vmatpush.msra.mxu0 0.0
    %336 = vmatpush.msra.mxu0 0.0
    %337 = vmatpush.msra.mxu0 %v221
    %338 = vmatpush.msra.mxu0 %v219
    %339 = vmatpush.msra.mxu0 %v217
    %340 = vmatpush.msra.mxu0 %v215
    %341 = vmatpush.msra.mxu0 %v213
    %342 = vmatpush.msra.mxu0 %v211
    %343 = vmatpush.msra.mxu0 %v209
    %344 = vmatpush.msra.mxu0 %v207
    %345 = vmatmul.f32.gmra.mxu0 %v307
    %v346 = vpop.f32.mrf.mxu0
    %v347 = vadd.f32 %v203, %v346
    %348 = vdwg.mxu0
    %v350 = vrot.slane %v327, 6
    %v352 = vadd.f32 %v304, %v350
    %v353 = vxor.u32 %v352, 2147483648
    %v354 = vmul.f32 %v353, 1.442695
    %v355 = vpow.pop %v354
    %v356 = vadd.f32 %v355, 1.0
    %v357 = vrcp.pop %v356
    %v358 = vmul.f32 %v356, %v357
    %v359 = vsub.f32 1.0, %v358
    %v360 = vmul.f32 %v357, %v359
    %v361 = vadd.f32 %v357, %v360
    %vm362 = vweird.f32 %v356
    %vm363 = vweird.f32 %v357
    %vm364 = vmor %vm362, %vm363
    %v365 = vsel %vm364, %v357, %v361
    %v366 = vand.u32 2147483647, %v356
    %vm367 = vcmp.eq.f32.partialorder %v366, 8.507059e+37
    %v368 = vand.u32 %v356, 2147483648
    %v369 = vor.u32 1.1754944e-38, %v368
    %v370 = vsel %vm367, %v369, %v365
    %v371 = vmul.f32 1.0, %v370
    %v373 = vrot.slane %v347, 6
    %v375 = vmul.f32 %v371, %v373
    %v376 = vadd.f32 %v305, %v375
    %v377 = vtanh.pop %v376
    %v379 = vrot.slane %v377, 2
    %v381 = vsub.f32 %v300, %v379
    %v383 = vrot.slane %v381, 6
    %384 = vrot.lane.b32.xlu0 %v383, 64
    %v385 = vpop.permute.xlu0 %384
    %v387 = vmul.f32 %v371, %v385
    %389 = vrot.lane.b32.xlu0 %v387, 64
    %v390 = vpop.permute.xlu0 %389
    %v392 = vadd.f32 %v377, %v390
    %vm393 = vcmask 519170
    %394 = vst.msk [vmem:[#allocation3] sm:$0xc] %vm393, %v392
    %395 = vst.msk [vmem:[#allocation4 + $0xa] sm:$0xc] %vm393, %v392
    %v396 = vld [vmem:[#allocation2] sm:$0x30]
    %v397 = vld [vmem:[#allocation2 + $0x8] sm:$0x30]
    %v399 = vrot.slane %v392, 2
    %v400 = vsel %vm196, %v399, 0
    %402 = vmatpush.msra.mxu0 0.0
    %403 = vmatpush.msra.mxu0 0.0
    %404 = vmatpush.msra.mxu0 0.0
    %405 = vmatpush.msra.mxu0 0.0
    %406 = vmatpush.msra.mxu0 0.0
    %407 = vmatpush.msra.mxu0 0.0
    %408 = vmatpush.msra.mxu0 0.0
    %409 = vmatpush.msra.mxu0 0.0
    %410 = vmatpush.msra.mxu0 %v220
    %411 = vmatpush.msra.mxu0 %v218
    %412 = vmatpush.msra.mxu0 %v216
    %413 = vmatpush.msra.mxu0 %v214
    %414 = vmatpush.msra.mxu0 %v212
    %415 = vmatpush.msra.mxu0 %v210
    %416 = vmatpush.msra.mxu0 %v208
    %417 = vmatpush.msra.mxu0 %v206
    %418 = vmatmul.f32.gmra.mxu0 %v400
    %v419 = vpop.f32.mrf.mxu0
    %v420 = vadd.f32 %v202, %v419
    %421 = vdwg.mxu0
    %422 = vmatpush.msra.mxu0 0.0
    %423 = vmatpush.msra.mxu0 0.0
    %424 = vmatpush.msra.mxu0 0.0
    %425 = vmatpush.msra.mxu0 0.0
    %426 = vmatpush.msra.mxu0 0.0
    %427 = vmatpush.msra.mxu0 0.0
    %428 = vmatpush.msra.mxu0 0.0
    %429 = vmatpush.msra.mxu0 0.0
    %430 = vmatpush.msra.mxu0 %v221
    %431 = vmatpush.msra.mxu0 %v219
    %432 = vmatpush.msra.mxu0 %v217
    %433 = vmatpush.msra.mxu0 %v215
    %434 = vmatpush.msra.mxu0 %v213
    %435 = vmatpush.msra.mxu0 %v211
    %436 = vmatpush.msra.mxu0 %v209
    %437 = vmatpush.msra.mxu0 %v207
    %438 = vmatmul.f32.gmra.mxu0 %v400
    %v439 = vpop.f32.mrf.mxu0
    %v440 = vadd.f32 %v203, %v439
    %441 = vdwg.mxu0
    %v443 = vrot.slane %v420, 4
    %v445 = vadd.f32 %v396, %v443
    %v446 = vxor.u32 %v445, 2147483648
    %v447 = vmul.f32 %v446, 1.442695
    %v448 = vpow.pop %v447
    %v449 = vadd.f32 %v448, 1.0
    %v450 = vrcp.pop %v449
    %v451 = vmul.f32 %v449, %v450
    %v452 = vsub.f32 1.0, %v451
    %v453 = vmul.f32 %v450, %v452
    %v454 = vadd.f32 %v450, %v453
    %vm455 = vweird.f32 %v449
    %vm456 = vweird.f32 %v450
    %vm457 = vmor %vm455, %vm456
    %v458 = vsel %vm457, %v450, %v454
    %v459 = vand.u32 2147483647, %v449
    %vm460 = vcmp.eq.f32.partialorder %v459, 8.507059e+37
    %v461 = vand.u32 %v449, 2147483648
    %v462 = vor.u32 1.1754944e-38, %v461
    %v463 = vsel %vm460, %v462, %v458
    %v464 = vmul.f32 1.0, %v463
    %v466 = vrot.slane %v440, 4
    %v468 = vmul.f32 %v464, %v466
    %v469 = vadd.f32 %v397, %v468
    %v470 = vtanh.pop %v469
    %v472 = vrot.slane %v470, 2
    %v474 = vsub.f32 %v392, %v472
    %v476 = vrot.slane %v474, 6
    %477 = vrot.lane.b32.xlu0 %v476, 64
    %v478 = vpop.permute.xlu0 %477
    %v480 = vmul.f32 %v464, %v478
    %482 = vrot.lane.b32.xlu0 %v480, 64
    %v483 = vpop.permute.xlu0 %482
    %v485 = vadd.f32 %v470, %v483
    %vm486 = vcmask 521220
    %487 = vst.msk [vmem:[#allocation3] sm:$0x30] %vm486, %v485
    %488 = vst.msk [vmem:[#allocation4 + $0x6] sm:$0x30] %vm486, %v485
    %v489 = vld [vmem:[#allocation2] sm:$0xc0]
    %v490 = vld [vmem:[#allocation2 + $0x8] sm:$0xc0]
    %v492 = vrot.slane %v485, 4
    %v493 = vsel %vm196, %v492, 0
    %495 = vmatpush.msra.mxu0 0.0
    %496 = vmatpush.msra.mxu0 0.0
    %497 = vmatpush.msra.mxu0 0.0
    %498 = vmatpush.msra.mxu0 0.0
    %499 = vmatpush.msra.mxu0 0.0
    %500 = vmatpush.msra.mxu0 0.0
    %501 = vmatpush.msra.mxu0 0.0
    %502 = vmatpush.msra.mxu0 0.0
    %503 = vmatpush.msra.mxu0 %v220
    %504 = vmatpush.msra.mxu0 %v218
    %505 = vmatpush.msra.mxu0 %v216
    %506 = vmatpush.msra.mxu0 %v214
    %507 = vmatpush.msra.mxu0 %v212
    %508 = vmatpush.msra.mxu0 %v210
    %509 = vmatpush.msra.mxu0 %v208
    %510 = vmatpush.msra.mxu0 %v206
    %511 = vmatmul.f32.gmra.mxu0 %v493
    %v512 = vpop.f32.mrf.mxu0
    %v513 = vadd.f32 %v202, %v512
    %514 = vdwg.mxu0
    %515 = vmatpush.msra.mxu0 0.0
    %516 = vmatpush.msra.mxu0 0.0
    %517 = vmatpush.msra.mxu0 0.0
    %518 = vmatpush.msra.mxu0 0.0
    %519 = vmatpush.msra.mxu0 0.0
    %520 = vmatpush.msra.mxu0 0.0
    %521 = vmatpush.msra.mxu0 0.0
    %522 = vmatpush.msra.mxu0 0.0
    %523 = vmatpush.msra.mxu0 %v221
    %524 = vmatpush.msra.mxu0 %v219
    %525 = vmatpush.msra.mxu0 %v217
    %526 = vmatpush.msra.mxu0 %v215
    %527 = vmatpush.msra.mxu0 %v213
    %528 = vmatpush.msra.mxu0 %v211
    %529 = vmatpush.msra.mxu0 %v209
    %530 = vmatpush.msra.mxu0 %v207
    %531 = vmatmul.f32.gmra.mxu0 %v493
    %v532 = vpop.f32.mrf.mxu0
    %v533 = vadd.f32 %v203, %v532
    %534 = vdwg.mxu0
    %v536 = vrot.slane %v513, 2
    %v538 = vadd.f32 %v489, %v536
    %v539 = vxor.u32 %v538, 2147483648
    %v540 = vmul.f32 %v539, 1.442695
    %v541 = vpow.pop %v540
    %v542 = vadd.f32 %v541, 1.0
    %v543 = vrcp.pop %v542
    %v544 = vmul.f32 %v542, %v543
    %v545 = vsub.f32 1.0, %v544
    %v546 = vmul.f32 %v543, %v545
    %v547 = vadd.f32 %v543, %v546
    %vm548 = vweird.f32 %v542
    %vm549 = vweird.f32 %v543
    %vm550 = vmor %vm548, %vm549
    %v551 = vsel %vm550, %v543, %v547
    %v552 = vand.u32 2147483647, %v542
    %vm553 = vcmp.eq.f32.partialorder %v552, 8.507059e+37
    %v554 = vand.u32 %v542, 2147483648
    %v555 = vor.u32 1.1754944e-38, %v554
    %v556 = vsel %vm553, %v555, %v551
    %v557 = vmul.f32 1.0, %v556
    %v559 = vrot.slane %v533, 2
    %v561 = vmul.f32 %v557, %v559
    %v562 = vadd.f32 %v490, %v561
    %v563 = vtanh.pop %v562
    %v565 = vrot.slane %v563, 2
    %v567 = vsub.f32 %v485, %v565
    %v569 = vrot.slane %v567, 6
    %570 = vrot.lane.b32.xlu0 %v569, 64
    %v571 = vpop.permute.xlu0 %570
    %v573 = vmul.f32 %v557, %v571
    %575 = vrot.lane.b32.xlu0 %v573, 64
    %v576 = vpop.permute.xlu0 %575
    %v578 = vadd.f32 %v563, %v576
    %vm579 = vcmask 523270
    %580 = vst.msk [vmem:[#allocation3] sm:$0xc0] %vm579, %v578
    %581 = vst.msk [vmem:[#allocation4 + $0x2] sm:$0xc0] %vm579, %v578
    %v582 = vld [vmem:[#allocation2 + $0x10] sm:$0x3]
    %v583 = vld [vmem:[#allocation2 + $0x18] sm:$0x3]
    %v585 = vrot.slane %v578, 6
    %v586 = vsel %vm196, %v585, 0
    %588 = vmatpush.msra.mxu0 0.0
    %589 = vmatpush.msra.mxu0 0.0
    %590 = vmatpush.msra.mxu0 0.0
    %591 = vmatpush.msra.mxu0 0.0
    %592 = vmatpush.msra.mxu0 0.0
    %593 = vmatpush.msra.mxu0 0.0
    %594 = vmatpush.msra.mxu0 0.0
    %595 = vmatpush.msra.mxu0 0.0
    %596 = vmatpush.msra.mxu0 %v220
    %597 = vmatpush.msra.mxu0 %v218
    %598 = vmatpush.msra.mxu0 %v216
    %599 = vmatpush.msra.mxu0 %v214
    %600 = vmatpush.msra.mxu0 %v212
    %601 = vmatpush.msra.mxu0 %v210
    %602 = vmatpush.msra.mxu0 %v208
    %603 = vmatpush.msra.mxu0 %v206
    %604 = vmatmul.f32.gmra.mxu0 %v586
    %v605 = vpop.f32.mrf.mxu0
    %v606 = vadd.f32 %v202, %v605
    %607 = vdwg.mxu0
    %608 = vmatpush.msra.mxu0 0.0
    %609 = vmatpush.msra.mxu0 0.0
    %610 = vmatpush.msra.mxu0 0.0
    %611 = vmatpush.msra.mxu0 0.0
    %612 = vmatpush.msra.mxu0 0.0
    %613 = vmatpush.msra.mxu0 0.0
    %614 = vmatpush.msra.mxu0 0.0
    %615 = vmatpush.msra.mxu0 0.0
    %616 = vmatpush.msra.mxu0 %v221
    %617 = vmatpush.msra.mxu0 %v219
    %618 = vmatpush.msra.mxu0 %v217
    %619 = vmatpush.msra.mxu0 %v215
    %620 = vmatpush.msra.mxu0 %v213
    %621 = vmatpush.msra.mxu0 %v211
    %622 = vmatpush.msra.mxu0 %v209
    %623 = vmatpush.msra.mxu0 %v207
    %624 = vmatmul.f32.gmra.mxu0 %v586
    %v625 = vpop.f32.mrf.mxu0
    %v626 = vadd.f32 %v203, %v625
    %627 = vdwg.mxu0
    %v628 = vadd.f32 %v582, %v606
    %v629 = vxor.u32 %v628, 2147483648
    %v630 = vmul.f32 %v629, 1.442695
    %v631 = vpow.pop %v630
    %v632 = vadd.f32 %v631, 1.0
    %v633 = vrcp.pop %v632
    %v634 = vmul.f32 %v632, %v633
    %v635 = vsub.f32 1.0, %v634
    %v636 = vmul.f32 %v633, %v635
    %v637 = vadd.f32 %v633, %v636
    %vm638 = vweird.f32 %v632
    %vm639 = vweird.f32 %v633
    %vm640 = vmor %vm638, %vm639
    %v641 = vsel %vm640, %v633, %v637
    %v642 = vand.u32 2147483647, %v632
    %vm643 = vcmp.eq.f32.partialorder %v642, 8.507059e+37
    %v644 = vand.u32 %v632, 2147483648
    %v645 = vor.u32 1.1754944e-38, %v644
    %v646 = vsel %vm643, %v645, %v641
    %v647 = vmul.f32 1.0, %v646
    %v648 = vmul.f32 %v647, %v626
    %v649 = vadd.f32 %v583, %v648
    %v650 = vtanh.pop %v649
    %v652 = vrot.slane %v650, 2
    %v654 = vsub.f32 %v578, %v652
    %v656 = vrot.slane %v654, 6
    %657 = vrot.lane.b32.xlu0 %v656, 64
    %v658 = vpop.permute.xlu0 %657
    %v660 = vmul.f32 %v647, %v658
    %662 = vrot.lane.b32.xlu0 %v660, 64
    %v663 = vpop.permute.xlu0 %662
    %v665 = vadd.f32 %v650, %v663
    %666 = vst.msk [vmem:[#allocation3 + $0x8] sm:$0x3] %vm301, %v665
    %667 = vst.msk [vmem:[#allocation4 + $0x6] sm:$0x3] %vm301, %v665
    %v668 = vld [vmem:[#allocation2 + $0x10] sm:$0xc]
    %v669 = vld [vmem:[#allocation2 + $0x18] sm:$0xc]
    %v671 = vsel %vm196, %v665, 0
    %673 = vmatpush.msra.mxu0 0.0
    %674 = vmatpush.msra.mxu0 0.0
    %675 = vmatpush.msra.mxu0 0.0
    %676 = vmatpush.msra.mxu0 0.0
    %677 = vmatpush.msra.mxu0 0.0
    %678 = vmatpush.msra.mxu0 0.0
    %679 = vmatpush.msra.mxu0 0.0
    %680 = vmatpush.msra.mxu0 0.0
    %681 = vmatpush.msra.mxu0 %v220
    %682 = vmatpush.msra.mxu0 %v218
    %683 = vmatpush.msra.mxu0 %v216
    %684 = vmatpush.msra.mxu0 %v214
    %685 = vmatpush.msra.mxu0 %v212
    %686 = vmatpush.msra.mxu0 %v210
    %687 = vmatpush.msra.mxu0 %v208
    %688 = vmatpush.msra.mxu0 %v206
    %689 = vmatmul.f32.gmra.mxu0 %v671
    %v690 = vpop.f32.mrf.mxu0
    %v691 = vadd.f32 %v202, %v690
    %692 = vdwg.mxu0
    %693 = vmatpush.msra.mxu0 0.0
    %694 = vmatpush.msra.mxu0 0.0
    %695 = vmatpush.msra.mxu0 0.0
    %696 = vmatpush.msra.mxu0 0.0
    %697 = vmatpush.msra.mxu0 0.0
    %698 = vmatpush.msra.mxu0 0.0
    %699 = vmatpush.msra.mxu0 0.0
    %700 = vmatpush.msra.mxu0 0.0
    %701 = vmatpush.msra.mxu0 %v221
    %702 = vmatpush.msra.mxu0 %v219
    %703 = vmatpush.msra.mxu0 %v217
    %704 = vmatpush.msra.mxu0 %v215
    %705 = vmatpush.msra.mxu0 %v213
    %706 = vmatpush.msra.mxu0 %v211
    %707 = vmatpush.msra.mxu0 %v209
    %708 = vmatpush.msra.mxu0 %v207
    %709 = vmatmul.f32.gmra.mxu0 %v671
    %v710 = vpop.f32.mrf.mxu0
    %v711 = vadd.f32 %v203, %v710
    %712 = vdwg.mxu0
    %v714 = vrot.slane %v691, 6
    %v716 = vadd.f32 %v668, %v714
    %v717 = vxor.u32 %v716, 2147483648
    %v718 = vmul.f32 %v717, 1.442695
    %v719 = vpow.pop %v718
    %v720 = vadd.f32 %v719, 1.0
    %v721 = vrcp.pop %v720
    %v722 = vmul.f32 %v720, %v721
    %v723 = vsub.f32 1.0, %v722
    %v724 = vmul.f32 %v721, %v723
    %v725 = vadd.f32 %v721, %v724
    %vm726 = vweird.f32 %v720
    %vm727 = vweird.f32 %v721
    %vm728 = vmor %vm726, %vm727
    %v729 = vsel %vm728, %v721, %v725
    %v730 = vand.u32 2147483647, %v720
    %vm731 = vcmp.eq.f32.partialorder %v730, 8.507059e+37
    %v732 = vand.u32 %v720, 2147483648
    %v733 = vor.u32 1.1754944e-38, %v732
    %v734 = vsel %vm731, %v733, %v729
    %v735 = vmul.f32 1.0, %v734
    %v737 = vrot.slane %v711, 6
    %v739 = vmul.f32 %v735, %v737
    %v740 = vadd.f32 %v669, %v739
    %v741 = vtanh.pop %v740
    %v743 = vrot.slane %v741, 2
    %v745 = vsub.f32 %v665, %v743
    %v747 = vrot.slane %v745, 6
    %748 = vrot.lane.b32.xlu0 %v747, 64
    %v749 = vpop.permute.xlu0 %748
    %v751 = vmul.f32 %v735, %v749
    %753 = vrot.lane.b32.xlu0 %v751, 64
    %v754 = vpop.permute.xlu0 %753
    %v756 = vadd.f32 %v741, %v754
    %757 = vst.msk [vmem:[#allocation3 + $0x8] sm:$0xc] %vm393, %v756
    %758 = vst.msk [vmem:[#allocation4 + $0x2] sm:$0xc] %vm393, %v756
    %v759 = vld [vmem:[#allocation2 + $0x10] sm:$0x30]
    %v760 = vld [vmem:[#allocation2 + $0x18] sm:$0x30]
    %v762 = vrot.slane %v756, 2
    %v763 = vsel %vm196, %v762, 0
    %765 = vmatpush.msra.mxu0 0.0
    %766 = vmatpush.msra.mxu0 0.0
    %767 = vmatpush.msra.mxu0 0.0
    %768 = vmatpush.msra.mxu0 0.0
    %769 = vmatpush.msra.mxu0 0.0
    %770 = vmatpush.msra.mxu0 0.0
    %771 = vmatpush.msra.mxu0 0.0
    %772 = vmatpush.msra.mxu0 0.0
    %773 = vmatpush.msra.mxu0 %v220
    %774 = vmatpush.msra.mxu0 %v218
    %775 = vmatpush.msra.mxu0 %v216
    %776 = vmatpush.msra.mxu0 %v214
    %777 = vmatpush.msra.mxu0 %v212
    %778 = vmatpush.msra.mxu0 %v210
    %779 = vmatpush.msra.mxu0 %v208
    %780 = vmatpush.msra.mxu0 %v206
    %781 = vmatmul.f32.gmra.mxu0 %v763
    %v782 = vpop.f32.mrf.mxu0
    %v783 = vadd.f32 %v202, %v782
    %784 = vdwg.mxu0
    %785 = vmatpush.msra.mxu0 0.0
    %786 = vmatpush.msra.mxu0 0.0
    %787 = vmatpush.msra.mxu0 0.0
    %788 = vmatpush.msra.mxu0 0.0
    %789 = vmatpush.msra.mxu0 0.0
    %790 = vmatpush.msra.mxu0 0.0
    %791 = vmatpush.msra.mxu0 0.0
    %792 = vmatpush.msra.mxu0 0.0
    %793 = vmatpush.msra.mxu0 %v221
    %794 = vmatpush.msra.mxu0 %v219
    %795 = vmatpush.msra.mxu0 %v217
    %796 = vmatpush.msra.mxu0 %v215
    %797 = vmatpush.msra.mxu0 %v213
    %798 = vmatpush.msra.mxu0 %v211
    %799 = vmatpush.msra.mxu0 %v209
    %800 = vmatpush.msra.mxu0 %v207
    %801 = vmatmul.f32.gmra.mxu0 %v763
    %v802 = vpop.f32.mrf.mxu0
    %v803 = vadd.f32 %v203, %v802
    %804 = vdwg.mxu0
    %v806 = vrot.slane %v783, 4
    %v808 = vadd.f32 %v759, %v806
    %v809 = vxor.u32 %v808, 2147483648
    %v810 = vmul.f32 %v809, 1.442695
    %v811 = vpow.pop %v810
    %v812 = vadd.f32 %v811, 1.0
    %v813 = vrcp.pop %v812
    %v814 = vmul.f32 %v812, %v813
    %v815 = vsub.f32 1.0, %v814
    %v816 = vmul.f32 %v813, %v815
    %v817 = vadd.f32 %v813, %v816
    %vm818 = vweird.f32 %v812
    %vm819 = vweird.f32 %v813
    %vm820 = vmor %vm818, %vm819
    %v821 = vsel %vm820, %v813, %v817
    %v822 = vand.u32 2147483647, %v812
    %vm823 = vcmp.eq.f32.partialorder %v822, 8.507059e+37
    %v824 = vand.u32 %v812, 2147483648
    %v825 = vor.u32 1.1754944e-38, %v824
    %v826 = vsel %vm823, %v825, %v821
    %v827 = vmul.f32 1.0, %v826
    %v829 = vrot.slane %v803, 4
    %v831 = vmul.f32 %v827, %v829
    %v832 = vadd.f32 %v760, %v831
    %v833 = vtanh.pop %v832
    %v835 = vrot.slane %v833, 2
    %v837 = vsub.f32 %v756, %v835
    %v839 = vrot.slane %v837, 6
    %840 = vrot.lane.b32.xlu0 %v839, 64
    %v841 = vpop.permute.xlu0 %840
    %v843 = vmul.f32 %v827, %v841
    %845 = vrot.lane.b32.xlu0 %v843, 64
    %v846 = vpop.permute.xlu0 %845
    %v848 = vadd.f32 %v833, %v846
    %849 = vst.msk [vmem:[#allocation3 + $0x8] sm:$0x30] %vm486, %v848
    %850 = vst.msk [vmem:[#allocation4 - $0x2] sm:$0x30] %vm486, %v848
    %v851 = vld [vmem:[#allocation2 + $0x10] sm:$0xc0]
    %v852 = vld [vmem:[#allocation2 + $0x18] sm:$0xc0]
    %v854 = vrot.slane %v848, 4
    %v855 = vsel %vm196, %v854, 0
    %857 = vmatpush.msra.mxu0 0.0
    %858 = vmatpush.msra.mxu0 0.0
    %859 = vmatpush.msra.mxu0 0.0
    %860 = vmatpush.msra.mxu0 0.0
    %861 = vmatpush.msra.mxu0 0.0
    %862 = vmatpush.msra.mxu0 0.0
    %863 = vmatpush.msra.mxu0 0.0
    %864 = vmatpush.msra.mxu0 0.0
    %865 = vmatpush.msra.mxu0 %v220
    %866 = vmatpush.msra.mxu0 %v218
    %867 = vmatpush.msra.mxu0 %v216
    %868 = vmatpush.msra.mxu0 %v214
    %869 = vmatpush.msra.mxu0 %v212
    %870 = vmatpush.msra.mxu0 %v210
    %871 = vmatpush.msra.mxu0 %v208
    %872 = vmatpush.msra.mxu0 %v206
    %873 = vmatmul.f32.gmra.mxu0 %v855
    %v874 = vpop.f32.mrf.mxu0
    %v875 = vadd.f32 %v202, %v874
    %876 = vdwg.mxu0
    %877 = vmatpush.msra.mxu0 0.0
    %878 = vmatpush.msra.mxu0 0.0
    %879 = vmatpush.msra.mxu0 0.0
    %880 = vmatpush.msra.mxu0 0.0
    %881 = vmatpush.msra.mxu0 0.0
    %882 = vmatpush.msra.mxu0 0.0
    %883 = vmatpush.msra.mxu0 0.0
    %884 = vmatpush.msra.mxu0 0.0
    %885 = vmatpush.msra.mxu0 %v221
    %886 = vmatpush.msra.mxu0 %v219
    %887 = vmatpush.msra.mxu0 %v217
    %888 = vmatpush.msra.mxu0 %v215
    %889 = vmatpush.msra.mxu0 %v213
    %890 = vmatpush.msra.mxu0 %v211
    %891 = vmatpush.msra.mxu0 %v209
    %892 = vmatpush.msra.mxu0 %v207
    %893 = vmatmul.f32.gmra.mxu0 %v855
    %v894 = vpop.f32.mrf.mxu0
    %v895 = vadd.f32 %v203, %v894
    %896 = vdwg.mxu0
    %v898 = vrot.slane %v875, 2
    %v900 = vadd.f32 %v851, %v898
    %v901 = vxor.u32 %v900, 2147483648
    %v902 = vmul.f32 %v901, 1.442695
    %v903 = vpow.pop %v902
    %v904 = vadd.f32 %v903, 1.0
    %v905 = vrcp.pop %v904
    %v906 = vmul.f32 %v904, %v905
    %v907 = vsub.f32 1.0, %v906
    %v908 = vmul.f32 %v905, %v907
    %v909 = vadd.f32 %v905, %v908
    %vm910 = vweird.f32 %v904
    %vm911 = vweird.f32 %v905
    %vm912 = vmor %vm910, %vm911
    %v913 = vsel %vm912, %v905, %v909
    %v914 = vand.u32 2147483647, %v904
    %vm915 = vcmp.eq.f32.partialorder %v914, 8.507059e+37
    %v916 = vand.u32 %v904, 2147483648
    %v917 = vor.u32 1.1754944e-38, %v916
    %v918 = vsel %vm915, %v917, %v913
    %v919 = vmul.f32 1.0, %v918
    %v921 = vrot.slane %v895, 2
    %v923 = vmul.f32 %v919, %v921
    %v924 = vadd.f32 %v852, %v923
    %v925 = vtanh.pop %v924
    %v927 = vrot.slane %v925, 2
    %v929 = vsub.f32 %v848, %v927
    %v931 = vrot.slane %v929, 6
    %932 = vrot.lane.b32.xlu0 %v931, 64
    %v933 = vpop.permute.xlu0 %932
    %v935 = vmul.f32 %v919, %v933
    %937 = vrot.lane.b32.xlu0 %v935, 64
    %v938 = vpop.permute.xlu0 %937
    %v940 = vadd.f32 %v925, %v938
    %941 = vst.msk [vmem:[#allocation3 + $0x8] sm:$0xc0] %vm579, %v940
    %942 = vst.msk [vmem:[#allocation4 - $0x6] sm:$0xc0] %vm579, %v940
    %v943 = vld [vmem:[#allocation3] sm:$0xff]
    %v944 = vld [vmem:[#allocation3 + $0x8] sm:$0xff]
    %v945 = vld [vmem:[%s7] sm:$0xff]
    %v946 = vld [vmem:[%s7 + $0x8] sm:$0xff]
    %v947 = vld [vmem:[%s7 + $0x10] sm:$0xff]
    %v948 = vld [vmem:[%s7 + $0x18] sm:$0xff]
    %v949 = vld [vmem:[%s7 + $0x20] sm:$0xff]
    %v950 = vld [vmem:[%s7 + $0x28] sm:$0xff]
    %v951 = vld [vmem:[%s7 + $0x30] sm:$0xff]
    %v952 = vld [vmem:[%s7 + $0x38] sm:$0xff]
    %v953 = vld [vmem:[%s7 + $0x40] sm:$0xff]
    %v954 = vld [vmem:[%s7 + $0x48] sm:$0xff]
    %v955 = vld [vmem:[%s7 + $0x50] sm:$0xff]
    %v956 = vld [vmem:[%s7 + $0x58] sm:$0xff]
    %v957 = vld [vmem:[%s7 + $0x60] sm:$0xff]
    %v958 = vld [vmem:[%s7 + $0x68] sm:$0xff]
    %v959 = vld [vmem:[%s7 + $0x70] sm:$0xff]
    %v960 = vld [vmem:[%s7 + $0x78] sm:$0xff]
    %v961 = vld [vmem:[#allocation4] sm:$0xff]
    %v962 = vld [vmem:[#allocation4 + $0x8] sm:$0xff]
    %v963 = vld [vmem:[%s8] sm:$0xff]
    %v964 = vld [vmem:[%s8 + $0x8] sm:$0xff]
    %v965 = vld [vmem:[%s8 + $0x10] sm:$0xff]
    %v966 = vld [vmem:[%s8 + $0x18] sm:$0xff]
    %v967 = vld [vmem:[%s8 + $0x20] sm:$0xff]
    %v968 = vld [vmem:[%s8 + $0x28] sm:$0xff]
    %v969 = vld [vmem:[%s8 + $0x30] sm:$0xff]
    %v970 = vld [vmem:[%s8 + $0x38] sm:$0xff]
    %v971 = vld [vmem:[%s8 + $0x40] sm:$0xff]
    %v972 = vld [vmem:[%s8 + $0x48] sm:$0xff]
    %v973 = vld [vmem:[%s8 + $0x50] sm:$0xff]
    %v974 = vld [vmem:[%s8 + $0x58] sm:$0xff]
    %v975 = vld [vmem:[%s8 + $0x60] sm:$0xff]
    %v976 = vld [vmem:[%s8 + $0x68] sm:$0xff]
    %v977 = vld [vmem:[%s8 + $0x70] sm:$0xff]
    %v978 = vld [vmem:[%s8 + $0x78] sm:$0xff]
    %v980 = vsel %vm196, %v961, 0
    %v983 = vsel %vm196, %v962, 0
    %985 = vmatpush.msra.mxu0 0.0
    %986 = vmatpush.msra.mxu0 0.0
    %987 = vmatpush.msra.mxu0 0.0
    %988 = vmatpush.msra.mxu0 0.0
    %989 = vmatpush.msra.mxu0 0.0
    %990 = vmatpush.msra.mxu0 0.0
    %991 = vmatpush.msra.mxu0 0.0
    %992 = vmatpush.msra.mxu0 0.0
    %993 = vmatpush.msra.mxu0 %v977
    %994 = vmatpush.msra.mxu0 %v975
    %995 = vmatpush.msra.mxu0 %v973
    %996 = vmatpush.msra.mxu0 %v971
    %997 = vmatpush.msra.mxu0 %v969
    %998 = vmatpush.msra.mxu0 %v967
    %999 = vmatpush.msra.mxu0 %v965
    %1000 = vmatpush.msra.mxu0 %v963
    %1001 = vmatmul.f32.gmra.mxu0 %v980
    %v1002 = vpop.f32.mrf.mxu0
    %v1003 = vadd.f32 0.0, %v1002
    %1004 = vmatmul.f32.gmra.mxu0 %v983
    %v1005 = vpop.f32.mrf.mxu0
    %v1006 = vadd.f32 0.0, %v1005
    %1007 = vdwg.mxu0
    %1008 = vmatpush.msra.mxu0 0.0
    %1009 = vmatpush.msra.mxu0 0.0
    %1010 = vmatpush.msra.mxu0 0.0
    %1011 = vmatpush.msra.mxu0 0.0
    %1012 = vmatpush.msra.mxu0 0.0
    %1013 = vmatpush.msra.mxu0 0.0
    %1014 = vmatpush.msra.mxu0 0.0
    %1015 = vmatpush.msra.mxu0 0.0
    %1016 = vmatpush.msra.mxu0 %v978
    %1017 = vmatpush.msra.mxu0 %v976
    %1018 = vmatpush.msra.mxu0 %v974
    %1019 = vmatpush.msra.mxu0 %v972
    %1020 = vmatpush.msra.mxu0 %v970
    %1021 = vmatpush.msra.mxu0 %v968
    %1022 = vmatpush.msra.mxu0 %v966
    %1023 = vmatpush.msra.mxu0 %v964
    %1024 = vmatmul.f32.gmra.mxu0 %v980
    %v1025 = vpop.f32.mrf.mxu0
    %v1026 = vadd.f32 0.0, %v1025
    %1027 = vmatmul.f32.gmra.mxu0 %v983
    %v1028 = vpop.f32.mrf.mxu0
    %v1029 = vadd.f32 0.0, %v1028
    %1030 = vdwg.mxu0
    %v1032 = vsel %vm196, %v943, 0
    %v1035 = vsel %vm196, %v944, 0
    %1037 = vmatpush.msra.mxu0 0.0
    %1038 = vmatpush.msra.mxu0 0.0
    %1039 = vmatpush.msra.mxu0 0.0
    %1040 = vmatpush.msra.mxu0 0.0
    %1041 = vmatpush.msra.mxu0 0.0
    %1042 = vmatpush.msra.mxu0 0.0
    %1043 = vmatpush.msra.mxu0 0.0
    %1044 = vmatpush.msra.mxu0 0.0
    %1045 = vmatpush.msra.mxu0 %v959
    %1046 = vmatpush.msra.mxu0 %v957
    %1047 = vmatpush.msra.mxu0 %v955
    %1048 = vmatpush.msra.mxu0 %v953
    %1049 = vmatpush.msra.mxu0 %v951
    %1050 = vmatpush.msra.mxu0 %v949
    %1051 = vmatpush.msra.mxu0 %v947
    %1052 = vmatpush.msra.mxu0 %v945
    %1053 = vmatmul.f32.gmra.mxu0 %v1032
    %v1054 = vpop.f32.mrf.mxu0
    %v1055 = vadd.f32 %v1003, %v1054
    %1056 = vmatmul.f32.gmra.mxu0 %v1035
    %v1057 = vpop.f32.mrf.mxu0
    %v1058 = vadd.f32 %v1006, %v1057
    %1059 = vdwg.mxu0
    %1060 = vmatpush.msra.mxu0 0.0
    %1061 = vmatpush.msra.mxu0 0.0
    %1062 = vmatpush.msra.mxu0 0.0
    %1063 = vmatpush.msra.mxu0 0.0
    %1064 = vmatpush.msra.mxu0 0.0
    %1065 = vmatpush.msra.mxu0 0.0
    %1066 = vmatpush.msra.mxu0 0.0
    %1067 = vmatpush.msra.mxu0 0.0
    %1068 = vmatpush.msra.mxu0 %v960
    %1069 = vmatpush.msra.mxu0 %v958
    %1070 = vmatpush.msra.mxu0 %v956
    %1071 = vmatpush.msra.mxu0 %v954
    %1072 = vmatpush.msra.mxu0 %v952
    %1073 = vmatpush.msra.mxu0 %v950
    %1074 = vmatpush.msra.mxu0 %v948
    %1075 = vmatpush.msra.mxu0 %v946
    %1076 = vmatmul.f32.gmra.mxu0 %v1032
    %v1077 = vpop.f32.mrf.mxu0
    %v1078 = vadd.f32 %v1026, %v1077
    %1079 = vmatmul.f32.gmra.mxu0 %v1035
    %v1080 = vpop.f32.mrf.mxu0
    %v1081 = vadd.f32 %v1029, %v1080
    %1082 = vdwg.mxu0
    %v1083 = vld [vmem:[%s9] sm:$0x3]
    %v1085 = vperm.slane %v1083, 0
    %v1086 = vperm.slane %v1083, 1
    %v1089 = vadd.f32 %v1055, %v1085
    %v1090 = vadd.f32 %v1078, %v1086
    %v1091 = vadd.f32 %v1058, %v1085
    %v1092 = vadd.f32 %v1081, %v1086
    %1093 = vst [vmem:[#allocation2] sm:$0xff] %v1089
    %1094 = vst.msk [vmem:[#allocation2 + $0x8] sm:$0xff] %vm196, %v1090
    %1095 = vst [vmem:[#allocation2 + $0x10] sm:$0xff] %v1091
    %1096 = vst.msk [vmem:[#allocation2 + $0x18] sm:$0xff] %vm196, %v1092
    %v1097 = vld [vmem:[%s10] sm:$0x3]
    %v1099 = vperm.slane %v1097, 0
    %v1100 = vperm.slane %v1097, 1
    %v1103 = vld [vmem:[%s11] sm:$0xff]
    %v1104 = vld [vmem:[%s11 + $0x8] sm:$0xff]
    %v1105 = vld [vmem:[%s11 + $0x10] sm:$0xff]
    %v1106 = vld [vmem:[%s11 + $0x18] sm:$0xff]
    %v1107 = vld [vmem:[%s11 + $0x20] sm:$0xff]
    %v1108 = vld [vmem:[%s11 + $0x28] sm:$0xff]
    %v1109 = vld [vmem:[%s11 + $0x30] sm:$0xff]
    %v1110 = vld [vmem:[%s11 + $0x38] sm:$0xff]
    %v1111 = vld [vmem:[%s11 + $0x40] sm:$0xff]
    %v1112 = vld [vmem:[%s11 + $0x48] sm:$0xff]
    %v1113 = vld [vmem:[%s11 + $0x50] sm:$0xff]
    %v1114 = vld [vmem:[%s11 + $0x58] sm:$0xff]
    %v1115 = vld [vmem:[%s11 + $0x60] sm:$0xff]
    %v1116 = vld [vmem:[%s11 + $0x68] sm:$0xff]
    %v1117 = vld [vmem:[%s11 + $0x70] sm:$0xff]
    %v1118 = vld [vmem:[%s11 + $0x78] sm:$0xff]
    %v1119 = vld [vmem:[#allocation2] sm:$0x3]
    %v1120 = vld [vmem:[#allocation2 + $0x8] sm:$0x3]
    %1121 = vmatpush.msra.mxu0 0.0
    %1122 = vmatpush.msra.mxu0 0.0
    %1123 = vmatpush.msra.mxu0 0.0
    %1124 = vmatpush.msra.mxu0 0.0
    %1125 = vmatpush.msra.mxu0 0.0
    %1126 = vmatpush.msra.mxu0 0.0
    %1127 = vmatpush.msra.mxu0 0.0
    %1128 = vmatpush.msra.mxu0 0.0
    %1129 = vmatpush.msra.mxu0 %v1117
    %1130 = vmatpush.msra.mxu0 %v1115
    %1131 = vmatpush.msra.mxu0 %v1113
    %1132 = vmatpush.msra.mxu0 %v1111
    %1133 = vmatpush.msra.mxu0 %v1109
    %1134 = vmatpush.msra.mxu0 %v1107
    %1135 = vmatpush.msra.mxu0 %v1105
    %1136 = vmatpush.msra.mxu0 %v1103
    %1137 = vmatmul.f32.gmra.mxu0 %v225
    %v1138 = vpop.f32.mrf.mxu0
    %v1139 = vadd.f32 %v1099, %v1138
    %1140 = vdwg.mxu0
    %1141 = vmatpush.msra.mxu0 0.0
    %1142 = vmatpush.msra.mxu0 0.0
    %1143 = vmatpush.msra.mxu0 0.0
    %1144 = vmatpush.msra.mxu0 0.0
    %1145 = vmatpush.msra.mxu0 0.0
    %1146 = vmatpush.msra.mxu0 0.0
    %1147 = vmatpush.msra.mxu0 0.0
    %1148 = vmatpush.msra.mxu0 0.0
    %1149 = vmatpush.msra.mxu0 %v1118
    %1150 = vmatpush.msra.mxu0 %v1116
    %1151 = vmatpush.msra.mxu0 %v1114
    %1152 = vmatpush.msra.mxu0 %v1112
    %1153 = vmatpush.msra.mxu0 %v1110
    %1154 = vmatpush.msra.mxu0 %v1108
    %1155 = vmatpush.msra.mxu0 %v1106
    %1156 = vmatpush.msra.mxu0 %v1104
    %1157 = vmatmul.f32.gmra.mxu0 %v225
    %v1158 = vpop.f32.mrf.mxu0
    %v1159 = vadd.f32 %v1100, %v1158
    %1160 = vdwg.mxu0
    %v1161 = vadd.f32 %v1119, %v1139
    %v1162 = vxor.u32 %v1161, 2147483648
    %v1163 = vmul.f32 %v1162, 1.442695
    %v1164 = vpow.pop %v1163
    %v1165 = vadd.f32 %v1164, 1.0
    %v1166 = vrcp.pop %v1165
    %v1167 = vmul.f32 %v1165, %v1166
    %v1168 = vsub.f32 1.0, %v1167
    %v1169 = vmul.f32 %v1166, %v1168
    %v1170 = vadd.f32 %v1166, %v1169
    %vm1171 = vweird.f32 %v1165
    %vm1172 = vweird.f32 %v1166
    %vm1173 = vmor %vm1171, %vm1172
    %v1174 = vsel %vm1173, %v1166, %v1170
    %v1175 = vand.u32 2147483647, %v1165
    %vm1176 = vcmp.eq.f32.partialorder %v1175, 8.507059e+37
    %v1177 = vand.u32 %v1165, 2147483648
    %v1178 = vor.u32 1.1754944e-38, %v1177
    %v1179 = vsel %vm1176, %v1178, %v1174
    %v1180 = vmul.f32 1.0, %v1179
    %v1181 = vmul.f32 %v1180, %v1159
    %v1182 = vadd.f32 %v1120, %v1181
    %v1183 = vtanh.pop %v1182
    %v1184 = vsub.f32 0.0, %v1183
    %1186 = vrot.lane.b32.xlu0 %v1184, 64
    %v1187 = vpop.permute.xlu0 %1186
    %v1189 = vmul.f32 %v1180, %v1187
    %1191 = vrot.lane.b32.xlu0 %v1189, 64
    %v1192 = vpop.permute.xlu0 %1191
    %v1194 = vadd.f32 %v1183, %v1192
    %v1195 = vmul.f32 %v1194, %v66
    %vm1196 = vcmask 254976
    %v1197 = vsel %vm1196, %v1195, 0.0
    %1198 = vadd.xlane.f32.xlu0 %v1197
    %v1199 = vpop.xlane.xlu0 %1198
    %1200 = vrot.lane.b32.xlu0 %v66, 32
    %v1201 = vpop.permute.xlu0 %1200
    %v1203 = vmul.f32 %v1194, %v1201
    %1205 = vrot.lane.b32.xlu0 %v1203, 96
    %v1206 = vpop.permute.xlu0 %1205
    %v1208 = vsel %vm1196, %v1206, 0.0
    %1209 = vadd.xlane.f32.xlu0 %v1208
    %v1210 = vpop.xlane.xlu0 %1209
    %s1211 = sld [smem:[#allocation6]]
    %v1212 = vstv %s1211
    %v1213 = vmul.f32 %v1212, %v1199
    %v1214 = vadd.f32 %v1213, 0.0
    %s1215 = sld [smem:[#allocation6 + $0x7]]
    %v1216 = vstv %s1215
    %v1217 = vmul.f32 %v1216, %v1210
    %v1218 = vadd.f32 %v1214, %v1217
    %v1219 = vld [vmem:[#allocation2] sm:$0xc]
    %v1220 = vld [vmem:[#allocation2 + $0x8] sm:$0xc]
    %v1222 = vsel %vm196, %v1194, 0
    %1224 = vmatpush.msra.mxu0 0.0
    %1225 = vmatpush.msra.mxu0 0.0
    %1226 = vmatpush.msra.mxu0 0.0
    %1227 = vmatpush.msra.mxu0 0.0
    %1228 = vmatpush.msra.mxu0 0.0
    %1229 = vmatpush.msra.mxu0 0.0
    %1230 = vmatpush.msra.mxu0 0.0
    %1231 = vmatpush.msra.mxu0 0.0
    %1232 = vmatpush.msra.mxu0 %v1117
    %1233 = vmatpush.msra.mxu0 %v1115
    %1234 = vmatpush.msra.mxu0 %v1113
    %1235 = vmatpush.msra.mxu0 %v1111
    %1236 = vmatpush.msra.mxu0 %v1109
    %1237 = vmatpush.msra.mxu0 %v1107
    %1238 = vmatpush.msra.mxu0 %v1105
    %1239 = vmatpush.msra.mxu0 %v1103
    %1240 = vmatmul.f32.gmra.mxu0 %v1222
    %v1241 = vpop.f32.mrf.mxu0
    %v1242 = vadd.f32 %v1099, %v1241
    %1243 = vdwg.mxu0
    %1244 = vmatpush.msra.mxu0 0.0
    %1245 = vmatpush.msra.mxu0 0.0
    %1246 = vmatpush.msra.mxu0 0.0
    %1247 = vmatpush.msra.mxu0 0.0
    %1248 = vmatpush.msra.mxu0 0.0
    %1249 = vmatpush.msra.mxu0 0.0
    %1250 = vmatpush.msra.mxu0 0.0
    %1251 = vmatpush.msra.mxu0 0.0
    %1252 = vmatpush.msra.mxu0 %v1118
    %1253 = vmatpush.msra.mxu0 %v1116
    %1254 = vmatpush.msra.mxu0 %v1114
    %1255 = vmatpush.msra.mxu0 %v1112
    %1256 = vmatpush.msra.mxu0 %v1110
    %1257 = vmatpush.msra.mxu0 %v1108
    %1258 = vmatpush.msra.mxu0 %v1106
    %1259 = vmatpush.msra.mxu0 %v1104
    %1260 = vmatmul.f32.gmra.mxu0 %v1222
    %v1261 = vpop.f32.mrf.mxu0
    %v1262 = vadd.f32 %v1100, %v1261
    %1263 = vdwg.mxu0
    %v1265 = vrot.slane %v1242, 6
    %v1267 = vadd.f32 %v1219, %v1265
    %v1268 = vxor.u32 %v1267, 2147483648
    %v1269 = vmul.f32 %v1268, 1.442695
    %v1270 = vpow.pop %v1269
    %v1271 = vadd.f32 %v1270, 1.0
    %v1272 = vrcp.pop %v1271
    %v1273 = vmul.f32 %v1271, %v1272
    %v1274 = vsub.f32 1.0, %v1273
    %v1275 = vmul.f32 %v1272, %v1274
    %v1276 = vadd.f32 %v1272, %v1275
    %vm1277 = vweird.f32 %v1271
    %vm1278 = vweird.f32 %v1272
    %vm1279 = vmor %vm1277, %vm1278
    %v1280 = vsel %vm1279, %v1272, %v1276
    %v1281 = vand.u32 2147483647, %v1271
    %vm1282 = vcmp.eq.f32.partialorder %v1281, 8.507059e+37
    %v1283 = vand.u32 %v1271, 2147483648
    %v1284 = vor.u32 1.1754944e-38, %v1283
    %v1285 = vsel %vm1282, %v1284, %v1280
    %v1286 = vmul.f32 1.0, %v1285
    %v1288 = vrot.slane %v1262, 6
    %v1290 = vmul.f32 %v1286, %v1288
    %v1291 = vadd.f32 %v1220, %v1290
    %v1292 = vtanh.pop %v1291
    %v1294 = vrot.slane %v1292, 2
    %v1296 = vsub.f32 %v1194, %v1294
    %v1298 = vrot.slane %v1296, 6
    %1299 = vrot.lane.b32.xlu0 %v1298, 64
    %v1300 = vpop.permute.xlu0 %1299
    %v1302 = vmul.f32 %v1286, %v1300
    %1304 = vrot.lane.b32.xlu0 %v1302, 64
    %v1305 = vpop.permute.xlu0 %1304
    %v1307 = vadd.f32 %v1292, %v1305
    %v1308 = vmul.f32 %v1307, %v66
    %vm1309 = vcmask 257026
    %v1310 = vsel %vm1309, %v1308, 0.0
    %1311 = vadd.xlane.f32.xlu0 %v1310
    %v1312 = vpop.xlane.xlu0 %1311
    %v1313 = vmul.f32 %v1307, %v1201
    %1315 = vrot.lane.b32.xlu0 %v1313, 96
    %v1316 = vpop.permute.xlu0 %1315
    %v1318 = vsel %vm1309, %v1316, 0.0
    %1319 = vadd.xlane.f32.xlu0 %v1318
    %v1320 = vpop.xlane.xlu0 %1319
    %s1321 = sld [smem:[#allocation6 + $0x1]]
    %v1322 = vstv %s1321
    %v1323 = vmul.f32 %v1322, %v1312
    %v1325 = vrot.slane %v1323, 2
    %v1327 = vadd.f32 %v1218, %v1325
    %s1328 = sld [smem:[#allocation6 + $0x6]]
    %v1329 = vstv %s1328
    %v1330 = vmul.f32 %v1329, %v1320
    %v1332 = vrot.slane %v1330, 2
    %v1334 = vadd.f32 %v1327, %v1332
    %v1335 = vld [vmem:[#allocation2] sm:$0x30]
    %v1336 = vld [vmem:[#allocation2 + $0x8] sm:$0x30]
    %v1338 = vrot.slane %v1307, 2
    %v1339 = vsel %vm196, %v1338, 0
    %1341 = vmatpush.msra.mxu0 0.0
    %1342 = vmatpush.msra.mxu0 0.0
    %1343 = vmatpush.msra.mxu0 0.0
    %1344 = vmatpush.msra.mxu0 0.0
    %1345 = vmatpush.msra.mxu0 0.0
    %1346 = vmatpush.msra.mxu0 0.0
    %1347 = vmatpush.msra.mxu0 0.0
    %1348 = vmatpush.msra.mxu0 0.0
    %1349 = vmatpush.msra.mxu0 %v1117
    %1350 = vmatpush.msra.mxu0 %v1115
    %1351 = vmatpush.msra.mxu0 %v1113
    %1352 = vmatpush.msra.mxu0 %v1111
    %1353 = vmatpush.msra.mxu0 %v1109
    %1354 = vmatpush.msra.mxu0 %v1107
    %1355 = vmatpush.msra.mxu0 %v1105
    %1356 = vmatpush.msra.mxu0 %v1103
    %1357 = vmatmul.f32.gmra.mxu0 %v1339
    %v1358 = vpop.f32.mrf.mxu0
    %v1359 = vadd.f32 %v1099, %v1358
    %1360 = vdwg.mxu0
    %1361 = vmatpush.msra.mxu0 0.0
    %1362 = vmatpush.msra.mxu0 0.0
    %1363 = vmatpush.msra.mxu0 0.0
    %1364 = vmatpush.msra.mxu0 0.0
    %1365 = vmatpush.msra.mxu0 0.0
    %1366 = vmatpush.msra.mxu0 0.0
    %1367 = vmatpush.msra.mxu0 0.0
    %1368 = vmatpush.msra.mxu0 0.0
    %1369 = vmatpush.msra.mxu0 %v1118
    %1370 = vmatpush.msra.mxu0 %v1116
    %1371 = vmatpush.msra.mxu0 %v1114
    %1372 = vmatpush.msra.mxu0 %v1112
    %1373 = vmatpush.msra.mxu0 %v1110
    %1374 = vmatpush.msra.mxu0 %v1108
    %1375 = vmatpush.msra.mxu0 %v1106
    %1376 = vmatpush.msra.mxu0 %v1104
    %1377 = vmatmul.f32.gmra.mxu0 %v1339
    %v1378 = vpop.f32.mrf.mxu0
    %v1379 = vadd.f32 %v1100, %v1378
    %1380 = vdwg.mxu0
    %v1382 = vrot.slane %v1359, 4
    %v1384 = vadd.f32 %v1335, %v1382
    %v1385 = vxor.u32 %v1384, 2147483648
    %v1386 = vmul.f32 %v1385, 1.442695
    %v1387 = vpow.pop %v1386
    %v1388 = vadd.f32 %v1387, 1.0
    %v1389 = vrcp.pop %v1388
    %v1390 = vmul.f32 %v1388, %v1389
    %v1391 = vsub.f32 1.0, %v1390
    %v1392 = vmul.f32 %v1389, %v1391
    %v1393 = vadd.f32 %v1389, %v1392
    %vm1394 = vweird.f32 %v1388
    %vm1395 = vweird.f32 %v1389
    %vm1396 = vmor %vm1394, %vm1395
    %v1397 = vsel %vm1396, %v1389, %v1393
    %v1398 = vand.u32 2147483647, %v1388
    %vm1399 = vcmp.eq.f32.partialorder %v1398, 8.507059e+37
    %v1400 = vand.u32 %v1388, 2147483648
    %v1401 = vor.u32 1.1754944e-38, %v1400
    %v1402 = vsel %vm1399, %v1401, %v1397
    %v1403 = vmul.f32 1.0, %v1402
    %v1405 = vrot.slane %v1379, 4
    %v1407 = vmul.f32 %v1403, %v1405
    %v1408 = vadd.f32 %v1336, %v1407
    %v1409 = vtanh.pop %v1408
    %v1411 = vrot.slane %v1409, 2
    %v1413 = vsub.f32 %v1307, %v1411
    %v1415 = vrot.slane %v1413, 6
    %1416 = vrot.lane.b32.xlu0 %v1415, 64
    %v1417 = vpop.permute.xlu0 %1416
    %v1419 = vmul.f32 %v1403, %v1417
    %1421 = vrot.lane.b32.xlu0 %v1419, 64
    %v1422 = vpop.permute.xlu0 %1421
    %v1424 = vadd.f32 %v1409, %v1422
    %v1425 = vmul.f32 %v1424, %v66
    %vm1426 = vcmask 259076
    %v1427 = vsel %vm1426, %v1425, 0.0
    %1428 = vadd.xlane.f32.xlu0 %v1427
    %v1429 = vpop.xlane.xlu0 %1428
    %v1430 = vmul.f32 %v1424, %v1201
    %1432 = vrot.lane.b32.xlu0 %v1430, 96
    %v1433 = vpop.permute.xlu0 %1432
    %v1435 = vsel %vm1426, %v1433, 0.0
    %1436 = vadd.xlane.f32.xlu0 %v1435
    %v1437 = vpop.xlane.xlu0 %1436
    %s1438 = sld [smem:[#allocation6 + $0x2]]
    %v1439 = vstv %s1438
    %v1440 = vmul.f32 %v1439, %v1429
    %v1442 = vrot.slane %v1440, 4
    %v1444 = vadd.f32 %v1334, %v1442
    %s1445 = sld [smem:[#allocation6 + $0x5]]
    %v1446 = vstv %s1445
    %v1447 = vmul.f32 %v1446, %v1437
    %v1449 = vrot.slane %v1447, 4
    %v1451 = vadd.f32 %v1444, %v1449
    %v1452 = vld [vmem:[#allocation2] sm:$0xc0]
    %v1453 = vld [vmem:[#allocation2 + $0x8] sm:$0xc0]
    %v1455 = vrot.slane %v1424, 4
    %v1456 = vsel %vm196, %v1455, 0
    %1458 = vmatpush.msra.mxu0 0.0
    %1459 = vmatpush.msra.mxu0 0.0
    %1460 = vmatpush.msra.mxu0 0.0
    %1461 = vmatpush.msra.mxu0 0.0
    %1462 = vmatpush.msra.mxu0 0.0
    %1463 = vmatpush.msra.mxu0 0.0
    %1464 = vmatpush.msra.mxu0 0.0
    %1465 = vmatpush.msra.mxu0 0.0
    %1466 = vmatpush.msra.mxu0 %v1117
    %1467 = vmatpush.msra.mxu0 %v1115
    %1468 = vmatpush.msra.mxu0 %v1113
    %1469 = vmatpush.msra.mxu0 %v1111
    %1470 = vmatpush.msra.mxu0 %v1109
    %1471 = vmatpush.msra.mxu0 %v1107
    %1472 = vmatpush.msra.mxu0 %v1105
    %1473 = vmatpush.msra.mxu0 %v1103
    %1474 = vmatmul.f32.gmra.mxu0 %v1456
    %v1475 = vpop.f32.mrf.mxu0
    %v1476 = vadd.f32 %v1099, %v1475
    %1477 = vdwg.mxu0
    %1478 = vmatpush.msra.mxu0 0.0
    %1479 = vmatpush.msra.mxu0 0.0
    %1480 = vmatpush.msra.mxu0 0.0
    %1481 = vmatpush.msra.mxu0 0.0
    %1482 = vmatpush.msra.mxu0 0.0
    %1483 = vmatpush.msra.mxu0 0.0
    %1484 = vmatpush.msra.mxu0 0.0
    %1485 = vmatpush.msra.mxu0 0.0
    %1486 = vmatpush.msra.mxu0 %v1118
    %1487 = vmatpush.msra.mxu0 %v1116
    %1488 = vmatpush.msra.mxu0 %v1114
    %1489 = vmatpush.msra.mxu0 %v1112
    %1490 = vmatpush.msra.mxu0 %v1110
    %1491 = vmatpush.msra.mxu0 %v1108
    %1492 = vmatpush.msra.mxu0 %v1106
    %1493 = vmatpush.msra.mxu0 %v1104
    %1494 = vmatmul.f32.gmra.mxu0 %v1456
    %v1495 = vpop.f32.mrf.mxu0
    %v1496 = vadd.f32 %v1100, %v1495
    %1497 = vdwg.mxu0
    %v1499 = vrot.slane %v1476, 2
    %v1501 = vadd.f32 %v1452, %v1499
    %v1502 = vxor.u32 %v1501, 2147483648
    %v1503 = vmul.f32 %v1502, 1.442695
    %v1504 = vpow.pop %v1503
    %v1505 = vadd.f32 %v1504, 1.0
    %v1506 = vrcp.pop %v1505
    %v1507 = vmul.f32 %v1505, %v1506
    %v1508 = vsub.f32 1.0, %v1507
    %v1509 = vmul.f32 %v1506, %v1508
    %v1510 = vadd.f32 %v1506, %v1509
    %vm1511 = vweird.f32 %v1505
    %vm1512 = vweird.f32 %v1506
    %vm1513 = vmor %vm1511, %vm1512
    %v1514 = vsel %vm1513, %v1506, %v1510
    %v1515 = vand.u32 2147483647, %v1505
    %vm1516 = vcmp.eq.f32.partialorder %v1515, 8.507059e+37
    %v1517 = vand.u32 %v1505, 2147483648
    %v1518 = vor.u32 1.1754944e-38, %v1517
    %v1519 = vsel %vm1516, %v1518, %v1514
    %v1520 = vmul.f32 1.0, %v1519
    %v1522 = vrot.slane %v1496, 2
    %v1524 = vmul.f32 %v1520, %v1522
    %v1525 = vadd.f32 %v1453, %v1524
    %v1526 = vtanh.pop %v1525
    %v1528 = vrot.slane %v1526, 2
    %v1530 = vsub.f32 %v1424, %v1528
    %v1532 = vrot.slane %v1530, 6
    %1533 = vrot.lane.b32.xlu0 %v1532, 64
    %v1534 = vpop.permute.xlu0 %1533
    %v1536 = vmul.f32 %v1520, %v1534
    %1538 = vrot.lane.b32.xlu0 %v1536, 64
    %v1539 = vpop.permute.xlu0 %1538
    %v1541 = vadd.f32 %v1526, %v1539
    %v1542 = vmul.f32 %v1541, %v66
    %vm1543 = vcmask 261126
    %v1544 = vsel %vm1543, %v1542, 0.0
    %1545 = vadd.xlane.f32.xlu0 %v1544
    %v1546 = vpop.xlane.xlu0 %1545
    %v1547 = vmul.f32 %v1541, %v1201
    %1549 = vrot.lane.b32.xlu0 %v1547, 96
    %v1550 = vpop.permute.xlu0 %1549
    %v1552 = vsel %vm1543, %v1550, 0.0
    %1553 = vadd.xlane.f32.xlu0 %v1552
    %v1554 = vpop.xlane.xlu0 %1553
    %s1555 = sld [smem:[#allocation6 + $0x3]]
    %v1556 = vstv %s1555
    %v1557 = vmul.f32 %v1556, %v1546
    %v1559 = vrot.slane %v1557, 6
    %v1561 = vadd.f32 %v1451, %v1559
    %s1562 = sld [smem:[#allocation6 + $0x4]]
    %v1563 = vstv %s1562
    %v1564 = vmul.f32 %v1563, %v1554
    %v1566 = vrot.slane %v1564, 6
    %v1568 = vadd.f32 %v1561, %v1566
    %v1569 = vld [vmem:[#allocation2 + $0x10] sm:$0x3]
    %v1570 = vld [vmem:[#allocation2 + $0x18] sm:$0x3]
    %v1572 = vrot.slane %v1541, 6
    %v1573 = vsel %vm196, %v1572, 0
    %1575 = vmatpush.msra.mxu0 0.0
    %1576 = vmatpush.msra.mxu0 0.0
    %1577 = vmatpush.msra.mxu0 0.0
    %1578 = vmatpush.msra.mxu0 0.0
    %1579 = vmatpush.msra.mxu0 0.0
    %1580 = vmatpush.msra.mxu0 0.0
    %1581 = vmatpush.msra.mxu0 0.0
    %1582 = vmatpush.msra.mxu0 0.0
    %1583 = vmatpush.msra.mxu0 %v1117
    %1584 = vmatpush.msra.mxu0 %v1115
    %1585 = vmatpush.msra.mxu0 %v1113
    %1586 = vmatpush.msra.mxu0 %v1111
    %1587 = vmatpush.msra.mxu0 %v1109
    %1588 = vmatpush.msra.mxu0 %v1107
    %1589 = vmatpush.msra.mxu0 %v1105
    %1590 = vmatpush.msra.mxu0 %v1103
    %1591 = vmatmul.f32.gmra.mxu0 %v1573
    %v1592 = vpop.f32.mrf.mxu0
    %v1593 = vadd.f32 %v1099, %v1592
    %1594 = vdwg.mxu0
    %1595 = vmatpush.msra.mxu0 0.0
    %1596 = vmatpush.msra.mxu0 0.0
    %1597 = vmatpush.msra.mxu0 0.0
    %1598 = vmatpush.msra.mxu0 0.0
    %1599 = vmatpush.msra.mxu0 0.0
    %1600 = vmatpush.msra.mxu0 0.0
    %1601 = vmatpush.msra.mxu0 0.0
    %1602 = vmatpush.msra.mxu0 0.0
    %1603 = vmatpush.msra.mxu0 %v1118
    %1604 = vmatpush.msra.mxu0 %v1116
    %1605 = vmatpush.msra.mxu0 %v1114
    %1606 = vmatpush.msra.mxu0 %v1112
    %1607 = vmatpush.msra.mxu0 %v1110
    %1608 = vmatpush.msra.mxu0 %v1108
    %1609 = vmatpush.msra.mxu0 %v1106
    %1610 = vmatpush.msra.mxu0 %v1104
    %1611 = vmatmul.f32.gmra.mxu0 %v1573
    %v1612 = vpop.f32.mrf.mxu0
    %v1613 = vadd.f32 %v1100, %v1612
    %1614 = vdwg.mxu0
    %v1615 = vadd.f32 %v1569, %v1593
    %v1616 = vxor.u32 %v1615, 2147483648
    %v1617 = vmul.f32 %v1616, 1.442695
    %v1618 = vpow.pop %v1617
    %v1619 = vadd.f32 %v1618, 1.0
    %v1620 = vrcp.pop %v1619
    %v1621 = vmul.f32 %v1619, %v1620
    %v1622 = vsub.f32 1.0, %v1621
    %v1623 = vmul.f32 %v1620, %v1622
    %v1624 = vadd.f32 %v1620, %v1623
    %vm1625 = vweird.f32 %v1619
    %vm1626 = vweird.f32 %v1620
    %vm1627 = vmor %vm1625, %vm1626
    %v1628 = vsel %vm1627, %v1620, %v1624
    %v1629 = vand.u32 2147483647, %v1619
    %vm1630 = vcmp.eq.f32.partialorder %v1629, 8.507059e+37
    %v1631 = vand.u32 %v1619, 2147483648
    %v1632 = vor.u32 1.1754944e-38, %v1631
    %v1633 = vsel %vm1630, %v1632, %v1628
    %v1634 = vmul.f32 1.0, %v1633
    %v1635 = vmul.f32 %v1634, %v1613
    %v1636 = vadd.f32 %v1570, %v1635
    %v1637 = vtanh.pop %v1636
    %v1639 = vrot.slane %v1637, 2
    %v1641 = vsub.f32 %v1541, %v1639
    %v1643 = vrot.slane %v1641, 6
    %1644 = vrot.lane.b32.xlu0 %v1643, 64
    %v1645 = vpop.permute.xlu0 %1644
    %v1647 = vmul.f32 %v1634, %v1645
    %1649 = vrot.lane.b32.xlu0 %v1647, 64
    %v1650 = vpop.permute.xlu0 %1649
    %v1652 = vadd.f32 %v1637, %v1650
    %v1653 = vmul.f32 %v1652, %v66
    %v1654 = vsel %vm1196, %v1653, 0.0
    %1655 = vadd.xlane.f32.xlu0 %v1654
    %v1656 = vpop.xlane.xlu0 %1655
    %v1657 = vmul.f32 %v1652, %v1201
    %1659 = vrot.lane.b32.xlu0 %v1657, 96
    %v1660 = vpop.permute.xlu0 %1659
    %v1662 = vsel %vm1196, %v1660, 0.0
    %1663 = vadd.xlane.f32.xlu0 %v1662
    %v1664 = vpop.xlane.xlu0 %1663
    %v1665 = vmul.f32 %v1563, %v1656
    %v1666 = vadd.f32 %v1568, %v1665
    %v1667 = vmul.f32 %v1556, %v1664
    %v1668 = vadd.f32 %v1666, %v1667
    %v1669 = vld [vmem:[#allocation2 + $0x10] sm:$0xc]
    %v1670 = vld [vmem:[#allocation2 + $0x18] sm:$0xc]
    %v1672 = vsel %vm196, %v1652, 0
    %1674 = vmatpush.msra.mxu0 0.0
    %1675 = vmatpush.msra.mxu0 0.0
    %1676 = vmatpush.msra.mxu0 0.0
    %1677 = vmatpush.msra.mxu0 0.0
    %1678 = vmatpush.msra.mxu0 0.0
    %1679 = vmatpush.msra.mxu0 0.0
    %1680 = vmatpush.msra.mxu0 0.0
    %1681 = vmatpush.msra.mxu0 0.0
    %1682 = vmatpush.msra.mxu0 %v1117
    %1683 = vmatpush.msra.mxu0 %v1115
    %1684 = vmatpush.msra.mxu0 %v1113
    %1685 = vmatpush.msra.mxu0 %v1111
    %1686 = vmatpush.msra.mxu0 %v1109
    %1687 = vmatpush.msra.mxu0 %v1107
    %1688 = vmatpush.msra.mxu0 %v1105
    %1689 = vmatpush.msra.mxu0 %v1103
    %1690 = vmatmul.f32.gmra.mxu0 %v1672
    %v1691 = vpop.f32.mrf.mxu0
    %v1692 = vadd.f32 %v1099, %v1691
    %1693 = vdwg.mxu0
    %1694 = vmatpush.msra.mxu0 0.0
    %1695 = vmatpush.msra.mxu0 0.0
    %1696 = vmatpush.msra.mxu0 0.0
    %1697 = vmatpush.msra.mxu0 0.0
    %1698 = vmatpush.msra.mxu0 0.0
    %1699 = vmatpush.msra.mxu0 0.0
    %1700 = vmatpush.msra.mxu0 0.0
    %1701 = vmatpush.msra.mxu0 0.0
    %1702 = vmatpush.msra.mxu0 %v1118
    %1703 = vmatpush.msra.mxu0 %v1116
    %1704 = vmatpush.msra.mxu0 %v1114
    %1705 = vmatpush.msra.mxu0 %v1112
    %1706 = vmatpush.msra.mxu0 %v1110
    %1707 = vmatpush.msra.mxu0 %v1108
    %1708 = vmatpush.msra.mxu0 %v1106
    %1709 = vmatpush.msra.mxu0 %v1104
    %1710 = vmatmul.f32.gmra.mxu0 %v1672
    %v1711 = vpop.f32.mrf.mxu0
    %v1712 = vadd.f32 %v1100, %v1711
    %1713 = vdwg.mxu0
    %v1715 = vrot.slane %v1692, 6
    %v1717 = vadd.f32 %v1669, %v1715
    %v1718 = vxor.u32 %v1717, 2147483648
    %v1719 = vmul.f32 %v1718, 1.442695
    %v1720 = vpow.pop %v1719
    %v1721 = vadd.f32 %v1720, 1.0
    %v1722 = vrcp.pop %v1721
    %v1723 = vmul.f32 %v1721, %v1722
    %v1724 = vsub.f32 1.0, %v1723
    %v1725 = vmul.f32 %v1722, %v1724
    %v1726 = vadd.f32 %v1722, %v1725
    %vm1727 = vweird.f32 %v1721
    %vm1728 = vweird.f32 %v1722
    %vm1729 = vmor %vm1727, %vm1728
    %v1730 = vsel %vm1729, %v1722, %v1726
    %v1731 = vand.u32 2147483647, %v1721
    %vm1732 = vcmp.eq.f32.partialorder %v1731, 8.507059e+37
    %v1733 = vand.u32 %v1721, 2147483648
    %v1734 = vor.u32 1.1754944e-38, %v1733
    %v1735 = vsel %vm1732, %v1734, %v1730
    %v1736 = vmul.f32 1.0, %v1735
    %v1738 = vrot.slane %v1712, 6
    %v1740 = vmul.f32 %v1736, %v1738
    %v1741 = vadd.f32 %v1670, %v1740
    %v1742 = vtanh.pop %v1741
    %v1744 = vrot.slane %v1742, 2
    %v1746 = vsub.f32 %v1652, %v1744
    %v1748 = vrot.slane %v1746, 6
    %1749 = vrot.lane.b32.xlu0 %v1748, 64
    %v1750 = vpop.permute.xlu0 %1749
    %v1752 = vmul.f32 %v1736, %v1750
    %1754 = vrot.lane.b32.xlu0 %v1752, 64
    %v1755 = vpop.permute.xlu0 %1754
    %v1757 = vadd.f32 %v1742, %v1755
    %v1758 = vmul.f32 %v1757, %v66
    %v1759 = vsel %vm1309, %v1758, 0.0
    %1760 = vadd.xlane.f32.xlu0 %v1759
    %v1761 = vpop.xlane.xlu0 %1760
    %v1762 = vmul.f32 %v1757, %v1201
    %1764 = vrot.lane.b32.xlu0 %v1762, 96
    %v1765 = vpop.permute.xlu0 %1764
    %v1767 = vsel %vm1309, %v1765, 0.0
    %1768 = vadd.xlane.f32.xlu0 %v1767
    %v1769 = vpop.xlane.xlu0 %1768
    %v1770 = vmul.f32 %v1446, %v1761
    %v1772 = vrot.slane %v1770, 2
    %v1774 = vadd.f32 %v1668, %v1772
    %v1775 = vmul.f32 %v1439, %v1769
    %v1777 = vrot.slane %v1775, 2
    %v1779 = vadd.f32 %v1774, %v1777
    %v1780 = vld [vmem:[#allocation2 + $0x10] sm:$0x30]
    %v1781 = vld [vmem:[#allocation2 + $0x18] sm:$0x30]
    %v1783 = vrot.slane %v1757, 2
    %v1784 = vsel %vm196, %v1783, 0
    %1786 = vmatpush.msra.mxu0 0.0
    %1787 = vmatpush.msra.mxu0 0.0
    %1788 = vmatpush.msra.mxu0 0.0
    %1789 = vmatpush.msra.mxu0 0.0
    %1790 = vmatpush.msra.mxu0 0.0
    %1791 = vmatpush.msra.mxu0 0.0
    %1792 = vmatpush.msra.mxu0 0.0
    %1793 = vmatpush.msra.mxu0 0.0
    %1794 = vmatpush.msra.mxu0 %v1117
    %1795 = vmatpush.msra.mxu0 %v1115
    %1796 = vmatpush.msra.mxu0 %v1113
    %1797 = vmatpush.msra.mxu0 %v1111
    %1798 = vmatpush.msra.mxu0 %v1109
    %1799 = vmatpush.msra.mxu0 %v1107
    %1800 = vmatpush.msra.mxu0 %v1105
    %1801 = vmatpush.msra.mxu0 %v1103
    %1802 = vmatmul.f32.gmra.mxu0 %v1784
    %v1803 = vpop.f32.mrf.mxu0
    %v1804 = vadd.f32 %v1099, %v1803
    %1805 = vdwg.mxu0
    %1806 = vmatpush.msra.mxu0 0.0
    %1807 = vmatpush.msra.mxu0 0.0
    %1808 = vmatpush.msra.mxu0 0.0
    %1809 = vmatpush.msra.mxu0 0.0
    %1810 = vmatpush.msra.mxu0 0.0
    %1811 = vmatpush.msra.mxu0 0.0
    %1812 = vmatpush.msra.mxu0 0.0
    %1813 = vmatpush.msra.mxu0 0.0
    %1814 = vmatpush.msra.mxu0 %v1118
    %1815 = vmatpush.msra.mxu0 %v1116
    %1816 = vmatpush.msra.mxu0 %v1114
    %1817 = vmatpush.msra.mxu0 %v1112
    %1818 = vmatpush.msra.mxu0 %v1110
    %1819 = vmatpush.msra.mxu0 %v1108
    %1820 = vmatpush.msra.mxu0 %v1106
    %1821 = vmatpush.msra.mxu0 %v1104
    %1822 = vmatmul.f32.gmra.mxu0 %v1784
    %v1823 = vpop.f32.mrf.mxu0
    %v1824 = vadd.f32 %v1100, %v1823
    %1825 = vdwg.mxu0
    %v1827 = vrot.slane %v1804, 4
    %v1829 = vadd.f32 %v1780, %v1827
    %v1830 = vxor.u32 %v1829, 2147483648
    %v1831 = vmul.f32 %v1830, 1.442695
    %v1832 = vpow.pop %v1831
    %v1833 = vadd.f32 %v1832, 1.0
    %v1834 = vrcp.pop %v1833
    %v1835 = vmul.f32 %v1833, %v1834
    %v1836 = vsub.f32 1.0, %v1835
    %v1837 = vmul.f32 %v1834, %v1836
    %v1838 = vadd.f32 %v1834, %v1837
    %vm1839 = vweird.f32 %v1833
    %vm1840 = vweird.f32 %v1834
    %vm1841 = vmor %vm1839, %vm1840
    %v1842 = vsel %vm1841, %v1834, %v1838
    %v1843 = vand.u32 2147483647, %v1833
    %vm1844 = vcmp.eq.f32.partialorder %v1843, 8.507059e+37
    %v1845 = vand.u32 %v1833, 2147483648
    %v1846 = vor.u32 1.1754944e-38, %v1845
    %v1847 = vsel %vm1844, %v1846, %v1842
    %v1848 = vmul.f32 1.0, %v1847
    %v1850 = vrot.slane %v1824, 4
    %v1852 = vmul.f32 %v1848, %v1850
    %v1853 = vadd.f32 %v1781, %v1852
    %v1854 = vtanh.pop %v1853
    %v1856 = vrot.slane %v1854, 2
    %v1858 = vsub.f32 %v1757, %v1856
    %v1860 = vrot.slane %v1858, 6
    %1861 = vrot.lane.b32.xlu0 %v1860, 64
    %v1862 = vpop.permute.xlu0 %1861
    %v1864 = vmul.f32 %v1848, %v1862
    %1866 = vrot.lane.b32.xlu0 %v1864, 64
    %v1867 = vpop.permute.xlu0 %1866
    %v1869 = vadd.f32 %v1854, %v1867
    %v1870 = vmul.f32 %v1869, %v66
    %v1871 = vsel %vm1426, %v1870, 0.0
    %1872 = vadd.xlane.f32.xlu0 %v1871
    %v1873 = vpop.xlane.xlu0 %1872
    %v1874 = vmul.f32 %v1869, %v1201
    %1876 = vrot.lane.b32.xlu0 %v1874, 96
    %v1877 = vpop.permute.xlu0 %1876
    %v1879 = vsel %vm1426, %v1877, 0.0
    %1880 = vadd.xlane.f32.xlu0 %v1879
    %v1881 = vpop.xlane.xlu0 %1880
    %v1882 = vmul.f32 %v1329, %v1873
    %v1884 = vrot.slane %v1882, 4
    %v1886 = vadd.f32 %v1779, %v1884
    %v1887 = vmul.f32 %v1322, %v1881
    %v1889 = vrot.slane %v1887, 4
    %v1891 = vadd.f32 %v1886, %v1889
    %v1892 = vld [vmem:[#allocation2 + $0x10] sm:$0xc0]
    %v1893 = vld [vmem:[#allocation2 + $0x18] sm:$0xc0]
    %v1895 = vrot.slane %v1869, 4
    %v1896 = vsel %vm196, %v1895, 0
    %1898 = vmatpush.msra.mxu0 0.0
    %1899 = vmatpush.msra.mxu0 0.0
    %1900 = vmatpush.msra.mxu0 0.0
    %1901 = vmatpush.msra.mxu0 0.0
    %1902 = vmatpush.msra.mxu0 0.0
    %1903 = vmatpush.msra.mxu0 0.0
    %1904 = vmatpush.msra.mxu0 0.0
    %1905 = vmatpush.msra.mxu0 0.0
    %1906 = vmatpush.msra.mxu0 %v1117
    %1907 = vmatpush.msra.mxu0 %v1115
    %1908 = vmatpush.msra.mxu0 %v1113
    %1909 = vmatpush.msra.mxu0 %v1111
    %1910 = vmatpush.msra.mxu0 %v1109
    %1911 = vmatpush.msra.mxu0 %v1107
    %1912 = vmatpush.msra.mxu0 %v1105
    %1913 = vmatpush.msra.mxu0 %v1103
    %1914 = vmatmul.f32.gmra.mxu0 %v1896
    %v1915 = vpop.f32.mrf.mxu0
    %v1916 = vadd.f32 %v1099, %v1915
    %1917 = vdwg.mxu0
    %1918 = vmatpush.msra.mxu0 0.0
    %1919 = vmatpush.msra.mxu0 0.0
    %1920 = vmatpush.msra.mxu0 0.0
    %1921 = vmatpush.msra.mxu0 0.0
    %1922 = vmatpush.msra.mxu0 0.0
    %1923 = vmatpush.msra.mxu0 0.0
    %1924 = vmatpush.msra.mxu0 0.0
    %1925 = vmatpush.msra.mxu0 0.0
    %1926 = vmatpush.msra.mxu0 %v1118
    %1927 = vmatpush.msra.mxu0 %v1116
    %1928 = vmatpush.msra.mxu0 %v1114
    %1929 = vmatpush.msra.mxu0 %v1112
    %1930 = vmatpush.msra.mxu0 %v1110
    %1931 = vmatpush.msra.mxu0 %v1108
    %1932 = vmatpush.msra.mxu0 %v1106
    %1933 = vmatpush.msra.mxu0 %v1104
    %1934 = vmatmul.f32.gmra.mxu0 %v1896
    %v1935 = vpop.f32.mrf.mxu0
    %v1936 = vadd.f32 %v1100, %v1935
    %1937 = vdwg.mxu0
    %v1939 = vrot.slane %v1916, 2
    %v1941 = vadd.f32 %v1892, %v1939
    %v1942 = vxor.u32 %v1941, 2147483648
    %v1943 = vmul.f32 %v1942, 1.442695
    %v1944 = vpow.pop %v1943
    %v1945 = vadd.f32 %v1944, 1.0
    %v1946 = vrcp.pop %v1945
    %v1947 = vmul.f32 %v1945, %v1946
    %v1948 = vsub.f32 1.0, %v1947
    %v1949 = vmul.f32 %v1946, %v1948
    %v1950 = vadd.f32 %v1946, %v1949
    %vm1951 = vweird.f32 %v1945
    %vm1952 = vweird.f32 %v1946
    %vm1953 = vmor %vm1951, %vm1952
    %v1954 = vsel %vm1953, %v1946, %v1950
    %v1955 = vand.u32 2147483647, %v1945
    %vm1956 = vcmp.eq.f32.partialorder %v1955, 8.507059e+37
    %v1957 = vand.u32 %v1945, 2147483648
    %v1958 = vor.u32 1.1754944e-38, %v1957
    %v1959 = vsel %vm1956, %v1958, %v1954
    %v1960 = vmul.f32 1.0, %v1959
    %v1962 = vrot.slane %v1936, 2
    %v1964 = vmul.f32 %v1960, %v1962
    %v1965 = vadd.f32 %v1893, %v1964
    %v1966 = vtanh.pop %v1965
    %v1968 = vrot.slane %v1966, 2
    %v1970 = vsub.f32 %v1869, %v1968
    %v1972 = vrot.slane %v1970, 6
    %1973 = vrot.lane.b32.xlu0 %v1972, 64
    %v1974 = vpop.permute.xlu0 %1973
    %v1976 = vmul.f32 %v1960, %v1974
    %1978 = vrot.lane.b32.xlu0 %v1976, 64
    %v1979 = vpop.permute.xlu0 %1978
    %v1981 = vadd.f32 %v1966, %v1979
    %v1982 = vmul.f32 %v1981, %v66
    %v1983 = vsel %vm1543, %v1982, 0.0
    %1984 = vadd.xlane.f32.xlu0 %v1983
    %v1985 = vpop.xlane.xlu0 %1984
    %v1986 = vmul.f32 %v1981, %v1201
    %1988 = vrot.lane.b32.xlu0 %v1986, 96
    %v1989 = vpop.permute.xlu0 %1988
    %v1991 = vsel %vm1543, %v1989, 0.0
    %1992 = vadd.xlane.f32.xlu0 %v1991
    %v1993 = vpop.xlane.xlu0 %1992
    %v1994 = vmul.f32 %v1216, %v1985
    %v1996 = vrot.slane %v1994, 6
    %v1998 = vadd.f32 %v1891, %v1996
    %v1999 = vmul.f32 %v1212, %v1993
    %v2001 = vrot.slane %v1999, 6
    %v2003 = vadd.f32 %v1998, %v2001
    %s2004 = sld [smem:[#allocation5]]
    %v2005 = vstv %s2004
    %v2006 = vadd.f32 %v2003, %v2005
    %v2007 = vxor.u32 %v2006, 2147483648
    %v2008 = vmul.f32 %v2007, 1.442695
    %v2009 = vpow.pop %v2008
    %v2010 = vadd.f32 %v2009, 1.0
    %v2011 = vrcp.pop %v2010
    %v2012 = vmul.f32 %v2010, %v2011
    %v2013 = vsub.f32 1.0, %v2012
    %v2014 = vmul.f32 %v2011, %v2013
    %v2015 = vadd.f32 %v2011, %v2014
    %vm2016 = vweird.f32 %v2010
    %vm2017 = vweird.f32 %v2011
    %vm2018 = vmor %vm2016, %vm2017
    %v2019 = vsel %vm2018, %v2011, %v2015
    %v2020 = vand.u32 2147483647, %v2010
    %vm2021 = vcmp.eq.f32.partialorder %v2020, 8.507059e+37
    %v2022 = vand.u32 %v2010, 2147483648
    %v2023 = vor.u32 1.1754944e-38, %v2022
    %v2024 = vsel %vm2021, %v2023, %v2019
    %v2025 = vmul.f32 1.0, %v2024
    %vm2026 = vcmask 1024
    %2027 = vst.msk [vmem:[%s15] sm:$0x3] %vm2026, %v2025
    // Predicated region
    $region66: #{discriminator_forward.1} parent=1 // pred_check
      _
    $region67: #{discriminator_forward.1} parent=1 // pred_check_branch
      %2029 = sbr.rel (0) target = $region69
    $region68: #{discriminator_forward.1} parent=1 // pred_region
      _
    $region69: #{discriminator_forward.1} parent=1 // pred_fallthru
      _
    // Predicated region
    $region70: #{discriminator_forward.1} parent=1 // pred_check
      _
    $region71: #{discriminator_forward.1} parent=1 // pred_check_branch
      %2031 = sbr.rel (0) target = $region73
    $region72: #{discriminator_forward.1} parent=1 // pred_region
      _
    $region73: #{discriminator_forward.1} parent=1 // pred_fallthru
      _
    %2032 = vsyncpa [#allocation7], 1

</llo_original>
